<compile_context>
chip_gen: v7x
topology: tpu7x:2x2x1
jax: 0.10.0
libtpu: 0.0.40
codegen_flags: <defaults>
</compile_context>

<pallas_src>
import functools
import math

import jax
import jax.numpy as jnp
from jax import lax
from jax.experimental import pallas as pl
from jax.experimental.pallas import tpu as pltpu

BN_EPS = 1e-5


# ----------------------------- in-kernel helpers ----------------------------

def _bn_elu(y, gamma, beta):
    """BatchNorm (training-mode batch stats, biased var, two-pass) + ELU, f32."""
    rows = y.shape[0]
    mean = jnp.sum(y, axis=0, keepdims=True) * (1.0 / rows)
    d = y - mean
    var = jnp.sum(d * d, axis=0, keepdims=True) * (1.0 / rows)
    yn = d * lax.rsqrt(var + BN_EPS) * gamma + beta
    # ELU(alpha=1); exp only ever sees non-positive arguments.
    return jnp.where(yn > 0.0, yn, jnp.exp(jnp.minimum(yn, 0.0)) - 1.0)


def _stage_even_odd(s_ref, act, n, h, w, c):
    """Write act (n*h*w, c) into s_ref as row-parity-grouped, column-padded copy.

    s_ref layout (n, h+1, w+2, c):
      rows [0, h/2)      : even input rows 0,2,...,h-2
      row  [h/2]         : zeros (input row -1)
      rows (h/2, h]      : odd  input rows 1,3,...,h-1
      cols [0, w+2)      : input cols -1..w (zero padded ends)
    so every conv tap becomes a contiguous row window + a stride-2 column read.
    """
    f32 = jnp.float32
    a4 = act.reshape(n, h // 2, 2, w, c)            # [b, y_half, y_par, x, ch]
    ev, od = a4[:, :, 0], a4[:, :, 1]
    zc = jnp.zeros((n, h // 2, 1, c), f32)
    zr = jnp.zeros((n, 1, w + 2, c), f32)
    s_ref[...] = jnp.concatenate(
        [jnp.concatenate([zc, ev, zc], axis=2),     # even rows, cols padded
         zr,                                        # the "row -1" zero row
         jnp.concatenate([zc, od, zc], axis=2)],    # odd rows, cols padded
        axis=1)


def _taps_stride2(s_ref, n, oh, ow, c):
    """Read the 9 taps of a 3x3 / stride-2 / pad-1 conv from a staged ref.

    Returns (n, oh, ow, 9*c): taps concatenated along the lane dim in
    (di, dj, channel) order, matching the fused (9*c, oc) weight layout.
    """
    # Row-slot starts for di = 0, 1, 2 given the even/odd grouping above.
    row_starts = (oh, 0, oh + 1)
    taps = []
    for rs in row_starts:                            # di = 0, 1, 2
        for dj in range(3):
            taps.append(s_ref[:, rs:rs + oh, pl.ds(dj, ow, stride=2), :])
    return jnp.concatenate(taps, axis=-1)            # (n, oh, ow, 9*c) f32


# --------------------------------- kernel -----------------------------------

def _lapgan_d2_kernel(n,
                      p1_ref,
                      w1_ref, b1_ref, g1_ref, t1_ref,
                      w2_ref, b2_ref, g2_ref, t2_ref,
                      w3_ref, b3_ref, g3_ref, t3_ref,
                      w4_ref, b4_ref,
                      out_ref,
                      s1_ref, s2_ref):
    f32, bf16 = jnp.float32, jnp.bfloat16
    H = W = 16                           # module is specialised for 16x16 input
    C1, C2, C3 = 32, 64, 128
    h2, h3 = H // 2, H // 4

    # ---- conv1: 5x5 / s1 / p2 -> one K-fat matmul on wrapper im2col patches --
    y1 = jnp.dot(p1_ref[...], w1_ref[...],
                 preferred_element_type=f32) + b1_ref[...]          # (n*256, 32)
    a1 = _bn_elu(y1, g1_ref[...], t1_ref[...])

    # ---- conv2: 3x3 / s2 / p1 + BN + ELU ------------------------------------
    _stage_even_odd(s1_ref, a1, n, H, W, C1)                         # (n,17,18,32)
    pat2 = _taps_stride2(s1_ref, n, h2, h2, C1)                      # (n,8,8,288)
    pat2 = pat2.reshape(n * h2 * h2, 9 * C1).astype(bf16)
    y2 = jnp.dot(pat2, w2_ref[...],
                 preferred_element_type=f32) + b2_ref[...]           # (n*64, 64)
    a2 = _bn_elu(y2, g2_ref[...], t2_ref[...])

    # ---- conv3: 3x3 / s2 / p1 + BN + ELU ------------------------------------
    _stage_even_odd(s2_ref, a2, n, h2, h2, C2)                       # (n,9,10,64)
    pat3 = _taps_stride2(s2_ref, n, h3, h3, C2)                      # (n,4,4,576)
    # 4-row chunks are below the f32 sublane tile, so assemble the 2-D matmul
    # operand with explicit slices + sublane concat instead of a reshape.
    rows = [pat3[b, y] for b in range(n) for y in range(h3)]         # (4, 576) each
    p3 = jnp.concatenate(rows, axis=0).astype(bf16)                  # (n*16, 576)
    y3 = jnp.dot(p3, w3_ref[...],
                 preferred_element_type=f32) + b3_ref[...]           # (n*16, 128)
    a3 = _bn_elu(y3, g3_ref[...], t3_ref[...])

    # ---- conv4: 4x4 valid conv on a 4x4 map == full reduction, + sigmoid ----
    a3r = a3.reshape(n, h3 * h3, C3)                                 # (n, 16, 128)
    red = jnp.sum(a3r * w4_ref[...][None, :, :], axis=2, keepdims=True)
    red = jnp.sum(red, axis=1, keepdims=True)                        # (n, 1, 1)
    prob = jax.nn.sigmoid(red + b4_ref[...])
    out_ref[...] = jnp.broadcast_to(prob, out_ref.shape)             # lane-dense write


# ------------------------------- JAX wrapper ---------------------------------

def _vmem():
    return pl.BlockSpec(memory_space=pltpu.MemorySpace.VMEM)


@jax.jit
def lapgan_discriminator_level2(x_nchw, params):
    n, c_in, h, w = x_nchw.shape
    assert h == 16 and w == 16, "kernel is specialised for 16x16 inputs"

    # Wrapper-side layout plumbing (effectively free vs the kernel):
    # NHWC + pad, conv1 im2col patches (K = 25*c_in, zero-padded to 128), bf16.
    x = jnp.transpose(x_nchw, (0, 2, 3, 1)).astype(jnp.float32)
    xp = jnp.pad(x, ((0, 0), (2, 2), (2, 2), (0, 0)))
    cols = [xp[:, di:di + 16, dj:dj + 16, :] for di in range(5) for dj in range(5)]
    k1 = 25 * c_in
    k1p = ((k1 + 127) // 128) * 128
    p1 = jnp.concatenate(cols, axis=-1).reshape(n * 256, k1)
    p1 = jnp.pad(p1, ((0, 0), (0, k1p - k1))).astype(jnp.bfloat16)

    def fuse_w(wt):        # (OC, IC, KH, KW) -> (KH*KW*IC, OC), tap-major
        oc, ic, kh, kw = wt.shape
        return jnp.transpose(wt, (2, 3, 1, 0)).reshape(kh * kw * ic, oc)

    w1 = jnp.pad(fuse_w(params["w1"]), ((0, k1p - k1), (0, 0))).astype(jnp.bfloat16)
    w2 = fuse_w(params["w2"]).astype(jnp.bfloat16)                   # (288, 64)
    w3 = fuse_w(params["w3"]).astype(jnp.bfloat16)                   # (576, 128)
    w4 = jnp.transpose(params["w4"], (2, 3, 1, 0)).reshape(16, 128).astype(jnp.float32)

    def row(v):
        return v.reshape(1, -1).astype(jnp.float32)

    args = (
        p1,
        w1, row(params["b1"]), row(params["g1"]), row(params["beta1"]),
        w2, row(params["b2"]), row(params["g2"]), row(params["beta2"]),
        w3, row(params["b3"]), row(params["g3"]), row(params["beta3"]),
        w4, params["b4"].reshape(1, 1, 1).astype(jnp.float32),
    )

    out = pl.pallas_call(
        functools.partial(_lapgan_d2_kernel, n),
        out_shape=jax.ShapeDtypeStruct((n, 1, 128), jnp.float32),
        in_specs=[_vmem() for _ in args],
        out_specs=_vmem(),
        scratch_shapes=[
            pltpu.VMEM((n, 17, 18, 32), jnp.float32),   # staged padded act1
            pltpu.VMEM((n, 9, 10, 64), jnp.float32),    # staged padded act2
        ],
        compiler_params=pltpu.CompilerParams(vmem_limit_bytes=32 * 1024 * 1024),
    )(*args)

    return out[:, 0, :1]                                             # == .view(-1, 1)


# ------------------------- params & pure-JAX reference -----------------------

def init_params(channels, key):
    base = 32
    layer_defs = [
        (channels, base, 5),        # conv1
        (base, 2 * base, 3),        # conv2
        (2 * base, 4 * base, 3),    # conv3
        (4 * base, 1, 4),           # conv4
    ]
    params = {}
    keys = jax.random.split(key, 2 * len(layer_defs))
    for idx, (ic, oc, k) in enumerate(layer_defs):
        bound = 1.0 / math.sqrt(ic * k * k)
        params[f"w{idx + 1}"] = jax.random.uniform(
            keys[2 * idx], (oc, ic, k, k), jnp.float32, -bound, bound)
        params[f"b{idx + 1}"] = jax.random.uniform(
            keys[2 * idx + 1], (oc,), jnp.float32, -bound, bound)
        if idx < 3:  # BatchNorm after the first three convs
            params[f"g{idx + 1}"] = jnp.ones((oc,), jnp.float32)
            params[f"beta{idx + 1}"] = jnp.zeros((oc,), jnp.float32)
    return params


def _reference_forward(x_nchw, params):
    x = x_nchw.astype(jnp.float32)

    def conv(v, wt, b, stride, pad):
        y = lax.conv_general_dilated(
            v, wt, window_strides=(stride, stride),
            padding=((pad, pad), (pad, pad)),
            dimension_numbers=("NCHW", "OIHW", "NCHW"))
        return y + b.reshape(1, -1, 1, 1)

    def bn(y, g, b):
        mean = jnp.mean(y, axis=(0, 2, 3), keepdims=True)
        var = jnp.mean((y - mean) ** 2, axis=(0, 2, 3), keepdims=True)
        return (y - mean) / jnp.sqrt(var + BN_EPS) * g.reshape(1, -1, 1, 1) \
            + b.reshape(1, -1, 1, 1)

    def elu(y):
        return jnp.where(y > 0, y, jnp.exp(jnp.minimum(y, 0.0)) - 1.0)

    y = elu(bn(conv(x, params["w1"], params["b1"], 1, 2), params["g1"], params["beta1"]))
    y = elu(bn(conv(y, params["w2"], params["b2"], 2, 1), params["g2"], params["beta2"]))
    y = elu(bn(conv(y, params["w3"], params["b3"], 2, 1), params["g3"], params["beta3"]))
    y = conv(y, params["w4"], params["b4"], 1, 0)
    return jax.nn.sigmoid(y).reshape(-1, 1)


# ----------------------------------- main ------------------------------------

if __name__ == "__main__":
    key = jax.random.PRNGKey(0)
    k_in, k_par = jax.random.split(key)

    N, C, H, W = 2, 4, 16, 16      # 16x16 input -> 1x1 after the conv stack
    x = jax.random.normal(k_in, (N, C, H, W), jnp.float32)
    params = init_params(C, k_par)

    out = jax.block_until_ready(lapgan_discriminator_level2(x, params))
    ref = jax.block_until_ready(jax.jit(_reference_forward)(x, params))

    assert out.shape == (N, 1), out.shape
    assert bool(jnp.all(jnp.isfinite(out)))
    assert bool(jnp.all((out >= 0.0) & (out <= 1.0)))          # sigmoid range
    max_err = float(jnp.max(jnp.abs(out - ref)))
    assert max_err < 5e-2, f"mismatch vs reference: {max_err}"
    print("KERNEL_OK")
</pallas_src>

<mosaic_0001>
module attributes {stable_mosaic.version = 11 : i64} {
  func.func @_lapgan_d2_kernel(%arg0: memref<512x128xbf16, #tpu.memory_space<vmem>>, %arg1: memref<128x32xbf16, #tpu.memory_space<vmem>>, %arg2: memref<1x32xf32, #tpu.memory_space<vmem>>, %arg3: memref<1x32xf32, #tpu.memory_space<vmem>>, %arg4: memref<1x32xf32, #tpu.memory_space<vmem>>, %arg5: memref<288x64xbf16, #tpu.memory_space<vmem>>, %arg6: memref<1x64xf32, #tpu.memory_space<vmem>>, %arg7: memref<1x64xf32, #tpu.memory_space<vmem>>, %arg8: memref<1x64xf32, #tpu.memory_space<vmem>>, %arg9: memref<576x128xbf16, #tpu.memory_space<vmem>>, %arg10: memref<1x128xf32, #tpu.memory_space<vmem>>, %arg11: memref<1x128xf32, #tpu.memory_space<vmem>>, %arg12: memref<1x128xf32, #tpu.memory_space<vmem>>, %arg13: memref<16x128xf32, #tpu.memory_space<vmem>>, %arg14: memref<1x1x1xf32, #tpu.memory_space<vmem>>, %arg15: memref<2x1x128xf32, #tpu.memory_space<vmem>>, %arg16: memref<2x17x18x32xf32, #tpu.memory_space<vmem>>, %arg17: memref<2x9x10x64xf32, #tpu.memory_space<vmem>>) attributes {dimension_semantics = [], scalar_prefetch = 0 : i64, scratch_operands = 2 : i64, tpu.core_type = #tpu.core_type<tc>} {
    %c0 = arith.constant 0 : index
    %c0_0 = arith.constant 0 : index
    %0 = vector.load %arg0[%c0, %c0_0] : memref<512x128xbf16, #tpu.memory_space<vmem>>, vector<512x128xbf16>
    %c0_1 = arith.constant 0 : index
    %c0_2 = arith.constant 0 : index
    %1 = vector.load %arg1[%c0_1, %c0_2] : memref<128x32xbf16, #tpu.memory_space<vmem>>, vector<128x32xbf16>
    %cst = arith.constant dense<0.000000e+00> : vector<512x32xf32>
    %2 = tpu.matmul %0, %1, %cst {dimension_numbers = #tpu.dot_dimension_numbers<[1], [0], [0], [1], [0, 0, 1, 1], [], []>} : vector<512x128xbf16>, vector<128x32xbf16>, vector<512x32xf32> -> vector<512x32xf32>
    %c0_3 = arith.constant 0 : index
    %c0_4 = arith.constant 0 : index
    %3 = vector.load %arg2[%c0_3, %c0_4] : memref<1x32xf32, #tpu.memory_space<vmem>>, vector<1x32xf32>
    %4 = vector.broadcast %3 : vector<1x32xf32> to vector<512x32xf32>
    %5 = arith.addf %2, %4 : vector<512x32xf32>
    %c0_5 = arith.constant 0 : index
    %c0_6 = arith.constant 0 : index
    %6 = vector.load %arg3[%c0_5, %c0_6] : memref<1x32xf32, #tpu.memory_space<vmem>>, vector<1x32xf32>
    %c0_7 = arith.constant 0 : index
    %c0_8 = arith.constant 0 : index
    %7 = vector.load %arg4[%c0_7, %c0_8] : memref<1x32xf32, #tpu.memory_space<vmem>>, vector<1x32xf32>
    %cst_9 = arith.constant dense<0.000000e+00> : vector<32xf32>
    %8 = vector.multi_reduction <add>, %5, %cst_9 [0] : vector<512x32xf32> to vector<32xf32>
    %9 = vector.shape_cast %8 : vector<32xf32> to vector<1x32xf32>
    %cst_10 = arith.constant 0.001953125 : f32
    %10 = vector.broadcast %cst_10 : f32 to vector<1x32xf32>
    %11 = arith.mulf %9, %10 : vector<1x32xf32>
    %12 = vector.broadcast %11 : vector<1x32xf32> to vector<512x32xf32>
    %13 = arith.subf %5, %12 : vector<512x32xf32>
    %14 = arith.mulf %13, %13 : vector<512x32xf32>
    %cst_11 = arith.constant dense<0.000000e+00> : vector<32xf32>
    %15 = vector.multi_reduction <add>, %14, %cst_11 [0] : vector<512x32xf32> to vector<32xf32>
    %16 = vector.shape_cast %15 : vector<32xf32> to vector<1x32xf32>
    %cst_12 = arith.constant 0.001953125 : f32
    %17 = vector.broadcast %cst_12 : f32 to vector<1x32xf32>
    %18 = arith.mulf %16, %17 : vector<1x32xf32>
    %cst_13 = arith.constant 9.99999974E-6 : f32
    %19 = vector.broadcast %cst_13 : f32 to vector<1x32xf32>
    %20 = arith.addf %18, %19 : vector<1x32xf32>
    %21 = math.rsqrt %20 : vector<1x32xf32>
    %22 = vector.broadcast %21 : vector<1x32xf32> to vector<512x32xf32>
    %23 = arith.mulf %13, %22 : vector<512x32xf32>
    %24 = vector.broadcast %6 : vector<1x32xf32> to vector<512x32xf32>
    %25 = arith.mulf %23, %24 : vector<512x32xf32>
    %26 = vector.broadcast %7 : vector<1x32xf32> to vector<512x32xf32>
    %27 = arith.addf %25, %26 : vector<512x32xf32>
    %cst_14 = arith.constant 0.000000e+00 : f32
    %28 = vector.broadcast %cst_14 : f32 to vector<512x32xf32>
    %29 = arith.cmpf ogt, %27, %28 : vector<512x32xf32>
    %cst_15 = arith.constant 0.000000e+00 : f32
    %30 = vector.broadcast %cst_15 : f32 to vector<512x32xf32>
    %31 = arith.minimumf %27, %30 : vector<512x32xf32>
    %32 = math.exp %31 : vector<512x32xf32>
    %cst_16 = arith.constant 1.000000e+00 : f32
    %33 = vector.broadcast %cst_16 : f32 to vector<512x32xf32>
    %34 = arith.subf %32, %33 : vector<512x32xf32>
    %35 = arith.select %29, %27, %34 : vector<512x32xi1>, vector<512x32xf32>
    %36 = vector.shape_cast %35 : vector<512x32xf32> to vector<2x8x2x16x32xf32>
    %37 = vector.extract_strided_slice %36 {offsets = [0, 0, 0, 0, 0], sizes = [2, 8, 1, 16, 32], strides = [1, 1, 1, 1, 1]} : vector<2x8x2x16x32xf32> to vector<2x8x1x16x32xf32>
    %38 = vector.shape_cast %37 : vector<2x8x1x16x32xf32> to vector<2x8x16x32xf32>
    %39 = vector.extract_strided_slice %36 {offsets = [0, 0, 1, 0, 0], sizes = [2, 8, 1, 16, 32], strides = [1, 1, 1, 1, 1]} : vector<2x8x2x16x32xf32> to vector<2x8x1x16x32xf32>
    %40 = vector.shape_cast %39 : vector<2x8x1x16x32xf32> to vector<2x8x16x32xf32>
    %cst_17 = arith.constant 0.000000e+00 : f32
    %41 = vector.broadcast %cst_17 : f32 to vector<2x8x1x32xf32>
    %cst_18 = arith.constant 0.000000e+00 : f32
    %42 = vector.broadcast %cst_18 : f32 to vector<2x1x18x32xf32>
    %43 = tpu.concatenate %41, %38, %41 in 2 : vector<2x8x1x32xf32>, vector<2x8x16x32xf32>, vector<2x8x1x32xf32> -> vector<2x8x18x32xf32>
    %44 = tpu.concatenate %41, %40, %41 in 2 : vector<2x8x1x32xf32>, vector<2x8x16x32xf32>, vector<2x8x1x32xf32> -> vector<2x8x18x32xf32>
    %45 = tpu.concatenate %43, %42, %44 in 1 : vector<2x8x18x32xf32>, vector<2x1x18x32xf32>, vector<2x8x18x32xf32> -> vector<2x17x18x32xf32>
    %c0_19 = arith.constant 0 : index
    %c0_20 = arith.constant 0 : index
    %c0_21 = arith.constant 0 : index
    %c0_22 = arith.constant 0 : index
    %46 = vector.load %arg16[%c0_19, %c0_20, %c0_21, %c0_22] : memref<2x17x18x32xf32, #tpu.memory_space<vmem>>, vector<2x17x18x32xf32>
    tpu.vector_store %arg16[%c0_19, %c0_20, %c0_21, %c0_22], %45 {strides = array<i32>} : memref<2x17x18x32xf32, #tpu.memory_space<vmem>>, vector<2x17x18x32xf32>,
    %c0_23 = arith.constant 0 : index
    %c8 = arith.constant 8 : index
    %c0_24 = arith.constant 0 : index
    %c0_25 = arith.constant 0 : index
    %47 = tpu.strided_load %arg16[%c0_23, %c8, %c0_24, %c0_25] {strides = array<i32: 1, 1, 2, 1>} : memref<2x17x18x32xf32, #tpu.memory_space<vmem>>, vector<2x8x8x32xf32>
    %c0_26 = arith.constant 0 : index
    %c8_27 = arith.constant 8 : index
    %c1 = arith.constant 1 : index
    %c0_28 = arith.constant 0 : index
    %48 = tpu.strided_load %arg16[%c0_26, %c8_27, %c1, %c0_28] {strides = array<i32: 1, 1, 2, 1>} : memref<2x17x18x32xf32, #tpu.memory_space<vmem>>, vector<2x8x8x32xf32>
    %c0_29 = arith.constant 0 : index
    %c8_30 = arith.constant 8 : index
    %c2 = arith.constant 2 : index
    %c0_31 = arith.constant 0 : index
    %49 = tpu.strided_load %arg16[%c0_29, %c8_30, %c2, %c0_31] {strides = array<i32: 1, 1, 2, 1>} : memref<2x17x18x32xf32, #tpu.memory_space<vmem>>, vector<2x8x8x32xf32>
    %c0_32 = arith.constant 0 : index
    %c0_33 = arith.constant 0 : index
    %c0_34 = arith.constant 0 : index
    %c0_35 = arith.constant 0 : index
    %50 = tpu.strided_load %arg16[%c0_32, %c0_33, %c0_34, %c0_35] {strides = array<i32: 1, 1, 2, 1>} : memref<2x17x18x32xf32, #tpu.memory_space<vmem>>, vector<2x8x8x32xf32>
    %c0_36 = arith.constant 0 : index
    %c0_37 = arith.constant 0 : index
    %c1_38 = arith.constant 1 : index
    %c0_39 = arith.constant 0 : index
    %51 = tpu.strided_load %arg16[%c0_36, %c0_37, %c1_38, %c0_39] {strides = array<i32: 1, 1, 2, 1>} : memref<2x17x18x32xf32, #tpu.memory_space<vmem>>, vector<2x8x8x32xf32>
    %c0_40 = arith.constant 0 : index
    %c0_41 = arith.constant 0 : index
    %c2_42 = arith.constant 2 : index
    %c0_43 = arith.constant 0 : index
    %52 = tpu.strided_load %arg16[%c0_40, %c0_41, %c2_42, %c0_43] {strides = array<i32: 1, 1, 2, 1>} : memref<2x17x18x32xf32, #tpu.memory_space<vmem>>, vector<2x8x8x32xf32>
    %c0_44 = arith.constant 0 : index
    %c9 = arith.constant 9 : index
    %c0_45 = arith.constant 0 : index
    %c0_46 = arith.constant 0 : index
    %53 = tpu.strided_load %arg16[%c0_44, %c9, %c0_45, %c0_46] {strides = array<i32: 1, 1, 2, 1>} : memref<2x17x18x32xf32, #tpu.memory_space<vmem>>, vector<2x8x8x32xf32>
    %c0_47 = arith.constant 0 : index
    %c9_48 = arith.constant 9 : index
    %c1_49 = arith.constant 1 : index
    %c0_50 = arith.constant 0 : index
    %54 = tpu.strided_load %arg16[%c0_47, %c9_48, %c1_49, %c0_50] {strides = array<i32: 1, 1, 2, 1>} : memref<2x17x18x32xf32, #tpu.memory_space<vmem>>, vector<2x8x8x32xf32>
    %c0_51 = arith.constant 0 : index
    %c9_52 = arith.constant 9 : index
    %c2_53 = arith.constant 2 : index
    %c0_54 = arith.constant 0 : index
    %55 = tpu.strided_load %arg16[%c0_51, %c9_52, %c2_53, %c0_54] {strides = array<i32: 1, 1, 2, 1>} : memref<2x17x18x32xf32, #tpu.memory_space<vmem>>, vector<2x8x8x32xf32>
    %56 = tpu.concatenate %47, %48, %49, %50, %51, %52, %53, %54, %55 in 3 : vector<2x8x8x32xf32>, vector<2x8x8x32xf32>, vector<2x8x8x32xf32>, vector<2x8x8x32xf32>, vector<2x8x8x32xf32>, vector<2x8x8x32xf32>, vector<2x8x8x32xf32>, vector<2x8x8x32xf32>, vector<2x8x8x32xf32> -> vector<2x8x8x288xf32>
    %57 = vector.shape_cast %56 : vector<2x8x8x288xf32> to vector<128x288xf32>
    %58 = arith.truncf %57 : vector<128x288xf32> to vector<128x288xbf16>
    %c0_55 = arith.constant 0 : index
    %c0_56 = arith.constant 0 : index
    %59 = vector.load %arg5[%c0_55, %c0_56] : memref<288x64xbf16, #tpu.memory_space<vmem>>, vector<288x64xbf16>
    %cst_57 = arith.constant dense<0.000000e+00> : vector<128x64xf32>
    %60 = tpu.matmul %58, %59, %cst_57 {dimension_numbers = #tpu.dot_dimension_numbers<[1], [0], [0], [1], [0, 0, 1, 1], [], []>} : vector<128x288xbf16>, vector<288x64xbf16>, vector<128x64xf32> -> vector<128x64xf32>
    %c0_58 = arith.constant 0 : index
    %c0_59 = arith.constant 0 : index
    %61 = vector.load %arg6[%c0_58, %c0_59] : memref<1x64xf32, #tpu.memory_space<vmem>>, vector<1x64xf32>
    %62 = vector.broadcast %61 : vector<1x64xf32> to vector<128x64xf32>
    %63 = arith.addf %60, %62 : vector<128x64xf32>
    %c0_60 = arith.constant 0 : index
    %c0_61 = arith.constant 0 : index
    %64 = vector.load %arg7[%c0_60, %c0_61] : memref<1x64xf32, #tpu.memory_space<vmem>>, vector<1x64xf32>
    %c0_62 = arith.constant 0 : index
    %c0_63 = arith.constant 0 : index
    %65 = vector.load %arg8[%c0_62, %c0_63] : memref<1x64xf32, #tpu.memory_space<vmem>>, vector<1x64xf32>
    %cst_64 = arith.constant dense<0.000000e+00> : vector<64xf32>
    %66 = vector.multi_reduction <add>, %63, %cst_64 [0] : vector<128x64xf32> to vector<64xf32>
    %67 = vector.shape_cast %66 : vector<64xf32> to vector<1x64xf32>
    %cst_65 = arith.constant 7.812500e-03 : f32
    %68 = vector.broadcast %cst_65 : f32 to vector<1x64xf32>
    %69 = arith.mulf %67, %68 : vector<1x64xf32>
    %70 = vector.broadcast %69 : vector<1x64xf32> to vector<128x64xf32>
    %71 = arith.subf %63, %70 : vector<128x64xf32>
    %72 = arith.mulf %71, %71 : vector<128x64xf32>
    %cst_66 = arith.constant dense<0.000000e+00> : vector<64xf32>
    %73 = vector.multi_reduction <add>, %72, %cst_66 [0] : vector<128x64xf32> to vector<64xf32>
    %74 = vector.shape_cast %73 : vector<64xf32> to vector<1x64xf32>
    %cst_67 = arith.constant 7.812500e-03 : f32
    %75 = vector.broadcast %cst_67 : f32 to vector<1x64xf32>
    %76 = arith.mulf %74, %75 : vector<1x64xf32>
    %cst_68 = arith.constant 9.99999974E-6 : f32
    %77 = vector.broadcast %cst_68 : f32 to vector<1x64xf32>
    %78 = arith.addf %76, %77 : vector<1x64xf32>
    %79 = math.rsqrt %78 : vector<1x64xf32>
    %80 = vector.broadcast %79 : vector<1x64xf32> to vector<128x64xf32>
    %81 = arith.mulf %71, %80 : vector<128x64xf32>
    %82 = vector.broadcast %64 : vector<1x64xf32> to vector<128x64xf32>
    %83 = arith.mulf %81, %82 : vector<128x64xf32>
    %84 = vector.broadcast %65 : vector<1x64xf32> to vector<128x64xf32>
    %85 = arith.addf %83, %84 : vector<128x64xf32>
    %cst_69 = arith.constant 0.000000e+00 : f32
    %86 = vector.broadcast %cst_69 : f32 to vector<128x64xf32>
    %87 = arith.cmpf ogt, %85, %86 : vector<128x64xf32>
    %cst_70 = arith.constant 0.000000e+00 : f32
    %88 = vector.broadcast %cst_70 : f32 to vector<128x64xf32>
    %89 = arith.minimumf %85, %88 : vector<128x64xf32>
    %90 = math.exp %89 : vector<128x64xf32>
    %cst_71 = arith.constant 1.000000e+00 : f32
    %91 = vector.broadcast %cst_71 : f32 to vector<128x64xf32>
    %92 = arith.subf %90, %91 : vector<128x64xf32>
    %93 = arith.select %87, %85, %92 : vector<128x64xi1>, vector<128x64xf32>
    %94 = vector.shape_cast %93 : vector<128x64xf32> to vector<2x4x2x8x64xf32>
    %95 = vector.extract_strided_slice %94 {offsets = [0, 0, 0, 0, 0], sizes = [2, 4, 1, 8, 64], strides = [1, 1, 1, 1, 1]} : vector<2x4x2x8x64xf32> to vector<2x4x1x8x64xf32>
    %96 = vector.shape_cast %95 : vector<2x4x1x8x64xf32> to vector<2x4x8x64xf32>
    %97 = vector.extract_strided_slice %94 {offsets = [0, 0, 1, 0, 0], sizes = [2, 4, 1, 8, 64], strides = [1, 1, 1, 1, 1]} : vector<2x4x2x8x64xf32> to vector<2x4x1x8x64xf32>
    %98 = vector.shape_cast %97 : vector<2x4x1x8x64xf32> to vector<2x4x8x64xf32>
    %cst_72 = arith.constant 0.000000e+00 : f32
    %99 = vector.broadcast %cst_72 : f32 to vector<2x4x1x64xf32>
    %cst_73 = arith.constant 0.000000e+00 : f32
    %100 = vector.broadcast %cst_73 : f32 to vector<2x1x10x64xf32>
    %101 = tpu.concatenate %99, %96, %99 in 2 : vector<2x4x1x64xf32>, vector<2x4x8x64xf32>, vector<2x4x1x64xf32> -> vector<2x4x10x64xf32>
    %102 = tpu.concatenate %99, %98, %99 in 2 : vector<2x4x1x64xf32>, vector<2x4x8x64xf32>, vector<2x4x1x64xf32> -> vector<2x4x10x64xf32>
    %103 = tpu.concatenate %101, %100, %102 in 1 : vector<2x4x10x64xf32>, vector<2x1x10x64xf32>, vector<2x4x10x64xf32> -> vector<2x9x10x64xf32>
    %c0_74 = arith.constant 0 : index
    %c0_75 = arith.constant 0 : index
    %c0_76 = arith.constant 0 : index
    %c0_77 = arith.constant 0 : index
    %104 = vector.load %arg17[%c0_74, %c0_75, %c0_76, %c0_77] : memref<2x9x10x64xf32, #tpu.memory_space<vmem>>, vector<2x9x10x64xf32>
    tpu.vector_store %arg17[%c0_74, %c0_75, %c0_76, %c0_77], %103 {strides = array<i32>} : memref<2x9x10x64xf32, #tpu.memory_space<vmem>>, vector<2x9x10x64xf32>,
    %c0_78 = arith.constant 0 : index
    %c4 = arith.constant 4 : index
    %c0_79 = arith.constant 0 : index
    %c0_80 = arith.constant 0 : index
    %105 = tpu.strided_load %arg17[%c0_78, %c4, %c0_79, %c0_80] {strides = array<i32: 1, 1, 2, 1>} : memref<2x9x10x64xf32, #tpu.memory_space<vmem>>, vector<2x4x4x64xf32>
    %c0_81 = arith.constant 0 : index
    %c4_82 = arith.constant 4 : index
    %c1_83 = arith.constant 1 : index
    %c0_84 = arith.constant 0 : index
    %106 = tpu.strided_load %arg17[%c0_81, %c4_82, %c1_83, %c0_84] {strides = array<i32: 1, 1, 2, 1>} : memref<2x9x10x64xf32, #tpu.memory_space<vmem>>, vector<2x4x4x64xf32>
    %c0_85 = arith.constant 0 : index
    %c4_86 = arith.constant 4 : index
    %c2_87 = arith.constant 2 : index
    %c0_88 = arith.constant 0 : index
    %107 = tpu.strided_load %arg17[%c0_85, %c4_86, %c2_87, %c0_88] {strides = array<i32: 1, 1, 2, 1>} : memref<2x9x10x64xf32, #tpu.memory_space<vmem>>, vector<2x4x4x64xf32>
    %c0_89 = arith.constant 0 : index
    %c0_90 = arith.constant 0 : index
    %c0_91 = arith.constant 0 : index
    %c0_92 = arith.constant 0 : index
    %108 = tpu.strided_load %arg17[%c0_89, %c0_90, %c0_91, %c0_92] {strides = array<i32: 1, 1, 2, 1>} : memref<2x9x10x64xf32, #tpu.memory_space<vmem>>, vector<2x4x4x64xf32>
    %c0_93 = arith.constant 0 : index
    %c0_94 = arith.constant 0 : index
    %c1_95 = arith.constant 1 : index
    %c0_96 = arith.constant 0 : index
    %109 = tpu.strided_load %arg17[%c0_93, %c0_94, %c1_95, %c0_96] {strides = array<i32: 1, 1, 2, 1>} : memref<2x9x10x64xf32, #tpu.memory_space<vmem>>, vector<2x4x4x64xf32>
    %c0_97 = arith.constant 0 : index
    %c0_98 = arith.constant 0 : index
    %c2_99 = arith.constant 2 : index
    %c0_100 = arith.constant 0 : index
    %110 = tpu.strided_load %arg17[%c0_97, %c0_98, %c2_99, %c0_100] {strides = array<i32: 1, 1, 2, 1>} : memref<2x9x10x64xf32, #tpu.memory_space<vmem>>, vector<2x4x4x64xf32>
    %c0_101 = arith.constant 0 : index
    %c5 = arith.constant 5 : index
    %c0_102 = arith.constant 0 : index
    %c0_103 = arith.constant 0 : index
    %111 = tpu.strided_load %arg17[%c0_101, %c5, %c0_102, %c0_103] {strides = array<i32: 1, 1, 2, 1>} : memref<2x9x10x64xf32, #tpu.memory_space<vmem>>, vector<2x4x4x64xf32>
    %c0_104 = arith.constant 0 : index
    %c5_105 = arith.constant 5 : index
    %c1_106 = arith.constant 1 : index
    %c0_107 = arith.constant 0 : index
    %112 = tpu.strided_load %arg17[%c0_104, %c5_105, %c1_106, %c0_107] {strides = array<i32: 1, 1, 2, 1>} : memref<2x9x10x64xf32, #tpu.memory_space<vmem>>, vector<2x4x4x64xf32>
    %c0_108 = arith.constant 0 : index
    %c5_109 = arith.constant 5 : index
    %c2_110 = arith.constant 2 : index
    %c0_111 = arith.constant 0 : index
    %113 = tpu.strided_load %arg17[%c0_108, %c5_109, %c2_110, %c0_111] {strides = array<i32: 1, 1, 2, 1>} : memref<2x9x10x64xf32, #tpu.memory_space<vmem>>, vector<2x4x4x64xf32>
    %114 = tpu.concatenate %105, %106, %107, %108, %109, %110, %111, %112, %113 in 3 : vector<2x4x4x64xf32>, vector<2x4x4x64xf32>, vector<2x4x4x64xf32>, vector<2x4x4x64xf32>, vector<2x4x4x64xf32>, vector<2x4x4x64xf32>, vector<2x4x4x64xf32>, vector<2x4x4x64xf32>, vector<2x4x4x64xf32> -> vector<2x4x4x576xf32>
    %115 = vector.extract_strided_slice %114 {offsets = [0, 0, 0, 0], sizes = [1, 1, 4, 576], strides = [1, 1, 1, 1]} : vector<2x4x4x576xf32> to vector<1x1x4x576xf32>
    %116 = vector.shape_cast %115 : vector<1x1x4x576xf32> to vector<4x576xf32>
    %117 = vector.extract_strided_slice %114 {offsets = [0, 1, 0, 0], sizes = [1, 1, 4, 576], strides = [1, 1, 1, 1]} : vector<2x4x4x576xf32> to vector<1x1x4x576xf32>
    %118 = vector.shape_cast %117 : vector<1x1x4x576xf32> to vector<4x576xf32>
    %119 = vector.extract_strided_slice %114 {offsets = [0, 2, 0, 0], sizes = [1, 1, 4, 576], strides = [1, 1, 1, 1]} : vector<2x4x4x576xf32> to vector<1x1x4x576xf32>
    %120 = vector.shape_cast %119 : vector<1x1x4x576xf32> to vector<4x576xf32>
    %121 = vector.extract_strided_slice %114 {offsets = [0, 3, 0, 0], sizes = [1, 1, 4, 576], strides = [1, 1, 1, 1]} : vector<2x4x4x576xf32> to vector<1x1x4x576xf32>
    %122 = vector.shape_cast %121 : vector<1x1x4x576xf32> to vector<4x576xf32>
    %123 = vector.extract_strided_slice %114 {offsets = [1, 0, 0, 0], sizes = [1, 1, 4, 576], strides = [1, 1, 1, 1]} : vector<2x4x4x576xf32> to vector<1x1x4x576xf32>
    %124 = vector.shape_cast %123 : vector<1x1x4x576xf32> to vector<4x576xf32>
    %125 = vector.extract_strided_slice %114 {offsets = [1, 1, 0, 0], sizes = [1, 1, 4, 576], strides = [1, 1, 1, 1]} : vector<2x4x4x576xf32> to vector<1x1x4x576xf32>
    %126 = vector.shape_cast %125 : vector<1x1x4x576xf32> to vector<4x576xf32>
    %127 = vector.extract_strided_slice %114 {offsets = [1, 2, 0, 0], sizes = [1, 1, 4, 576], strides = [1, 1, 1, 1]} : vector<2x4x4x576xf32> to vector<1x1x4x576xf32>
    %128 = vector.shape_cast %127 : vector<1x1x4x576xf32> to vector<4x576xf32>
    %129 = vector.extract_strided_slice %114 {offsets = [1, 3, 0, 0], sizes = [1, 1, 4, 576], strides = [1, 1, 1, 1]} : vector<2x4x4x576xf32> to vector<1x1x4x576xf32>
    %130 = vector.shape_cast %129 : vector<1x1x4x576xf32> to vector<4x576xf32>
    %131 = tpu.concatenate %116, %118, %120, %122, %124, %126, %128, %130 in 0 : vector<4x576xf32>, vector<4x576xf32>, vector<4x576xf32>, vector<4x576xf32>, vector<4x576xf32>, vector<4x576xf32>, vector<4x576xf32>, vector<4x576xf32> -> vector<32x576xf32>
    %132 = arith.truncf %131 : vector<32x576xf32> to vector<32x576xbf16>
    %c0_112 = arith.constant 0 : index
    %c0_113 = arith.constant 0 : index
    %133 = vector.load %arg9[%c0_112, %c0_113] : memref<576x128xbf16, #tpu.memory_space<vmem>>, vector<576x128xbf16>
    %cst_114 = arith.constant dense<0.000000e+00> : vector<32x128xf32>
    %134 = tpu.matmul %132, %133, %cst_114 {dimension_numbers = #tpu.dot_dimension_numbers<[1], [0], [0], [1], [0, 0, 1, 1], [], []>} : vector<32x576xbf16>, vector<576x128xbf16>, vector<32x128xf32> -> vector<32x128xf32>
    %c0_115 = arith.constant 0 : index
    %c0_116 = arith.constant 0 : index
    %135 = vector.load %arg10[%c0_115, %c0_116] : memref<1x128xf32, #tpu.memory_space<vmem>>, vector<1x128xf32>
    %136 = vector.broadcast %135 : vector<1x128xf32> to vector<32x128xf32>
    %137 = arith.addf %134, %136 : vector<32x128xf32>
    %c0_117 = arith.constant 0 : index
    %c0_118 = arith.constant 0 : index
    %138 = vector.load %arg11[%c0_117, %c0_118] : memref<1x128xf32, #tpu.memory_space<vmem>>, vector<1x128xf32>
    %c0_119 = arith.constant 0 : index
    %c0_120 = arith.constant 0 : index
    %139 = vector.load %arg12[%c0_119, %c0_120] : memref<1x128xf32, #tpu.memory_space<vmem>>, vector<1x128xf32>
    %cst_121 = arith.constant dense<0.000000e+00> : vector<128xf32>
    %140 = vector.multi_reduction <add>, %137, %cst_121 [0] : vector<32x128xf32> to vector<128xf32>
    %141 = vector.shape_cast %140 : vector<128xf32> to vector<1x128xf32>
    %cst_122 = arith.constant 3.125000e-02 : f32
    %142 = vector.broadcast %cst_122 : f32 to vector<1x128xf32>
    %143 = arith.mulf %141, %142 : vector<1x128xf32>
    %144 = vector.broadcast %143 : vector<1x128xf32> to vector<32x128xf32>
    %145 = arith.subf %137, %144 : vector<32x128xf32>
    %146 = arith.mulf %145, %145 : vector<32x128xf32>
    %cst_123 = arith.constant dense<0.000000e+00> : vector<128xf32>
    %147 = vector.multi_reduction <add>, %146, %cst_123 [0] : vector<32x128xf32> to vector<128xf32>
    %148 = vector.shape_cast %147 : vector<128xf32> to vector<1x128xf32>
    %cst_124 = arith.constant 3.125000e-02 : f32
    %149 = vector.broadcast %cst_124 : f32 to vector<1x128xf32>
    %150 = arith.mulf %148, %149 : vector<1x128xf32>
    %cst_125 = arith.constant 9.99999974E-6 : f32
    %151 = vector.broadcast %cst_125 : f32 to vector<1x128xf32>
    %152 = arith.addf %150, %151 : vector<1x128xf32>
    %153 = math.rsqrt %152 : vector<1x128xf32>
    %154 = vector.broadcast %153 : vector<1x128xf32> to vector<32x128xf32>
    %155 = arith.mulf %145, %154 : vector<32x128xf32>
    %156 = vector.broadcast %138 : vector<1x128xf32> to vector<32x128xf32>
    %157 = arith.mulf %155, %156 : vector<32x128xf32>
    %158 = vector.broadcast %139 : vector<1x128xf32> to vector<32x128xf32>
    %159 = arith.addf %157, %158 : vector<32x128xf32>
    %cst_126 = arith.constant 0.000000e+00 : f32
    %160 = vector.broadcast %cst_126 : f32 to vector<32x128xf32>
    %161 = arith.cmpf ogt, %159, %160 : vector<32x128xf32>
    %cst_127 = arith.constant 0.000000e+00 : f32
    %162 = vector.broadcast %cst_127 : f32 to vector<32x128xf32>
    %163 = arith.minimumf %159, %162 : vector<32x128xf32>
    %164 = math.exp %163 : vector<32x128xf32>
    %cst_128 = arith.constant 1.000000e+00 : f32
    %165 = vector.broadcast %cst_128 : f32 to vector<32x128xf32>
    %166 = arith.subf %164, %165 : vector<32x128xf32>
    %167 = arith.select %161, %159, %166 : vector<32x128xi1>, vector<32x128xf32>
    %168 = vector.shape_cast %167 : vector<32x128xf32> to vector<2x16x128xf32>
    %c0_129 = arith.constant 0 : index
    %c0_130 = arith.constant 0 : index
    %169 = vector.load %arg13[%c0_129, %c0_130] : memref<16x128xf32, #tpu.memory_space<vmem>>, vector<16x128xf32>
    %170 = vector.shape_cast %169 : vector<16x128xf32> to vector<1x16x128xf32>
    %171 = vector.broadcast %170 : vector<1x16x128xf32> to vector<2x16x128xf32>
    %172 = arith.mulf %168, %171 : vector<2x16x128xf32>
    %cst_131 = arith.constant dense<0.000000e+00> : vector<2x16xf32>
    %173 = vector.multi_reduction <add>, %172, %cst_131 [2] : vector<2x16x128xf32> to vector<2x16xf32>
    %174 = vector.shape_cast %173 : vector<2x16xf32> to vector<2x16x1xf32>
    %cst_132 = arith.constant dense<0.000000e+00> : vector<2x1xf32>
    %175 = vector.multi_reduction <add>, %174, %cst_132 [1] : vector<2x16x1xf32> to vector<2x1xf32>
    %176 = vector.shape_cast %175 : vector<2x1xf32> to vector<2x1x1xf32>
    %c0_133 = arith.constant 0 : index
    %c0_134 = arith.constant 0 : index
    %c0_135 = arith.constant 0 : index
    %177 = vector.load %arg14[%c0_133, %c0_134, %c0_135] : memref<1x1x1xf32, #tpu.memory_space<vmem>>, vector<1x1x1xf32>
    %178 = vector.broadcast %177 : vector<1x1x1xf32> to vector<2x1x1xf32>
    %179 = arith.addf %176, %178 : vector<2x1x1xf32>
    %180 = arith.negf %179 : vector<2x1x1xf32>
    %181 = math.exp %180 : vector<2x1x1xf32>
    %cst_136 = arith.constant 1.000000e+00 : f32
    %182 = vector.broadcast %cst_136 : f32 to vector<2x1x1xf32>
    %183 = arith.addf %182, %181 : vector<2x1x1xf32>
    %184 = arith.divf %182, %183 : vector<2x1x1xf32>
    %185 = vector.shape_cast %184 : vector<2x1x1xf32> to vector<2x1x1xf32>
    %186 = vector.broadcast %185 : vector<2x1x1xf32> to vector<2x1x128xf32>
    %c0_137 = arith.constant 0 : index
    %c0_138 = arith.constant 0 : index
    %c0_139 = arith.constant 0 : index
    %187 = vector.load %arg15[%c0_137, %c0_138, %c0_139] : memref<2x1x128xf32, #tpu.memory_space<vmem>>, vector<2x1x128xf32>
    tpu.vector_store %arg15[%c0_137, %c0_138, %c0_139], %186 {strides = array<i32>} : memref<2x1x128xf32, #tpu.memory_space<vmem>>, vector<2x1x128xf32>,
    return
  }
}

</mosaic_0001>

<llo_original>
// kernel: lapgan_discriminator_level2.1
$region0: #{lapgan_discriminator_level2.1}
  #allocation0 [shape = 'u32[]', space=smem, size = 0x4, offset = 0x4, fixed_abs, tag = 'smem constant byte address 0x4 - core index']
  #allocation1 [shape = 'u32[144,128]{1,0:T(1,128)}', space=vmem, size = 0x12000, scoped, tag = 'internal scratch']
  #allocation2 [shape = 'f32[2,17,18,32]{3,2,1,0:T(8,128)}', space=vmem, size = 0x66000, scoped, tag = 'scratch operand']
  #allocation3 [shape = 'f32[2,9,10,64]{3,2,1,0:T(8,128)}', space=vmem, size = 0x24000, scoped, tag = 'scratch operand']
  #allocation4 [shape = 'f32[1,1,1]{2,1,0:T(1,128)S(1)}', space=vmem, size = 0x200, scoped, tag = 'scoped memory for lapgan_discriminator_level2.1']
  %s0 = inlined_call_operand.vmem [shape: bf16[512,128], index: 0, kind: input, shape index: {}]
  %s1 = inlined_call_operand.vmem [shape: bf16[128,32], index: 1, kind: input, shape index: {}]
  %s2 = inlined_call_operand.vmem [shape: f32[1,32], index: 2, kind: input, shape index: {}]
  %s3 = inlined_call_operand.vmem [shape: f32[1,32], index: 3, kind: input, shape index: {}]
  %s4 = inlined_call_operand.vmem [shape: f32[1,32], index: 4, kind: input, shape index: {}]
  %s5 = inlined_call_operand.vmem [shape: bf16[288,64], index: 5, kind: input, shape index: {}]
  %s6 = inlined_call_operand.vmem [shape: f32[1,64], index: 6, kind: input, shape index: {}]
  %s7 = inlined_call_operand.vmem [shape: f32[1,64], index: 7, kind: input, shape index: {}]
  %s8 = inlined_call_operand.vmem [shape: f32[1,64], index: 8, kind: input, shape index: {}]
  %s9 = inlined_call_operand.vmem [shape: bf16[576,128], index: 9, kind: input, shape index: {}]
  %s10 = inlined_call_operand.vmem [shape: f32[1,128], index: 10, kind: input, shape index: {}]
  %s11 = inlined_call_operand.vmem [shape: f32[1,128], index: 11, kind: input, shape index: {}]
  %s12 = inlined_call_operand.vmem [shape: f32[1,128], index: 12, kind: input, shape index: {}]
  %s13 = inlined_call_operand.vmem [shape: f32[16,128], index: 13, kind: input, shape index: {}]
  %s14 = inlined_call_operand.<no memory space> [shape: f32[1,1,1], index: 14, kind: input, shape index: {}]
  %s15 = inlined_call_operand.vmem [shape: f32[2,1,128], index: 15, kind: output, shape index: {}]
  %s16 = sld [smem:[#allocation0]]
  $region70: #{lapgan_discriminator_level2.1} parent=0
    _
  %s18 = ssub.s32 1, %s16
  %s19 = scalar_select 0, %s18, %s16
  %v20 = vstv %s14
  %21 = vst [vmem:[#allocation4] sm:$0x1] %v20
  // Predicated region
  $region2: #{lapgan_discriminator_level2.1} parent=0 // pred_check
    _
  $region3: #{lapgan_discriminator_level2.1} parent=0 // pred_check_branch
    %23 = sbr.rel (0) target = $region5
  $region4: #{lapgan_discriminator_level2.1} parent=0 // pred_region
    _
  $region5: #{lapgan_discriminator_level2.1} parent=0 // pred_fallthru
    _
  // Predicated region
  $region6: #{lapgan_discriminator_level2.1} parent=0 // pred_check
    _
  $region7: #{lapgan_discriminator_level2.1} parent=0 // pred_check_branch
    %25 = sbr.rel (0) target = $region9
  $region8: #{lapgan_discriminator_level2.1} parent=0 // pred_region
    _
  $region9: #{lapgan_discriminator_level2.1} parent=0 // pred_fallthru
    _
  // Predicated region
  $region10: #{lapgan_discriminator_level2.1} parent=0 // pred_check
    _
  $region11: #{lapgan_discriminator_level2.1} parent=0 // pred_check_branch
    %27 = sbr.rel (0) target = $region13
  $region12: #{lapgan_discriminator_level2.1} parent=0 // pred_region
    _
  $region13: #{lapgan_discriminator_level2.1} parent=0 // pred_fallthru
    _
  // Predicated region
  $region14: #{lapgan_discriminator_level2.1} parent=0 // pred_check
    _
  $region15: #{lapgan_discriminator_level2.1} parent=0 // pred_check_branch
    %29 = sbr.rel (0) target = $region17
  $region16: #{lapgan_discriminator_level2.1} parent=0 // pred_region
    _
  $region17: #{lapgan_discriminator_level2.1} parent=0 // pred_fallthru
    _
  // Predicated region
  $region18: #{lapgan_discriminator_level2.1} parent=0 // pred_check
    _
  $region19: #{lapgan_discriminator_level2.1} parent=0 // pred_check_branch
    %31 = sbr.rel (0) target = $region21
  $region20: #{lapgan_discriminator_level2.1} parent=0 // pred_region
    _
  $region21: #{lapgan_discriminator_level2.1} parent=0 // pred_fallthru
    _
  // Predicated region
  $region22: #{lapgan_discriminator_level2.1} parent=0 // pred_check
    _
  $region23: #{lapgan_discriminator_level2.1} parent=0 // pred_check_branch
    %33 = sbr.rel (0) target = $region25
  $region24: #{lapgan_discriminator_level2.1} parent=0 // pred_region
    _
  $region25: #{lapgan_discriminator_level2.1} parent=0 // pred_fallthru
    _
  // Predicated region
  $region26: #{lapgan_discriminator_level2.1} parent=0 // pred_check
    _
  $region27: #{lapgan_discriminator_level2.1} parent=0 // pred_check_branch
    %35 = sbr.rel (0) target = $region29
  $region28: #{lapgan_discriminator_level2.1} parent=0 // pred_region
    _
  $region29: #{lapgan_discriminator_level2.1} parent=0 // pred_fallthru
    _
  // Predicated region
  $region30: #{lapgan_discriminator_level2.1} parent=0 // pred_check
    _
  $region31: #{lapgan_discriminator_level2.1} parent=0 // pred_check_branch
    %37 = sbr.rel (0) target = $region33
  $region32: #{lapgan_discriminator_level2.1} parent=0 // pred_region
    _
  $region33: #{lapgan_discriminator_level2.1} parent=0 // pred_fallthru
    _
  // Predicated region
  $region34: #{lapgan_discriminator_level2.1} parent=0 // pred_check
    _
  $region35: #{lapgan_discriminator_level2.1} parent=0 // pred_check_branch
    %39 = sbr.rel (0) target = $region37
  $region36: #{lapgan_discriminator_level2.1} parent=0 // pred_region
    _
  $region37: #{lapgan_discriminator_level2.1} parent=0 // pred_fallthru
    _
  // Predicated region
  $region38: #{lapgan_discriminator_level2.1} parent=0 // pred_check
    _
  $region39: #{lapgan_discriminator_level2.1} parent=0 // pred_check_branch
    %41 = sbr.rel (0) target = $region41
  $region40: #{lapgan_discriminator_level2.1} parent=0 // pred_region
    _
  $region41: #{lapgan_discriminator_level2.1} parent=0 // pred_fallthru
    _
  // Predicated region
  $region42: #{lapgan_discriminator_level2.1} parent=0 // pred_check
    _
  $region43: #{lapgan_discriminator_level2.1} parent=0 // pred_check_branch
    %43 = sbr.rel (0) target = $region45
  $region44: #{lapgan_discriminator_level2.1} parent=0 // pred_region
    _
  $region45: #{lapgan_discriminator_level2.1} parent=0 // pred_fallthru
    _
  // Predicated region
  $region46: #{lapgan_discriminator_level2.1} parent=0 // pred_check
    _
  $region47: #{lapgan_discriminator_level2.1} parent=0 // pred_check_branch
    %45 = sbr.rel (0) target = $region49
  $region48: #{lapgan_discriminator_level2.1} parent=0 // pred_region
    _
  $region49: #{lapgan_discriminator_level2.1} parent=0 // pred_fallthru
    _
  // Predicated region
  $region50: #{lapgan_discriminator_level2.1} parent=0 // pred_check
    _
  $region51: #{lapgan_discriminator_level2.1} parent=0 // pred_check_branch
    %47 = sbr.rel (0) target = $region53
  $region52: #{lapgan_discriminator_level2.1} parent=0 // pred_region
    _
  $region53: #{lapgan_discriminator_level2.1} parent=0 // pred_fallthru
    _
  // Predicated region
  $region54: #{lapgan_discriminator_level2.1} parent=0 // pred_check
    _
  $region55: #{lapgan_discriminator_level2.1} parent=0 // pred_check_branch
    %49 = sbr.rel (0) target = $region57
  $region56: #{lapgan_discriminator_level2.1} parent=0 // pred_region
    _
  $region57: #{lapgan_discriminator_level2.1} parent=0 // pred_fallthru
    _
  // Predicated region
  $region58: #{lapgan_discriminator_level2.1} parent=0 // pred_check
    _
  $region59: #{lapgan_discriminator_level2.1} parent=0 // pred_check_branch
    %51 = sbr.rel (0) target = $region61
  $region60: #{lapgan_discriminator_level2.1} parent=0 // pred_region
    _
  $region61: #{lapgan_discriminator_level2.1} parent=0 // pred_fallthru
    _
  %v53 = vld [vmem:[%s0] sm:$0xf]
  %v54 = vld [vmem:[%s0 + $0x4] sm:$0xf]
  %v55 = vld [vmem:[%s0 + $0x8] sm:$0xf]
  %v56 = vld [vmem:[%s0 + $0xc] sm:$0xf]
  %v57 = vld [vmem:[%s0 + $0x10] sm:$0xf]
  %v58 = vld [vmem:[%s0 + $0x14] sm:$0xf]
  %v59 = vld [vmem:[%s0 + $0x18] sm:$0xf]
  %v60 = vld [vmem:[%s0 + $0x1c] sm:$0xf]
  %v61 = vld [vmem:[%s0 + $0x20] sm:$0xf]
  %v62 = vld [vmem:[%s0 + $0x24] sm:$0xf]
  %v63 = vld [vmem:[%s0 + $0x28] sm:$0xf]
  %v64 = vld [vmem:[%s0 + $0x2c] sm:$0xf]
  %v65 = vld [vmem:[%s0 + $0x30] sm:$0xf]
  %v66 = vld [vmem:[%s0 + $0x34] sm:$0xf]
  %v67 = vld [vmem:[%s0 + $0x38] sm:$0xf]
  %v68 = vld [vmem:[%s0 + $0x3c] sm:$0xf]
  %v69 = vld [vmem:[%s0 + $0x40] sm:$0xf]
  %v70 = vld [vmem:[%s0 + $0x44] sm:$0xf]
  %v71 = vld [vmem:[%s0 + $0x48] sm:$0xf]
  %v72 = vld [vmem:[%s0 + $0x4c] sm:$0xf]
  %v73 = vld [vmem:[%s0 + $0x50] sm:$0xf]
  %v74 = vld [vmem:[%s0 + $0x54] sm:$0xf]
  %v75 = vld [vmem:[%s0 + $0x58] sm:$0xf]
  %v76 = vld [vmem:[%s0 + $0x5c] sm:$0xf]
  %v77 = vld [vmem:[%s0 + $0x60] sm:$0xf]
  %v78 = vld [vmem:[%s0 + $0x64] sm:$0xf]
  %v79 = vld [vmem:[%s0 + $0x68] sm:$0xf]
  %v80 = vld [vmem:[%s0 + $0x6c] sm:$0xf]
  %v81 = vld [vmem:[%s0 + $0x70] sm:$0xf]
  %v82 = vld [vmem:[%s0 + $0x74] sm:$0xf]
  %v83 = vld [vmem:[%s0 + $0x78] sm:$0xf]
  %v84 = vld [vmem:[%s0 + $0x7c] sm:$0xf]
  %v85 = vld [vmem:[%s0 + $0x80] sm:$0xf]
  %v86 = vld [vmem:[%s0 + $0x84] sm:$0xf]
  %v87 = vld [vmem:[%s0 + $0x88] sm:$0xf]
  %v88 = vld [vmem:[%s0 + $0x8c] sm:$0xf]
  %v89 = vld [vmem:[%s0 + $0x90] sm:$0xf]
  %v90 = vld [vmem:[%s0 + $0x94] sm:$0xf]
  %v91 = vld [vmem:[%s0 + $0x98] sm:$0xf]
  %v92 = vld [vmem:[%s0 + $0x9c] sm:$0xf]
  %v93 = vld [vmem:[%s0 + $0xa0] sm:$0xf]
  %v94 = vld [vmem:[%s0 + $0xa4] sm:$0xf]
  %v95 = vld [vmem:[%s0 + $0xa8] sm:$0xf]
  %v96 = vld [vmem:[%s0 + $0xac] sm:$0xf]
  %v97 = vld [vmem:[%s0 + $0xb0] sm:$0xf]
  %v98 = vld [vmem:[%s0 + $0xb4] sm:$0xf]
  %v99 = vld [vmem:[%s0 + $0xb8] sm:$0xf]
  %v100 = vld [vmem:[%s0 + $0xbc] sm:$0xf]
  %v101 = vld [vmem:[%s0 + $0xc0] sm:$0xf]
  %v102 = vld [vmem:[%s0 + $0xc4] sm:$0xf]
  %v103 = vld [vmem:[%s0 + $0xc8] sm:$0xf]
  %v104 = vld [vmem:[%s0 + $0xcc] sm:$0xf]
  %v105 = vld [vmem:[%s0 + $0xd0] sm:$0xf]
  %v106 = vld [vmem:[%s0 + $0xd4] sm:$0xf]
  %v107 = vld [vmem:[%s0 + $0xd8] sm:$0xf]
  %v108 = vld [vmem:[%s0 + $0xdc] sm:$0xf]
  %v109 = vld [vmem:[%s0 + $0xe0] sm:$0xf]
  %v110 = vld [vmem:[%s0 + $0xe4] sm:$0xf]
  %v111 = vld [vmem:[%s0 + $0xe8] sm:$0xf]
  %v112 = vld [vmem:[%s0 + $0xec] sm:$0xf]
  %v113 = vld [vmem:[%s0 + $0xf0] sm:$0xf]
  %v114 = vld [vmem:[%s0 + $0xf4] sm:$0xf]
  %v115 = vld [vmem:[%s0 + $0xf8] sm:$0xf]
  %v116 = vld [vmem:[%s0 + $0xfc] sm:$0xf]
  %v117 = vld [vmem:[%s1] sm:$0xf]
  %v118 = vld [vmem:[%s1 + $0x4] sm:$0xf]
  %v119 = vld [vmem:[%s1 + $0x8] sm:$0xf]
  %v120 = vld [vmem:[%s1 + $0xc] sm:$0xf]
  %v121 = vld [vmem:[%s1 + $0x10] sm:$0xf]
  %v122 = vld [vmem:[%s1 + $0x14] sm:$0xf]
  %v123 = vld [vmem:[%s1 + $0x18] sm:$0xf]
  %v124 = vld [vmem:[%s1 + $0x1c] sm:$0xf]
  %v125 = vld [vmem:[%s1 + $0x20] sm:$0xf]
  %v126 = vld [vmem:[%s1 + $0x24] sm:$0xf]
  %v127 = vld [vmem:[%s1 + $0x28] sm:$0xf]
  %v128 = vld [vmem:[%s1 + $0x2c] sm:$0xf]
  %v129 = vld [vmem:[%s1 + $0x30] sm:$0xf]
  %v130 = vld [vmem:[%s1 + $0x34] sm:$0xf]
  %v131 = vld [vmem:[%s1 + $0x38] sm:$0xf]
  %v132 = vld [vmem:[%s1 + $0x3c] sm:$0xf]
  %v133 = vld [vmem:[%s2] sm:$0x1]
  %v135 = vlaneseq
  %v136 = vshrl.u32 %v135, 7
  %v137 = vsub.s32 0, %v136
  %v138 = vrot.slane %v133, %v137
  %v204 = vunpack.c.l.b16 %v53
  %v205 = vunpack.c.l.b16 %v54
  %v206 = vunpack.c.l.b16 %v55
  %v207 = vunpack.c.l.b16 %v56
  %v208 = vunpack.c.l.b16 %v57
  %v209 = vunpack.c.l.b16 %v58
  %v210 = vunpack.c.l.b16 %v59
  %v211 = vunpack.c.l.b16 %v60
  %v212 = vunpack.c.l.b16 %v61
  %v213 = vunpack.c.l.b16 %v62
  %v214 = vunpack.c.l.b16 %v63
  %v215 = vunpack.c.l.b16 %v64
  %v216 = vunpack.c.l.b16 %v65
  %v217 = vunpack.c.l.b16 %v66
  %v218 = vunpack.c.l.b16 %v67
  %v219 = vunpack.c.l.b16 %v68
  %v220 = vunpack.c.l.b16 %v69
  %v221 = vunpack.c.l.b16 %v70
  %v222 = vunpack.c.l.b16 %v71
  %v223 = vunpack.c.l.b16 %v72
  %v224 = vunpack.c.l.b16 %v73
  %v225 = vunpack.c.l.b16 %v74
  %v226 = vunpack.c.l.b16 %v75
  %v227 = vunpack.c.l.b16 %v76
  %v228 = vunpack.c.l.b16 %v77
  %v229 = vunpack.c.l.b16 %v78
  %v230 = vunpack.c.l.b16 %v79
  %v231 = vunpack.c.l.b16 %v80
  %v232 = vunpack.c.l.b16 %v81
  %v233 = vunpack.c.l.b16 %v82
  %v234 = vunpack.c.l.b16 %v83
  %v235 = vunpack.c.l.b16 %v84
  %v236 = vunpack.c.l.b16 %v85
  %v237 = vunpack.c.l.b16 %v86
  %v238 = vunpack.c.l.b16 %v87
  %v239 = vunpack.c.l.b16 %v88
  %v240 = vunpack.c.l.b16 %v89
  %v241 = vunpack.c.l.b16 %v90
  %v242 = vunpack.c.l.b16 %v91
  %v243 = vunpack.c.l.b16 %v92
  %v244 = vunpack.c.l.b16 %v93
  %v245 = vunpack.c.l.b16 %v94
  %v246 = vunpack.c.l.b16 %v95
  %v247 = vunpack.c.l.b16 %v96
  %v248 = vunpack.c.l.b16 %v97
  %v249 = vunpack.c.l.b16 %v98
  %v250 = vunpack.c.l.b16 %v99
  %v251 = vunpack.c.l.b16 %v100
  %v252 = vunpack.c.l.b16 %v101
  %v253 = vunpack.c.l.b16 %v102
  %v254 = vunpack.c.l.b16 %v103
  %v255 = vunpack.c.l.b16 %v104
  %v256 = vunpack.c.l.b16 %v105
  %v257 = vunpack.c.l.b16 %v106
  %v258 = vunpack.c.l.b16 %v107
  %v259 = vunpack.c.l.b16 %v108
  %v260 = vunpack.c.l.b16 %v109
  %v261 = vunpack.c.l.b16 %v110
  %v262 = vunpack.c.l.b16 %v111
  %v263 = vunpack.c.l.b16 %v112
  %v264 = vunpack.c.l.b16 %v113
  %v265 = vunpack.c.l.b16 %v114
  %v266 = vunpack.c.l.b16 %v115
  %v267 = vunpack.c.l.b16 %v116
  %v268 = vpack.c.b16 %v205, %v204
  %v269 = vpack.c.b16 %v207, %v206
  %v270 = vpack.c.b16 %v209, %v208
  %v271 = vpack.c.b16 %v211, %v210
  %v272 = vpack.c.b16 %v213, %v212
  %v273 = vpack.c.b16 %v215, %v214
  %v274 = vpack.c.b16 %v217, %v216
  %v275 = vpack.c.b16 %v219, %v218
  %v276 = vpack.c.b16 %v221, %v220
  %v277 = vpack.c.b16 %v223, %v222
  %v278 = vpack.c.b16 %v225, %v224
  %v279 = vpack.c.b16 %v227, %v226
  %v280 = vpack.c.b16 %v229, %v228
  %v281 = vpack.c.b16 %v231, %v230
  %v282 = vpack.c.b16 %v233, %v232
  %v283 = vpack.c.b16 %v235, %v234
  %v284 = vpack.c.b16 %v237, %v236
  %v285 = vpack.c.b16 %v239, %v238
  %v286 = vpack.c.b16 %v241, %v240
  %v287 = vpack.c.b16 %v243, %v242
  %v288 = vpack.c.b16 %v245, %v244
  %v289 = vpack.c.b16 %v247, %v246
  %v290 = vpack.c.b16 %v249, %v248
  %v291 = vpack.c.b16 %v251, %v250
  %v292 = vpack.c.b16 %v253, %v252
  %v293 = vpack.c.b16 %v255, %v254
  %v294 = vpack.c.b16 %v257, %v256
  %v295 = vpack.c.b16 %v259, %v258
  %v296 = vpack.c.b16 %v261, %v260
  %v297 = vpack.c.b16 %v263, %v262
  %v298 = vpack.c.b16 %v265, %v264
  %v299 = vpack.c.b16 %v267, %v266
  %v348 = vunpack.c.l.b16 %v117
  %v349 = vunpack.c.l.b16 %v118
  %v350 = vunpack.c.l.b16 %v119
  %v351 = vunpack.c.l.b16 %v120
  %v352 = vunpack.c.l.b16 %v121
  %v353 = vunpack.c.l.b16 %v122
  %v354 = vunpack.c.l.b16 %v123
  %v355 = vunpack.c.l.b16 %v124
  %v356 = vunpack.c.l.b16 %v125
  %v357 = vunpack.c.l.b16 %v126
  %v358 = vunpack.c.l.b16 %v127
  %v359 = vunpack.c.l.b16 %v128
  %v360 = vunpack.c.l.b16 %v129
  %v361 = vunpack.c.l.b16 %v130
  %v362 = vunpack.c.l.b16 %v131
  %v363 = vunpack.c.l.b16 %v132
  %v364 = vpack.c.b16 %v349, %v348
  %v365 = vpack.c.b16 %v351, %v350
  %v366 = vpack.c.b16 %v353, %v352
  %v367 = vpack.c.b16 %v355, %v354
  %v368 = vpack.c.b16 %v357, %v356
  %v369 = vpack.c.b16 %v359, %v358
  %v370 = vpack.c.b16 %v361, %v360
  %v371 = vpack.c.b16 %v363, %v362
  %380 = vmatprep.subr.bf16.mxu0 0
  %381 = vmatpush1.bf16.msra.mxu0 %v364
  %382 = vmatprep.subr.bf16.mxu0 0
  %383 = vmatpush1.bf16.msra.mxu0 %v365
  %384 = vmatprep.subr.bf16.mxu0 0
  %385 = vmatpush1.bf16.msra.mxu0 %v366
  %386 = vmatprep.subr.bf16.mxu0 0
  %387 = vmatpush1.bf16.msra.mxu0 %v367
  %388 = vmatprep.subr.bf16.mxu0 0
  %389 = vmatpush1.bf16.msra.mxu0 %v368
  %390 = vmatprep.subr.bf16.mxu0 0
  %391 = vmatpush1.bf16.msra.mxu0 %v369
  %392 = vmatprep.subr.bf16.mxu0 0
  %393 = vmatpush1.bf16.msra.mxu0 %v370
  %394 = vmatprep.subr.bf16.mxu0 0
  %395 = vmatpush1.bf16.msra.mxu0 %v371
  %396 = vmatprep.subr.bf16.mxu0 0
  %397 = vmatpush1.bf16.msra.mxu0 0
  %398 = vmatprep.subr.bf16.mxu0 0
  %399 = vmatpush1.bf16.msra.mxu0 0
  %400 = vmatprep.subr.bf16.mxu0 0
  %401 = vmatpush1.bf16.msra.mxu0 0
  %402 = vmatprep.subr.bf16.mxu0 0
  %403 = vmatpush1.bf16.msra.mxu0 0
  %404 = vmatprep.subr.bf16.mxu0 0
  %405 = vmatpush1.bf16.msra.mxu0 0
  %406 = vmatprep.subr.bf16.mxu0 0
  %407 = vmatpush1.bf16.msra.mxu0 0
  %408 = vmatprep.subr.bf16.mxu0 0
  %409 = vmatpush1.bf16.msra.mxu0 0
  %410 = vmatprep.subr.bf16.mxu0 0
  %411 = vmatpush1.bf16.msra.mxu0 0
  %412 = vmatprep.mubr.bf16.mxu0 0
  %413 = vmatmul.mubr.bf16.gmra.mrb[0].mxu0 %v268
  %v414 = vpop.f32.mrb[0].mxu0
  %v415 = vadd.f32 %v138, %v414
  %v416 = vpop.f32.mrb[0].mxu0
  %v417 = vpop.f32.mrb[0].mxu0
  %v418 = vadd.f32 %v138, %v417
  %v419 = vpop.f32.mrb[0].mxu0
  %420 = vmatprep.mubr.bf16.mxu0 0
  %421 = vmatmul.mubr.bf16.gmra.mrb[0].mxu0 %v269
  %v422 = vpop.f32.mrb[0].mxu0
  %v423 = vadd.f32 %v138, %v422
  %v424 = vpop.f32.mrb[0].mxu0
  %v425 = vpop.f32.mrb[0].mxu0
  %v426 = vadd.f32 %v138, %v425
  %v427 = vpop.f32.mrb[0].mxu0
  %428 = vmatprep.mubr.bf16.mxu0 0
  %429 = vmatmul.mubr.bf16.gmra.mrb[0].mxu0 %v270
  %v430 = vpop.f32.mrb[0].mxu0
  %v431 = vadd.f32 %v138, %v430
  %v432 = vpop.f32.mrb[0].mxu0
  %v433 = vpop.f32.mrb[0].mxu0
  %v434 = vadd.f32 %v138, %v433
  %v435 = vpop.f32.mrb[0].mxu0
  %436 = vmatprep.mubr.bf16.mxu0 0
  %437 = vmatmul.mubr.bf16.gmra.mrb[0].mxu0 %v271
  %v438 = vpop.f32.mrb[0].mxu0
  %v439 = vadd.f32 %v138, %v438
  %v440 = vpop.f32.mrb[0].mxu0
  %v441 = vpop.f32.mrb[0].mxu0
  %v442 = vadd.f32 %v138, %v441
  %v443 = vpop.f32.mrb[0].mxu0
  %444 = vmatprep.mubr.bf16.mxu0 0
  %445 = vmatmul.mubr.bf16.gmra.mrb[0].mxu0 %v272
  %v446 = vpop.f32.mrb[0].mxu0
  %v447 = vadd.f32 %v138, %v446
  %v448 = vpop.f32.mrb[0].mxu0
  %v449 = vpop.f32.mrb[0].mxu0
  %v450 = vadd.f32 %v138, %v449
  %v451 = vpop.f32.mrb[0].mxu0
  %452 = vmatprep.mubr.bf16.mxu0 0
  %453 = vmatmul.mubr.bf16.gmra.mrb[0].mxu0 %v273
  %v454 = vpop.f32.mrb[0].mxu0
  %v455 = vadd.f32 %v138, %v454
  %v456 = vpop.f32.mrb[0].mxu0
  %v457 = vpop.f32.mrb[0].mxu0
  %v458 = vadd.f32 %v138, %v457
  %v459 = vpop.f32.mrb[0].mxu0
  %460 = vmatprep.mubr.bf16.mxu0 0
  %461 = vmatmul.mubr.bf16.gmra.mrb[0].mxu0 %v274
  %v462 = vpop.f32.mrb[0].mxu0
  %v463 = vadd.f32 %v138, %v462
  %v464 = vpop.f32.mrb[0].mxu0
  %v465 = vpop.f32.mrb[0].mxu0
  %v466 = vadd.f32 %v138, %v465
  %v467 = vpop.f32.mrb[0].mxu0
  %468 = vmatprep.mubr.bf16.mxu0 0
  %469 = vmatmul.mubr.bf16.gmra.mrb[0].mxu0 %v275
  %v470 = vpop.f32.mrb[0].mxu0
  %v471 = vadd.f32 %v138, %v470
  %v472 = vpop.f32.mrb[0].mxu0
  %v473 = vpop.f32.mrb[0].mxu0
  %v474 = vadd.f32 %v138, %v473
  %v475 = vpop.f32.mrb[0].mxu0
  %476 = vmatprep.mubr.bf16.mxu0 0
  %477 = vmatmul.mubr.bf16.gmra.mrb[0].mxu0 %v276
  %v478 = vpop.f32.mrb[0].mxu0
  %v479 = vadd.f32 %v138, %v478
  %v480 = vpop.f32.mrb[0].mxu0
  %v481 = vpop.f32.mrb[0].mxu0
  %v482 = vadd.f32 %v138, %v481
  %v483 = vpop.f32.mrb[0].mxu0
  %484 = vmatprep.mubr.bf16.mxu0 0
  %485 = vmatmul.mubr.bf16.gmra.mrb[0].mxu0 %v277
  %v486 = vpop.f32.mrb[0].mxu0
  %v487 = vadd.f32 %v138, %v486
  %v488 = vpop.f32.mrb[0].mxu0
  %v489 = vpop.f32.mrb[0].mxu0
  %v490 = vadd.f32 %v138, %v489
  %v491 = vpop.f32.mrb[0].mxu0
  %492 = vmatprep.mubr.bf16.mxu0 0
  %493 = vmatmul.mubr.bf16.gmra.mrb[0].mxu0 %v278
  %v494 = vpop.f32.mrb[0].mxu0
  %v495 = vadd.f32 %v138, %v494
  %v496 = vpop.f32.mrb[0].mxu0
  %v497 = vpop.f32.mrb[0].mxu0
  %v498 = vadd.f32 %v138, %v497
  %v499 = vpop.f32.mrb[0].mxu0
  %500 = vmatprep.mubr.bf16.mxu0 0
  %501 = vmatmul.mubr.bf16.gmra.mrb[0].mxu0 %v279
  %v502 = vpop.f32.mrb[0].mxu0
  %v503 = vadd.f32 %v138, %v502
  %v504 = vpop.f32.mrb[0].mxu0
  %v505 = vpop.f32.mrb[0].mxu0
  %v506 = vadd.f32 %v138, %v505
  %v507 = vpop.f32.mrb[0].mxu0
  %508 = vmatprep.mubr.bf16.mxu0 0
  %509 = vmatmul.mubr.bf16.gmra.mrb[0].mxu0 %v280
  %v510 = vpop.f32.mrb[0].mxu0
  %v511 = vadd.f32 %v138, %v510
  %v512 = vpop.f32.mrb[0].mxu0
  %v513 = vpop.f32.mrb[0].mxu0
  %v514 = vadd.f32 %v138, %v513
  %v515 = vpop.f32.mrb[0].mxu0
  %516 = vmatprep.mubr.bf16.mxu0 0
  %517 = vmatmul.mubr.bf16.gmra.mrb[0].mxu0 %v281
  %v518 = vpop.f32.mrb[0].mxu0
  %v519 = vadd.f32 %v138, %v518
  %v520 = vpop.f32.mrb[0].mxu0
  %v521 = vpop.f32.mrb[0].mxu0
  %v522 = vadd.f32 %v138, %v521
  %v523 = vpop.f32.mrb[0].mxu0
  %524 = vmatprep.mubr.bf16.mxu0 0
  %525 = vmatmul.mubr.bf16.gmra.mrb[0].mxu0 %v282
  %v526 = vpop.f32.mrb[0].mxu0
  %v527 = vadd.f32 %v138, %v526
  %v528 = vpop.f32.mrb[0].mxu0
  %v529 = vpop.f32.mrb[0].mxu0
  %v530 = vadd.f32 %v138, %v529
  %v531 = vpop.f32.mrb[0].mxu0
  %532 = vmatprep.mubr.bf16.mxu0 0
  %533 = vmatmul.mubr.bf16.gmra.mrb[0].mxu0 %v283
  %v534 = vpop.f32.mrb[0].mxu0
  %v535 = vadd.f32 %v138, %v534
  %v536 = vpop.f32.mrb[0].mxu0
  %v537 = vpop.f32.mrb[0].mxu0
  %v538 = vadd.f32 %v138, %v537
  %v539 = vpop.f32.mrb[0].mxu0
  %540 = vmatprep.mubr.bf16.mxu0 0
  %541 = vmatmul.mubr.bf16.gmra.mrb[0].mxu0 %v284
  %v542 = vpop.f32.mrb[0].mxu0
  %v543 = vadd.f32 %v138, %v542
  %v544 = vpop.f32.mrb[0].mxu0
  %v545 = vpop.f32.mrb[0].mxu0
  %v546 = vadd.f32 %v138, %v545
  %v547 = vpop.f32.mrb[0].mxu0
  %548 = vmatprep.mubr.bf16.mxu0 0
  %549 = vmatmul.mubr.bf16.gmra.mrb[0].mxu0 %v285
  %v550 = vpop.f32.mrb[0].mxu0
  %v551 = vadd.f32 %v138, %v550
  %v552 = vpop.f32.mrb[0].mxu0
  %v553 = vpop.f32.mrb[0].mxu0
  %v554 = vadd.f32 %v138, %v553
  %v555 = vpop.f32.mrb[0].mxu0
  %556 = vmatprep.mubr.bf16.mxu0 0
  %557 = vmatmul.mubr.bf16.gmra.mrb[0].mxu0 %v286
  %v558 = vpop.f32.mrb[0].mxu0
  %v559 = vadd.f32 %v138, %v558
  %v560 = vpop.f32.mrb[0].mxu0
  %v561 = vpop.f32.mrb[0].mxu0
  %v562 = vadd.f32 %v138, %v561
  %v563 = vpop.f32.mrb[0].mxu0
  %564 = vmatprep.mubr.bf16.mxu0 0
  %565 = vmatmul.mubr.bf16.gmra.mrb[0].mxu0 %v287
  %v566 = vpop.f32.mrb[0].mxu0
  %v567 = vadd.f32 %v138, %v566
  %v568 = vpop.f32.mrb[0].mxu0
  %v569 = vpop.f32.mrb[0].mxu0
  %v570 = vadd.f32 %v138, %v569
  %v571 = vpop.f32.mrb[0].mxu0
  %572 = vmatprep.mubr.bf16.mxu0 0
  %573 = vmatmul.mubr.bf16.gmra.mrb[0].mxu0 %v288
  %v574 = vpop.f32.mrb[0].mxu0
  %v575 = vadd.f32 %v138, %v574
  %v576 = vpop.f32.mrb[0].mxu0
  %v577 = vpop.f32.mrb[0].mxu0
  %v578 = vadd.f32 %v138, %v577
  %v579 = vpop.f32.mrb[0].mxu0
  %580 = vmatprep.mubr.bf16.mxu0 0
  %581 = vmatmul.mubr.bf16.gmra.mrb[0].mxu0 %v289
  %v582 = vpop.f32.mrb[0].mxu0
  %v583 = vadd.f32 %v138, %v582
  %v584 = vpop.f32.mrb[0].mxu0
  %v585 = vpop.f32.mrb[0].mxu0
  %v586 = vadd.f32 %v138, %v585
  %v587 = vpop.f32.mrb[0].mxu0
  %588 = vmatprep.mubr.bf16.mxu0 0
  %589 = vmatmul.mubr.bf16.gmra.mrb[0].mxu0 %v290
  %v590 = vpop.f32.mrb[0].mxu0
  %v591 = vadd.f32 %v138, %v590
  %v592 = vpop.f32.mrb[0].mxu0
  %v593 = vpop.f32.mrb[0].mxu0
  %v594 = vadd.f32 %v138, %v593
  %v595 = vpop.f32.mrb[0].mxu0
  %596 = vmatprep.mubr.bf16.mxu0 0
  %597 = vmatmul.mubr.bf16.gmra.mrb[0].mxu0 %v291
  %v598 = vpop.f32.mrb[0].mxu0
  %v599 = vadd.f32 %v138, %v598
  %v600 = vpop.f32.mrb[0].mxu0
  %v601 = vpop.f32.mrb[0].mxu0
  %v602 = vadd.f32 %v138, %v601
  %v603 = vpop.f32.mrb[0].mxu0
  %604 = vmatprep.mubr.bf16.mxu0 0
  %605 = vmatmul.mubr.bf16.gmra.mrb[0].mxu0 %v292
  %v606 = vpop.f32.mrb[0].mxu0
  %v607 = vadd.f32 %v138, %v606
  %v608 = vpop.f32.mrb[0].mxu0
  %v609 = vpop.f32.mrb[0].mxu0
  %v610 = vadd.f32 %v138, %v609
  %v611 = vpop.f32.mrb[0].mxu0
  %612 = vmatprep.mubr.bf16.mxu0 0
  %613 = vmatmul.mubr.bf16.gmra.mrb[0].mxu0 %v293
  %v614 = vpop.f32.mrb[0].mxu0
  %v615 = vadd.f32 %v138, %v614
  %v616 = vpop.f32.mrb[0].mxu0
  %v617 = vpop.f32.mrb[0].mxu0
  %v618 = vadd.f32 %v138, %v617
  %v619 = vpop.f32.mrb[0].mxu0
  %620 = vmatprep.mubr.bf16.mxu0 0
  %621 = vmatmul.mubr.bf16.gmra.mrb[0].mxu0 %v294
  %v622 = vpop.f32.mrb[0].mxu0
  %v623 = vadd.f32 %v138, %v622
  %v624 = vpop.f32.mrb[0].mxu0
  %v625 = vpop.f32.mrb[0].mxu0
  %v626 = vadd.f32 %v138, %v625
  %v627 = vpop.f32.mrb[0].mxu0
  %628 = vmatprep.mubr.bf16.mxu0 0
  %629 = vmatmul.mubr.bf16.gmra.mrb[0].mxu0 %v295
  %v630 = vpop.f32.mrb[0].mxu0
  %v631 = vadd.f32 %v138, %v630
  %v632 = vpop.f32.mrb[0].mxu0
  %v633 = vpop.f32.mrb[0].mxu0
  %v634 = vadd.f32 %v138, %v633
  %v635 = vpop.f32.mrb[0].mxu0
  %636 = vmatprep.mubr.bf16.mxu0 0
  %637 = vmatmul.mubr.bf16.gmra.mrb[0].mxu0 %v296
  %v638 = vpop.f32.mrb[0].mxu0
  %v639 = vadd.f32 %v138, %v638
  %v640 = vpop.f32.mrb[0].mxu0
  %v641 = vpop.f32.mrb[0].mxu0
  %v642 = vadd.f32 %v138, %v641
  %v643 = vpop.f32.mrb[0].mxu0
  %644 = vmatprep.mubr.bf16.mxu0 0
  %645 = vmatmul.mubr.bf16.gmra.mrb[0].mxu0 %v297
  %v646 = vpop.f32.mrb[0].mxu0
  %v647 = vadd.f32 %v138, %v646
  %v648 = vpop.f32.mrb[0].mxu0
  %v649 = vpop.f32.mrb[0].mxu0
  %v650 = vadd.f32 %v138, %v649
  %v651 = vpop.f32.mrb[0].mxu0
  %652 = vmatprep.mubr.bf16.mxu0 0
  %653 = vmatmul.mubr.bf16.gmra.mrb[0].mxu0 %v298
  %v654 = vpop.f32.mrb[0].mxu0
  %v655 = vadd.f32 %v138, %v654
  %v656 = vpop.f32.mrb[0].mxu0
  %v657 = vpop.f32.mrb[0].mxu0
  %v658 = vadd.f32 %v138, %v657
  %v659 = vpop.f32.mrb[0].mxu0
  %660 = vmatprep.mubr.bf16.mxu0 0
  %661 = vmatmul.mubr.bf16.gmra.mrb[0].mxu0 %v299
  %v662 = vpop.f32.mrb[0].mxu0
  %v663 = vadd.f32 %v138, %v662
  %v664 = vpop.f32.mrb[0].mxu0
  %v665 = vpop.f32.mrb[0].mxu0
  %v666 = vadd.f32 %v138, %v665
  %v667 = vpop.f32.mrb[0].mxu0
  %668 = vdwg.mxu0
  %v669 = vld [vmem:[%s3] sm:$0x1]
  %v670 = vld [vmem:[%s4] sm:$0x1]
  %vm671 = vcmask 261120
  %v672 = vsel %vm671, %v415, 0.0
  %v673 = vsel %vm671, %v418, 0.0
  %v674 = vadd.f32 %v672, %v673
  %v675 = vsel %vm671, %v423, 0.0
  %v676 = vadd.f32 %v674, %v675
  %v677 = vsel %vm671, %v426, 0.0
  %v678 = vadd.f32 %v676, %v677
  %v679 = vsel %vm671, %v431, 0.0
  %v680 = vadd.f32 %v678, %v679
  %v681 = vsel %vm671, %v434, 0.0
  %v682 = vadd.f32 %v680, %v681
  %v683 = vsel %vm671, %v439, 0.0
  %v684 = vadd.f32 %v682, %v683
  %v685 = vsel %vm671, %v442, 0.0
  %v686 = vadd.f32 %v684, %v685
  %v687 = vsel %vm671, %v447, 0.0
  %v688 = vadd.f32 %v686, %v687
  %v689 = vsel %vm671, %v450, 0.0
  %v690 = vadd.f32 %v688, %v689
  %v691 = vsel %vm671, %v455, 0.0
  %v692 = vadd.f32 %v690, %v691
  %v693 = vsel %vm671, %v458, 0.0
  %v694 = vadd.f32 %v692, %v693
  %v695 = vsel %vm671, %v463, 0.0
  %v696 = vadd.f32 %v694, %v695
  %v697 = vsel %vm671, %v466, 0.0
  %v698 = vadd.f32 %v696, %v697
  %v699 = vsel %vm671, %v471, 0.0
  %v700 = vadd.f32 %v698, %v699
  %v701 = vsel %vm671, %v474, 0.0
  %v702 = vadd.f32 %v700, %v701
  %v703 = vsel %vm671, %v479, 0.0
  %v704 = vadd.f32 %v702, %v703
  %v705 = vsel %vm671, %v482, 0.0
  %v706 = vadd.f32 %v704, %v705
  %v707 = vsel %vm671, %v487, 0.0
  %v708 = vadd.f32 %v706, %v707
  %v709 = vsel %vm671, %v490, 0.0
  %v710 = vadd.f32 %v708, %v709
  %v711 = vsel %vm671, %v495, 0.0
  %v712 = vadd.f32 %v710, %v711
  %v713 = vsel %vm671, %v498, 0.0
  %v714 = vadd.f32 %v712, %v713
  %v715 = vsel %vm671, %v503, 0.0
  %v716 = vadd.f32 %v714, %v715
  %v717 = vsel %vm671, %v506, 0.0
  %v718 = vadd.f32 %v716, %v717
  %v719 = vsel %vm671, %v511, 0.0
  %v720 = vadd.f32 %v718, %v719
  %v721 = vsel %vm671, %v514, 0.0
  %v722 = vadd.f32 %v720, %v721
  %v723 = vsel %vm671, %v519, 0.0
  %v724 = vadd.f32 %v722, %v723
  %v725 = vsel %vm671, %v522, 0.0
  %v726 = vadd.f32 %v724, %v725
  %v727 = vsel %vm671, %v527, 0.0
  %v728 = vadd.f32 %v726, %v727
  %v729 = vsel %vm671, %v530, 0.0
  %v730 = vadd.f32 %v728, %v729
  %v731 = vsel %vm671, %v535, 0.0
  %v732 = vadd.f32 %v730, %v731
  %v733 = vsel %vm671, %v538, 0.0
  %v734 = vadd.f32 %v732, %v733
  %v735 = vsel %vm671, %v543, 0.0
  %v736 = vadd.f32 %v734, %v735
  %v737 = vsel %vm671, %v546, 0.0
  %v738 = vadd.f32 %v736, %v737
  %v739 = vsel %vm671, %v551, 0.0
  %v740 = vadd.f32 %v738, %v739
  %v741 = vsel %vm671, %v554, 0.0
  %v742 = vadd.f32 %v740, %v741
  %v743 = vsel %vm671, %v559, 0.0
  %v744 = vadd.f32 %v742, %v743
  %v745 = vsel %vm671, %v562, 0.0
  %v746 = vadd.f32 %v744, %v745
  %v747 = vsel %vm671, %v567, 0.0
  %v748 = vadd.f32 %v746, %v747
  %v749 = vsel %vm671, %v570, 0.0
  %v750 = vadd.f32 %v748, %v749
  %v751 = vsel %vm671, %v575, 0.0
  %v752 = vadd.f32 %v750, %v751
  %v753 = vsel %vm671, %v578, 0.0
  %v754 = vadd.f32 %v752, %v753
  %v755 = vsel %vm671, %v583, 0.0
  %v756 = vadd.f32 %v754, %v755
  %v757 = vsel %vm671, %v586, 0.0
  %v758 = vadd.f32 %v756, %v757
  %v759 = vsel %vm671, %v591, 0.0
  %v760 = vadd.f32 %v758, %v759
  %v761 = vsel %vm671, %v594, 0.0
  %v762 = vadd.f32 %v760, %v761
  %v763 = vsel %vm671, %v599, 0.0
  %v764 = vadd.f32 %v762, %v763
  %v765 = vsel %vm671, %v602, 0.0
  %v766 = vadd.f32 %v764, %v765
  %v767 = vsel %vm671, %v607, 0.0
  %v768 = vadd.f32 %v766, %v767
  %v769 = vsel %vm671, %v610, 0.0
  %v770 = vadd.f32 %v768, %v769
  %v771 = vsel %vm671, %v615, 0.0
  %v772 = vadd.f32 %v770, %v771
  %v773 = vsel %vm671, %v618, 0.0
  %v774 = vadd.f32 %v772, %v773
  %v775 = vsel %vm671, %v623, 0.0
  %v776 = vadd.f32 %v774, %v775
  %v777 = vsel %vm671, %v626, 0.0
  %v778 = vadd.f32 %v776, %v777
  %v779 = vsel %vm671, %v631, 0.0
  %v780 = vadd.f32 %v778, %v779
  %v781 = vsel %vm671, %v634, 0.0
  %v782 = vadd.f32 %v780, %v781
  %v783 = vsel %vm671, %v639, 0.0
  %v784 = vadd.f32 %v782, %v783
  %v785 = vsel %vm671, %v642, 0.0
  %v786 = vadd.f32 %v784, %v785
  %v787 = vsel %vm671, %v647, 0.0
  %v788 = vadd.f32 %v786, %v787
  %v789 = vsel %vm671, %v650, 0.0
  %v790 = vadd.f32 %v788, %v789
  %v791 = vsel %vm671, %v655, 0.0
  %v792 = vadd.f32 %v790, %v791
  %v793 = vsel %vm671, %v658, 0.0
  %v794 = vadd.f32 %v792, %v793
  %v795 = vsel %vm671, %v663, 0.0
  %v796 = vadd.f32 %v794, %v795
  %v797 = vsel %vm671, %v666, 0.0
  %v798 = vadd.f32 %v796, %v797
  %v799 = vrot.slane %v798, 4
  %v800 = vadd.f32 %v798, %v799
  %v801 = vrot.slane %v800, 2
  %v802 = vadd.f32 %v800, %v801
  %v803 = vrot.slane %v802, 1
  %v804 = vadd.f32 %v802, %v803
  %v805 = vmul.f32 %v804, 0.001953125
  %v806 = vsub.f32 %v415, %v805
  %v807 = vsub.f32 %v418, %v805
  %v808 = vsub.f32 %v423, %v805
  %v809 = vsub.f32 %v426, %v805
  %v810 = vsub.f32 %v431, %v805
  %v811 = vsub.f32 %v434, %v805
  %v812 = vsub.f32 %v439, %v805
  %v813 = vsub.f32 %v442, %v805
  %v814 = vsub.f32 %v447, %v805
  %v815 = vsub.f32 %v450, %v805
  %v816 = vsub.f32 %v455, %v805
  %v817 = vsub.f32 %v458, %v805
  %v818 = vsub.f32 %v463, %v805
  %v819 = vsub.f32 %v466, %v805
  %v820 = vsub.f32 %v471, %v805
  %v821 = vsub.f32 %v474, %v805
  %v822 = vsub.f32 %v479, %v805
  %v823 = vsub.f32 %v482, %v805
  %v824 = vsub.f32 %v487, %v805
  %v825 = vsub.f32 %v490, %v805
  %v826 = vsub.f32 %v495, %v805
  %v827 = vsub.f32 %v498, %v805
  %v828 = vsub.f32 %v503, %v805
  %v829 = vsub.f32 %v506, %v805
  %v830 = vsub.f32 %v511, %v805
  %v831 = vsub.f32 %v514, %v805
  %v832 = vsub.f32 %v519, %v805
  %v833 = vsub.f32 %v522, %v805
  %v834 = vsub.f32 %v527, %v805
  %v835 = vsub.f32 %v530, %v805
  %v836 = vsub.f32 %v535, %v805
  %v837 = vsub.f32 %v538, %v805
  %v838 = vsub.f32 %v543, %v805
  %v839 = vsub.f32 %v546, %v805
  %v840 = vsub.f32 %v551, %v805
  %v841 = vsub.f32 %v554, %v805
  %v842 = vsub.f32 %v559, %v805
  %v843 = vsub.f32 %v562, %v805
  %v844 = vsub.f32 %v567, %v805
  %v845 = vsub.f32 %v570, %v805
  %v846 = vsub.f32 %v575, %v805
  %v847 = vsub.f32 %v578, %v805
  %v848 = vsub.f32 %v583, %v805
  %v849 = vsub.f32 %v586, %v805
  %v850 = vsub.f32 %v591, %v805
  %v851 = vsub.f32 %v594, %v805
  %v852 = vsub.f32 %v599, %v805
  %v853 = vsub.f32 %v602, %v805
  %v854 = vsub.f32 %v607, %v805
  %v855 = vsub.f32 %v610, %v805
  %v856 = vsub.f32 %v615, %v805
  %v857 = vsub.f32 %v618, %v805
  %v858 = vsub.f32 %v623, %v805
  %v859 = vsub.f32 %v626, %v805
  %v860 = vsub.f32 %v631, %v805
  %v861 = vsub.f32 %v634, %v805
  %v862 = vsub.f32 %v639, %v805
  %v863 = vsub.f32 %v642, %v805
  %v864 = vsub.f32 %v647, %v805
  %v865 = vsub.f32 %v650, %v805
  %v866 = vsub.f32 %v655, %v805
  %v867 = vsub.f32 %v658, %v805
  %v868 = vsub.f32 %v663, %v805
  %v869 = vsub.f32 %v666, %v805
  %v870 = vmul.f32 %v806, %v806
  %v871 = vmul.f32 %v807, %v807
  %v872 = vmul.f32 %v808, %v808
  %v873 = vmul.f32 %v809, %v809
  %v874 = vmul.f32 %v810, %v810
  %v875 = vmul.f32 %v811, %v811
  %v876 = vmul.f32 %v812, %v812
  %v877 = vmul.f32 %v813, %v813
  %v878 = vmul.f32 %v814, %v814
  %v879 = vmul.f32 %v815, %v815
  %v880 = vmul.f32 %v816, %v816
  %v881 = vmul.f32 %v817, %v817
  %v882 = vmul.f32 %v818, %v818
  %v883 = vmul.f32 %v819, %v819
  %v884 = vmul.f32 %v820, %v820
  %v885 = vmul.f32 %v821, %v821
  %v886 = vmul.f32 %v822, %v822
  %v887 = vmul.f32 %v823, %v823
  %v888 = vmul.f32 %v824, %v824
  %v889 = vmul.f32 %v825, %v825
  %v890 = vmul.f32 %v826, %v826
  %v891 = vmul.f32 %v827, %v827
  %v892 = vmul.f32 %v828, %v828
  %v893 = vmul.f32 %v829, %v829
  %v894 = vmul.f32 %v830, %v830
  %v895 = vmul.f32 %v831, %v831
  %v896 = vmul.f32 %v832, %v832
  %v897 = vmul.f32 %v833, %v833
  %v898 = vmul.f32 %v834, %v834
  %v899 = vmul.f32 %v835, %v835
  %v900 = vmul.f32 %v836, %v836
  %v901 = vmul.f32 %v837, %v837
  %v902 = vmul.f32 %v838, %v838
  %v903 = vmul.f32 %v839, %v839
  %v904 = vmul.f32 %v840, %v840
  %v905 = vmul.f32 %v841, %v841
  %v906 = vmul.f32 %v842, %v842
  %v907 = vmul.f32 %v843, %v843
  %v908 = vmul.f32 %v844, %v844
  %v909 = vmul.f32 %v845, %v845
  %v910 = vmul.f32 %v846, %v846
  %v911 = vmul.f32 %v847, %v847
  %v912 = vmul.f32 %v848, %v848
  %v913 = vmul.f32 %v849, %v849
  %v914 = vmul.f32 %v850, %v850
  %v915 = vmul.f32 %v851, %v851
  %v916 = vmul.f32 %v852, %v852
  %v917 = vmul.f32 %v853, %v853
  %v918 = vmul.f32 %v854, %v854
  %v919 = vmul.f32 %v855, %v855
  %v920 = vmul.f32 %v856, %v856
  %v921 = vmul.f32 %v857, %v857
  %v922 = vmul.f32 %v858, %v858
  %v923 = vmul.f32 %v859, %v859
  %v924 = vmul.f32 %v860, %v860
  %v925 = vmul.f32 %v861, %v861
  %v926 = vmul.f32 %v862, %v862
  %v927 = vmul.f32 %v863, %v863
  %v928 = vmul.f32 %v864, %v864
  %v929 = vmul.f32 %v865, %v865
  %v930 = vmul.f32 %v866, %v866
  %v931 = vmul.f32 %v867, %v867
  %v932 = vmul.f32 %v868, %v868
  %v933 = vmul.f32 %v869, %v869
  %v934 = vsel %vm671, %v870, 0.0
  %v935 = vsel %vm671, %v871, 0.0
  %v936 = vadd.f32 %v934, %v935
  %v937 = vsel %vm671, %v872, 0.0
  %v938 = vadd.f32 %v936, %v937
  %v939 = vsel %vm671, %v873, 0.0
  %v940 = vadd.f32 %v938, %v939
  %v941 = vsel %vm671, %v874, 0.0
  %v942 = vadd.f32 %v940, %v941
  %v943 = vsel %vm671, %v875, 0.0
  %v944 = vadd.f32 %v942, %v943
  %v945 = vsel %vm671, %v876, 0.0
  %v946 = vadd.f32 %v944, %v945
  %v947 = vsel %vm671, %v877, 0.0
  %v948 = vadd.f32 %v946, %v947
  %v949 = vsel %vm671, %v878, 0.0
  %v950 = vadd.f32 %v948, %v949
  %v951 = vsel %vm671, %v879, 0.0
  %v952 = vadd.f32 %v950, %v951
  %v953 = vsel %vm671, %v880, 0.0
  %v954 = vadd.f32 %v952, %v953
  %v955 = vsel %vm671, %v881, 0.0
  %v956 = vadd.f32 %v954, %v955
  %v957 = vsel %vm671, %v882, 0.0
  %v958 = vadd.f32 %v956, %v957
  %v959 = vsel %vm671, %v883, 0.0
  %v960 = vadd.f32 %v958, %v959
  %v961 = vsel %vm671, %v884, 0.0
  %v962 = vadd.f32 %v960, %v961
  %v963 = vsel %vm671, %v885, 0.0
  %v964 = vadd.f32 %v962, %v963
  %v965 = vsel %vm671, %v886, 0.0
  %v966 = vadd.f32 %v964, %v965
  %v967 = vsel %vm671, %v887, 0.0
  %v968 = vadd.f32 %v966, %v967
  %v969 = vsel %vm671, %v888, 0.0
  %v970 = vadd.f32 %v968, %v969
  %v971 = vsel %vm671, %v889, 0.0
  %v972 = vadd.f32 %v970, %v971
  %v973 = vsel %vm671, %v890, 0.0
  %v974 = vadd.f32 %v972, %v973
  %v975 = vsel %vm671, %v891, 0.0
  %v976 = vadd.f32 %v974, %v975
  %v977 = vsel %vm671, %v892, 0.0
  %v978 = vadd.f32 %v976, %v977
  %v979 = vsel %vm671, %v893, 0.0
  %v980 = vadd.f32 %v978, %v979
  %v981 = vsel %vm671, %v894, 0.0
  %v982 = vadd.f32 %v980, %v981
  %v983 = vsel %vm671, %v895, 0.0
  %v984 = vadd.f32 %v982, %v983
  %v985 = vsel %vm671, %v896, 0.0
  %v986 = vadd.f32 %v984, %v985
  %v987 = vsel %vm671, %v897, 0.0
  %v988 = vadd.f32 %v986, %v987
  %v989 = vsel %vm671, %v898, 0.0
  %v990 = vadd.f32 %v988, %v989
  %v991 = vsel %vm671, %v899, 0.0
  %v992 = vadd.f32 %v990, %v991
  %v993 = vsel %vm671, %v900, 0.0
  %v994 = vadd.f32 %v992, %v993
  %v995 = vsel %vm671, %v901, 0.0
  %v996 = vadd.f32 %v994, %v995
  %v997 = vsel %vm671, %v902, 0.0
  %v998 = vadd.f32 %v996, %v997
  %v999 = vsel %vm671, %v903, 0.0
  %v1000 = vadd.f32 %v998, %v999
  %v1001 = vsel %vm671, %v904, 0.0
  %v1002 = vadd.f32 %v1000, %v1001
  %v1003 = vsel %vm671, %v905, 0.0
  %v1004 = vadd.f32 %v1002, %v1003
  %v1005 = vsel %vm671, %v906, 0.0
  %v1006 = vadd.f32 %v1004, %v1005
  %v1007 = vsel %vm671, %v907, 0.0
  %v1008 = vadd.f32 %v1006, %v1007
  %v1009 = vsel %vm671, %v908, 0.0
  %v1010 = vadd.f32 %v1008, %v1009
  %v1011 = vsel %vm671, %v909, 0.0
  %v1012 = vadd.f32 %v1010, %v1011
  %v1013 = vsel %vm671, %v910, 0.0
  %v1014 = vadd.f32 %v1012, %v1013
  %v1015 = vsel %vm671, %v911, 0.0
  %v1016 = vadd.f32 %v1014, %v1015
  %v1017 = vsel %vm671, %v912, 0.0
  %v1018 = vadd.f32 %v1016, %v1017
  %v1019 = vsel %vm671, %v913, 0.0
  %v1020 = vadd.f32 %v1018, %v1019
  %v1021 = vsel %vm671, %v914, 0.0
  %v1022 = vadd.f32 %v1020, %v1021
  %v1023 = vsel %vm671, %v915, 0.0
  %v1024 = vadd.f32 %v1022, %v1023
  %v1025 = vsel %vm671, %v916, 0.0
  %v1026 = vadd.f32 %v1024, %v1025
  %v1027 = vsel %vm671, %v917, 0.0
  %v1028 = vadd.f32 %v1026, %v1027
  %v1029 = vsel %vm671, %v918, 0.0
  %v1030 = vadd.f32 %v1028, %v1029
  %v1031 = vsel %vm671, %v919, 0.0
  %v1032 = vadd.f32 %v1030, %v1031
  %v1033 = vsel %vm671, %v920, 0.0
  %v1034 = vadd.f32 %v1032, %v1033
  %v1035 = vsel %vm671, %v921, 0.0
  %v1036 = vadd.f32 %v1034, %v1035
  %v1037 = vsel %vm671, %v922, 0.0
  %v1038 = vadd.f32 %v1036, %v1037
  %v1039 = vsel %vm671, %v923, 0.0
  %v1040 = vadd.f32 %v1038, %v1039
  %v1041 = vsel %vm671, %v924, 0.0
  %v1042 = vadd.f32 %v1040, %v1041
  %v1043 = vsel %vm671, %v925, 0.0
  %v1044 = vadd.f32 %v1042, %v1043
  %v1045 = vsel %vm671, %v926, 0.0
  %v1046 = vadd.f32 %v1044, %v1045
  %v1047 = vsel %vm671, %v927, 0.0
  %v1048 = vadd.f32 %v1046, %v1047
  %v1049 = vsel %vm671, %v928, 0.0
  %v1050 = vadd.f32 %v1048, %v1049
  %v1051 = vsel %vm671, %v929, 0.0
  %v1052 = vadd.f32 %v1050, %v1051
  %v1053 = vsel %vm671, %v930, 0.0
  %v1054 = vadd.f32 %v1052, %v1053
  %v1055 = vsel %vm671, %v931, 0.0
  %v1056 = vadd.f32 %v1054, %v1055
  %v1057 = vsel %vm671, %v932, 0.0
  %v1058 = vadd.f32 %v1056, %v1057
  %v1059 = vsel %vm671, %v933, 0.0
  %v1060 = vadd.f32 %v1058, %v1059
  %v1061 = vrot.slane %v1060, 4
  %v1062 = vadd.f32 %v1060, %v1061
  %v1063 = vrot.slane %v1062, 2
  %v1064 = vadd.f32 %v1062, %v1063
  %v1065 = vrot.slane %v1064, 1
  %v1066 = vadd.f32 %v1064, %v1065
  %v1067 = vmul.f32 %v1066, 0.001953125
  %v1068 = vadd.f32 %v1067, 1e-05
  %v1069 = vrsqrt.pop %v1068
  %v1070 = vmul.f32 %v806, %v1069
  %v1071 = vmul.f32 %v807, %v1069
  %v1072 = vmul.f32 %v808, %v1069
  %v1073 = vmul.f32 %v809, %v1069
  %v1074 = vmul.f32 %v810, %v1069
  %v1075 = vmul.f32 %v811, %v1069
  %v1076 = vmul.f32 %v812, %v1069
  %v1077 = vmul.f32 %v813, %v1069
  %v1078 = vmul.f32 %v814, %v1069
  %v1079 = vmul.f32 %v815, %v1069
  %v1080 = vmul.f32 %v816, %v1069
  %v1081 = vmul.f32 %v817, %v1069
  %v1082 = vmul.f32 %v818, %v1069
  %v1083 = vmul.f32 %v819, %v1069
  %v1084 = vmul.f32 %v820, %v1069
  %v1085 = vmul.f32 %v821, %v1069
  %v1086 = vmul.f32 %v822, %v1069
  %v1087 = vmul.f32 %v823, %v1069
  %v1088 = vmul.f32 %v824, %v1069
  %v1089 = vmul.f32 %v825, %v1069
  %v1090 = vmul.f32 %v826, %v1069
  %v1091 = vmul.f32 %v827, %v1069
  %v1092 = vmul.f32 %v828, %v1069
  %v1093 = vmul.f32 %v829, %v1069
  %v1094 = vmul.f32 %v830, %v1069
  %v1095 = vmul.f32 %v831, %v1069
  %v1096 = vmul.f32 %v832, %v1069
  %v1097 = vmul.f32 %v833, %v1069
  %v1098 = vmul.f32 %v834, %v1069
  %v1099 = vmul.f32 %v835, %v1069
  %v1100 = vmul.f32 %v836, %v1069
  %v1101 = vmul.f32 %v837, %v1069
  %v1102 = vmul.f32 %v838, %v1069
  %v1103 = vmul.f32 %v839, %v1069
  %v1104 = vmul.f32 %v840, %v1069
  %v1105 = vmul.f32 %v841, %v1069
  %v1106 = vmul.f32 %v842, %v1069
  %v1107 = vmul.f32 %v843, %v1069
  %v1108 = vmul.f32 %v844, %v1069
  %v1109 = vmul.f32 %v845, %v1069
  %v1110 = vmul.f32 %v846, %v1069
  %v1111 = vmul.f32 %v847, %v1069
  %v1112 = vmul.f32 %v848, %v1069
  %v1113 = vmul.f32 %v849, %v1069
  %v1114 = vmul.f32 %v850, %v1069
  %v1115 = vmul.f32 %v851, %v1069
  %v1116 = vmul.f32 %v852, %v1069
  %v1117 = vmul.f32 %v853, %v1069
  %v1118 = vmul.f32 %v854, %v1069
  %v1119 = vmul.f32 %v855, %v1069
  %v1120 = vmul.f32 %v856, %v1069
  %v1121 = vmul.f32 %v857, %v1069
  %v1122 = vmul.f32 %v858, %v1069
  %v1123 = vmul.f32 %v859, %v1069
  %v1124 = vmul.f32 %v860, %v1069
  %v1125 = vmul.f32 %v861, %v1069
  %v1126 = vmul.f32 %v862, %v1069
  %v1127 = vmul.f32 %v863, %v1069
  %v1128 = vmul.f32 %v864, %v1069
  %v1129 = vmul.f32 %v865, %v1069
  %v1130 = vmul.f32 %v866, %v1069
  %v1131 = vmul.f32 %v867, %v1069
  %v1132 = vmul.f32 %v868, %v1069
  %v1133 = vmul.f32 %v869, %v1069
  %v1135 = vlaneseq
  %v1136 = vshrl.u32 %v1135, 7
  %v1137 = vsub.s32 0, %v1136
  %v1138 = vrot.slane %v669, %v1137
  %v1140 = vmul.f32 %v1070, %v1138
  %v1141 = vmul.f32 %v1071, %v1138
  %v1142 = vmul.f32 %v1072, %v1138
  %v1143 = vmul.f32 %v1073, %v1138
  %v1144 = vmul.f32 %v1074, %v1138
  %v1145 = vmul.f32 %v1075, %v1138
  %v1146 = vmul.f32 %v1076, %v1138
  %v1147 = vmul.f32 %v1077, %v1138
  %v1148 = vmul.f32 %v1078, %v1138
  %v1149 = vmul.f32 %v1079, %v1138
  %v1150 = vmul.f32 %v1080, %v1138
  %v1151 = vmul.f32 %v1081, %v1138
  %v1152 = vmul.f32 %v1082, %v1138
  %v1153 = vmul.f32 %v1083, %v1138
  %v1154 = vmul.f32 %v1084, %v1138
  %v1155 = vmul.f32 %v1085, %v1138
  %v1156 = vmul.f32 %v1086, %v1138
  %v1157 = vmul.f32 %v1087, %v1138
  %v1158 = vmul.f32 %v1088, %v1138
  %v1159 = vmul.f32 %v1089, %v1138
  %v1160 = vmul.f32 %v1090, %v1138
  %v1161 = vmul.f32 %v1091, %v1138
  %v1162 = vmul.f32 %v1092, %v1138
  %v1163 = vmul.f32 %v1093, %v1138
  %v1164 = vmul.f32 %v1094, %v1138
  %v1165 = vmul.f32 %v1095, %v1138
  %v1166 = vmul.f32 %v1096, %v1138
  %v1167 = vmul.f32 %v1097, %v1138
  %v1168 = vmul.f32 %v1098, %v1138
  %v1169 = vmul.f32 %v1099, %v1138
  %v1170 = vmul.f32 %v1100, %v1138
  %v1171 = vmul.f32 %v1101, %v1138
  %v1172 = vmul.f32 %v1102, %v1138
  %v1173 = vmul.f32 %v1103, %v1138
  %v1174 = vmul.f32 %v1104, %v1138
  %v1175 = vmul.f32 %v1105, %v1138
  %v1176 = vmul.f32 %v1106, %v1138
  %v1177 = vmul.f32 %v1107, %v1138
  %v1178 = vmul.f32 %v1108, %v1138
  %v1179 = vmul.f32 %v1109, %v1138
  %v1180 = vmul.f32 %v1110, %v1138
  %v1181 = vmul.f32 %v1111, %v1138
  %v1182 = vmul.f32 %v1112, %v1138
  %v1183 = vmul.f32 %v1113, %v1138
  %v1184 = vmul.f32 %v1114, %v1138
  %v1185 = vmul.f32 %v1115, %v1138
  %v1186 = vmul.f32 %v1116, %v1138
  %v1187 = vmul.f32 %v1117, %v1138
  %v1188 = vmul.f32 %v1118, %v1138
  %v1189 = vmul.f32 %v1119, %v1138
  %v1190 = vmul.f32 %v1120, %v1138
  %v1191 = vmul.f32 %v1121, %v1138
  %v1192 = vmul.f32 %v1122, %v1138
  %v1193 = vmul.f32 %v1123, %v1138
  %v1194 = vmul.f32 %v1124, %v1138
  %v1195 = vmul.f32 %v1125, %v1138
  %v1196 = vmul.f32 %v1126, %v1138
  %v1197 = vmul.f32 %v1127, %v1138
  %v1198 = vmul.f32 %v1128, %v1138
  %v1199 = vmul.f32 %v1129, %v1138
  %v1200 = vmul.f32 %v1130, %v1138
  %v1201 = vmul.f32 %v1131, %v1138
  %v1202 = vmul.f32 %v1132, %v1138
  %v1203 = vmul.f32 %v1133, %v1138
  %v1205 = vlaneseq
  %v1206 = vshrl.u32 %v1205, 7
  %v1207 = vsub.s32 0, %v1206
  %v1208 = vrot.slane %v670, %v1207
  %v1210 = vadd.f32 %v1140, %v1208
  %v1211 = vadd.f32 %v1141, %v1208
  %v1212 = vadd.f32 %v1142, %v1208
  %v1213 = vadd.f32 %v1143, %v1208
  %v1214 = vadd.f32 %v1144, %v1208
  %v1215 = vadd.f32 %v1145, %v1208
  %v1216 = vadd.f32 %v1146, %v1208
  %v1217 = vadd.f32 %v1147, %v1208
  %v1218 = vadd.f32 %v1148, %v1208
  %v1219 = vadd.f32 %v1149, %v1208
  %v1220 = vadd.f32 %v1150, %v1208
  %v1221 = vadd.f32 %v1151, %v1208
  %v1222 = vadd.f32 %v1152, %v1208
  %v1223 = vadd.f32 %v1153, %v1208
  %v1224 = vadd.f32 %v1154, %v1208
  %v1225 = vadd.f32 %v1155, %v1208
  %v1226 = vadd.f32 %v1156, %v1208
  %v1227 = vadd.f32 %v1157, %v1208
  %v1228 = vadd.f32 %v1158, %v1208
  %v1229 = vadd.f32 %v1159, %v1208
  %v1230 = vadd.f32 %v1160, %v1208
  %v1231 = vadd.f32 %v1161, %v1208
  %v1232 = vadd.f32 %v1162, %v1208
  %v1233 = vadd.f32 %v1163, %v1208
  %v1234 = vadd.f32 %v1164, %v1208
  %v1235 = vadd.f32 %v1165, %v1208
  %v1236 = vadd.f32 %v1166, %v1208
  %v1237 = vadd.f32 %v1167, %v1208
  %v1238 = vadd.f32 %v1168, %v1208
  %v1239 = vadd.f32 %v1169, %v1208
  %v1240 = vadd.f32 %v1170, %v1208
  %v1241 = vadd.f32 %v1171, %v1208
  %v1242 = vadd.f32 %v1172, %v1208
  %v1243 = vadd.f32 %v1173, %v1208
  %v1244 = vadd.f32 %v1174, %v1208
  %v1245 = vadd.f32 %v1175, %v1208
  %v1246 = vadd.f32 %v1176, %v1208
  %v1247 = vadd.f32 %v1177, %v1208
  %v1248 = vadd.f32 %v1178, %v1208
  %v1249 = vadd.f32 %v1179, %v1208
  %v1250 = vadd.f32 %v1180, %v1208
  %v1251 = vadd.f32 %v1181, %v1208
  %v1252 = vadd.f32 %v1182, %v1208
  %v1253 = vadd.f32 %v1183, %v1208
  %v1254 = vadd.f32 %v1184, %v1208
  %v1255 = vadd.f32 %v1185, %v1208
  %v1256 = vadd.f32 %v1186, %v1208
  %v1257 = vadd.f32 %v1187, %v1208
  %v1258 = vadd.f32 %v1188, %v1208
  %v1259 = vadd.f32 %v1189, %v1208
  %v1260 = vadd.f32 %v1190, %v1208
  %v1261 = vadd.f32 %v1191, %v1208
  %v1262 = vadd.f32 %v1192, %v1208
  %v1263 = vadd.f32 %v1193, %v1208
  %v1264 = vadd.f32 %v1194, %v1208
  %v1265 = vadd.f32 %v1195, %v1208
  %v1266 = vadd.f32 %v1196, %v1208
  %v1267 = vadd.f32 %v1197, %v1208
  %v1268 = vadd.f32 %v1198, %v1208
  %v1269 = vadd.f32 %v1199, %v1208
  %v1270 = vadd.f32 %v1200, %v1208
  %v1271 = vadd.f32 %v1201, %v1208
  %v1272 = vadd.f32 %v1202, %v1208
  %v1273 = vadd.f32 %v1203, %v1208
  %vm1274 = vcmp.gt.f32.partialorder %v1210, 0.0
  %vm1275 = vcmp.gt.f32.partialorder %v1211, 0.0
  %vm1276 = vcmp.gt.f32.partialorder %v1212, 0.0
  %vm1277 = vcmp.gt.f32.partialorder %v1213, 0.0
  %vm1278 = vcmp.gt.f32.partialorder %v1214, 0.0
  %vm1279 = vcmp.gt.f32.partialorder %v1215, 0.0
  %vm1280 = vcmp.gt.f32.partialorder %v1216, 0.0
  %vm1281 = vcmp.gt.f32.partialorder %v1217, 0.0
  %vm1282 = vcmp.gt.f32.partialorder %v1218, 0.0
  %vm1283 = vcmp.gt.f32.partialorder %v1219, 0.0
  %vm1284 = vcmp.gt.f32.partialorder %v1220, 0.0
  %vm1285 = vcmp.gt.f32.partialorder %v1221, 0.0
  %vm1286 = vcmp.gt.f32.partialorder %v1222, 0.0
  %vm1287 = vcmp.gt.f32.partialorder %v1223, 0.0
  %vm1288 = vcmp.gt.f32.partialorder %v1224, 0.0
  %vm1289 = vcmp.gt.f32.partialorder %v1225, 0.0
  %vm1290 = vcmp.gt.f32.partialorder %v1226, 0.0
  %vm1291 = vcmp.gt.f32.partialorder %v1227, 0.0
  %vm1292 = vcmp.gt.f32.partialorder %v1228, 0.0
  %vm1293 = vcmp.gt.f32.partialorder %v1229, 0.0
  %vm1294 = vcmp.gt.f32.partialorder %v1230, 0.0
  %vm1295 = vcmp.gt.f32.partialorder %v1231, 0.0
  %vm1296 = vcmp.gt.f32.partialorder %v1232, 0.0
  %vm1297 = vcmp.gt.f32.partialorder %v1233, 0.0
  %vm1298 = vcmp.gt.f32.partialorder %v1234, 0.0
  %vm1299 = vcmp.gt.f32.partialorder %v1235, 0.0
  %vm1300 = vcmp.gt.f32.partialorder %v1236, 0.0
  %vm1301 = vcmp.gt.f32.partialorder %v1237, 0.0
  %vm1302 = vcmp.gt.f32.partialorder %v1238, 0.0
  %vm1303 = vcmp.gt.f32.partialorder %v1239, 0.0
  %vm1304 = vcmp.gt.f32.partialorder %v1240, 0.0
  %vm1305 = vcmp.gt.f32.partialorder %v1241, 0.0
  %vm1306 = vcmp.gt.f32.partialorder %v1242, 0.0
  %vm1307 = vcmp.gt.f32.partialorder %v1243, 0.0
  %vm1308 = vcmp.gt.f32.partialorder %v1244, 0.0
  %vm1309 = vcmp.gt.f32.partialorder %v1245, 0.0
  %vm1310 = vcmp.gt.f32.partialorder %v1246, 0.0
  %vm1311 = vcmp.gt.f32.partialorder %v1247, 0.0
  %vm1312 = vcmp.gt.f32.partialorder %v1248, 0.0
  %vm1313 = vcmp.gt.f32.partialorder %v1249, 0.0
  %vm1314 = vcmp.gt.f32.partialorder %v1250, 0.0
  %vm1315 = vcmp.gt.f32.partialorder %v1251, 0.0
  %vm1316 = vcmp.gt.f32.partialorder %v1252, 0.0
  %vm1317 = vcmp.gt.f32.partialorder %v1253, 0.0
  %vm1318 = vcmp.gt.f32.partialorder %v1254, 0.0
  %vm1319 = vcmp.gt.f32.partialorder %v1255, 0.0
  %vm1320 = vcmp.gt.f32.partialorder %v1256, 0.0
  %vm1321 = vcmp.gt.f32.partialorder %v1257, 0.0
  %vm1322 = vcmp.gt.f32.partialorder %v1258, 0.0
  %vm1323 = vcmp.gt.f32.partialorder %v1259, 0.0
  %vm1324 = vcmp.gt.f32.partialorder %v1260, 0.0
  %vm1325 = vcmp.gt.f32.partialorder %v1261, 0.0
  %vm1326 = vcmp.gt.f32.partialorder %v1262, 0.0
  %vm1327 = vcmp.gt.f32.partialorder %v1263, 0.0
  %vm1328 = vcmp.gt.f32.partialorder %v1264, 0.0
  %vm1329 = vcmp.gt.f32.partialorder %v1265, 0.0
  %vm1330 = vcmp.gt.f32.partialorder %v1266, 0.0
  %vm1331 = vcmp.gt.f32.partialorder %v1267, 0.0
  %vm1332 = vcmp.gt.f32.partialorder %v1268, 0.0
  %vm1333 = vcmp.gt.f32.partialorder %v1269, 0.0
  %vm1334 = vcmp.gt.f32.partialorder %v1270, 0.0
  %vm1335 = vcmp.gt.f32.partialorder %v1271, 0.0
  %vm1336 = vcmp.gt.f32.partialorder %v1272, 0.0
  %vm1337 = vcmp.gt.f32.partialorder %v1273, 0.0
  %v1338 = vmin.f32 %v1210, 0.0
  %v1339 = vmin.f32 %v1211, 0.0
  %v1340 = vmin.f32 %v1212, 0.0
  %v1341 = vmin.f32 %v1213, 0.0
  %v1342 = vmin.f32 %v1214, 0.0
  %v1343 = vmin.f32 %v1215, 0.0
  %v1344 = vmin.f32 %v1216, 0.0
  %v1345 = vmin.f32 %v1217, 0.0
  %v1346 = vmin.f32 %v1218, 0.0
  %v1347 = vmin.f32 %v1219, 0.0
  %v1348 = vmin.f32 %v1220, 0.0
  %v1349 = vmin.f32 %v1221, 0.0
  %v1350 = vmin.f32 %v1222, 0.0
  %v1351 = vmin.f32 %v1223, 0.0
  %v1352 = vmin.f32 %v1224, 0.0
  %v1353 = vmin.f32 %v1225, 0.0
  %v1354 = vmin.f32 %v1226, 0.0
  %v1355 = vmin.f32 %v1227, 0.0
  %v1356 = vmin.f32 %v1228, 0.0
  %v1357 = vmin.f32 %v1229, 0.0
  %v1358 = vmin.f32 %v1230, 0.0
  %v1359 = vmin.f32 %v1231, 0.0
  %v1360 = vmin.f32 %v1232, 0.0
  %v1361 = vmin.f32 %v1233, 0.0
  %v1362 = vmin.f32 %v1234, 0.0
  %v1363 = vmin.f32 %v1235, 0.0
  %v1364 = vmin.f32 %v1236, 0.0
  %v1365 = vmin.f32 %v1237, 0.0
  %v1366 = vmin.f32 %v1238, 0.0
  %v1367 = vmin.f32 %v1239, 0.0
  %v1368 = vmin.f32 %v1240, 0.0
  %v1369 = vmin.f32 %v1241, 0.0
  %v1370 = vmin.f32 %v1242, 0.0
  %v1371 = vmin.f32 %v1243, 0.0
  %v1372 = vmin.f32 %v1244, 0.0
  %v1373 = vmin.f32 %v1245, 0.0
  %v1374 = vmin.f32 %v1246, 0.0
  %v1375 = vmin.f32 %v1247, 0.0
  %v1376 = vmin.f32 %v1248, 0.0
  %v1377 = vmin.f32 %v1249, 0.0
  %v1378 = vmin.f32 %v1250, 0.0
  %v1379 = vmin.f32 %v1251, 0.0
  %v1380 = vmin.f32 %v1252, 0.0
  %v1381 = vmin.f32 %v1253, 0.0
  %v1382 = vmin.f32 %v1254, 0.0
  %v1383 = vmin.f32 %v1255, 0.0
  %v1384 = vmin.f32 %v1256, 0.0
  %v1385 = vmin.f32 %v1257, 0.0
  %v1386 = vmin.f32 %v1258, 0.0
  %v1387 = vmin.f32 %v1259, 0.0
  %v1388 = vmin.f32 %v1260, 0.0
  %v1389 = vmin.f32 %v1261, 0.0
  %v1390 = vmin.f32 %v1262, 0.0
  %v1391 = vmin.f32 %v1263, 0.0
  %v1392 = vmin.f32 %v1264, 0.0
  %v1393 = vmin.f32 %v1265, 0.0
  %v1394 = vmin.f32 %v1266, 0.0
  %v1395 = vmin.f32 %v1267, 0.0
  %v1396 = vmin.f32 %v1268, 0.0
  %v1397 = vmin.f32 %v1269, 0.0
  %v1398 = vmin.f32 %v1270, 0.0
  %v1399 = vmin.f32 %v1271, 0.0
  %v1400 = vmin.f32 %v1272, 0.0
  %v1401 = vmin.f32 %v1273, 0.0
  %v1402 = vmul.f32 %v1338, 1.442695
  %v1403 = vpow.pop %v1402
  %v1404 = vmul.f32 %v1339, 1.442695
  %v1405 = vpow.pop %v1404
  %v1406 = vmul.f32 %v1340, 1.442695
  %v1407 = vpow.pop %v1406
  %v1408 = vmul.f32 %v1341, 1.442695
  %v1409 = vpow.pop %v1408
  %v1410 = vmul.f32 %v1342, 1.442695
  %v1411 = vpow.pop %v1410
  %v1412 = vmul.f32 %v1343, 1.442695
  %v1413 = vpow.pop %v1412
  %v1414 = vmul.f32 %v1344, 1.442695
  %v1415 = vpow.pop %v1414
  %v1416 = vmul.f32 %v1345, 1.442695
  %v1417 = vpow.pop %v1416
  %v1418 = vmul.f32 %v1346, 1.442695
  %v1419 = vpow.pop %v1418
  %v1420 = vmul.f32 %v1347, 1.442695
  %v1421 = vpow.pop %v1420
  %v1422 = vmul.f32 %v1348, 1.442695
  %v1423 = vpow.pop %v1422
  %v1424 = vmul.f32 %v1349, 1.442695
  %v1425 = vpow.pop %v1424
  %v1426 = vmul.f32 %v1350, 1.442695
  %v1427 = vpow.pop %v1426
  %v1428 = vmul.f32 %v1351, 1.442695
  %v1429 = vpow.pop %v1428
  %v1430 = vmul.f32 %v1352, 1.442695
  %v1431 = vpow.pop %v1430
  %v1432 = vmul.f32 %v1353, 1.442695
  %v1433 = vpow.pop %v1432
  %v1434 = vmul.f32 %v1354, 1.442695
  %v1435 = vpow.pop %v1434
  %v1436 = vmul.f32 %v1355, 1.442695
  %v1437 = vpow.pop %v1436
  %v1438 = vmul.f32 %v1356, 1.442695
  %v1439 = vpow.pop %v1438
  %v1440 = vmul.f32 %v1357, 1.442695
  %v1441 = vpow.pop %v1440
  %v1442 = vmul.f32 %v1358, 1.442695
  %v1443 = vpow.pop %v1442
  %v1444 = vmul.f32 %v1359, 1.442695
  %v1445 = vpow.pop %v1444
  %v1446 = vmul.f32 %v1360, 1.442695
  %v1447 = vpow.pop %v1446
  %v1448 = vmul.f32 %v1361, 1.442695
  %v1449 = vpow.pop %v1448
  %v1450 = vmul.f32 %v1362, 1.442695
  %v1451 = vpow.pop %v1450
  %v1452 = vmul.f32 %v1363, 1.442695
  %v1453 = vpow.pop %v1452
  %v1454 = vmul.f32 %v1364, 1.442695
  %v1455 = vpow.pop %v1454
  %v1456 = vmul.f32 %v1365, 1.442695
  %v1457 = vpow.pop %v1456
  %v1458 = vmul.f32 %v1366, 1.442695
  %v1459 = vpow.pop %v1458
  %v1460 = vmul.f32 %v1367, 1.442695
  %v1461 = vpow.pop %v1460
  %v1462 = vmul.f32 %v1368, 1.442695
  %v1463 = vpow.pop %v1462
  %v1464 = vmul.f32 %v1369, 1.442695
  %v1465 = vpow.pop %v1464
  %v1466 = vmul.f32 %v1370, 1.442695
  %v1467 = vpow.pop %v1466
  %v1468 = vmul.f32 %v1371, 1.442695
  %v1469 = vpow.pop %v1468
  %v1470 = vmul.f32 %v1372, 1.442695
  %v1471 = vpow.pop %v1470
  %v1472 = vmul.f32 %v1373, 1.442695
  %v1473 = vpow.pop %v1472
  %v1474 = vmul.f32 %v1374, 1.442695
  %v1475 = vpow.pop %v1474
  %v1476 = vmul.f32 %v1375, 1.442695
  %v1477 = vpow.pop %v1476
  %v1478 = vmul.f32 %v1376, 1.442695
  %v1479 = vpow.pop %v1478
  %v1480 = vmul.f32 %v1377, 1.442695
  %v1481 = vpow.pop %v1480
  %v1482 = vmul.f32 %v1378, 1.442695
  %v1483 = vpow.pop %v1482
  %v1484 = vmul.f32 %v1379, 1.442695
  %v1485 = vpow.pop %v1484
  %v1486 = vmul.f32 %v1380, 1.442695
  %v1487 = vpow.pop %v1486
  %v1488 = vmul.f32 %v1381, 1.442695
  %v1489 = vpow.pop %v1488
  %v1490 = vmul.f32 %v1382, 1.442695
  %v1491 = vpow.pop %v1490
  %v1492 = vmul.f32 %v1383, 1.442695
  %v1493 = vpow.pop %v1492
  %v1494 = vmul.f32 %v1384, 1.442695
  %v1495 = vpow.pop %v1494
  %v1496 = vmul.f32 %v1385, 1.442695
  %v1497 = vpow.pop %v1496
  %v1498 = vmul.f32 %v1386, 1.442695
  %v1499 = vpow.pop %v1498
  %v1500 = vmul.f32 %v1387, 1.442695
  %v1501 = vpow.pop %v1500
  %v1502 = vmul.f32 %v1388, 1.442695
  %v1503 = vpow.pop %v1502
  %v1504 = vmul.f32 %v1389, 1.442695
  %v1505 = vpow.pop %v1504
  %v1506 = vmul.f32 %v1390, 1.442695
  %v1507 = vpow.pop %v1506
  %v1508 = vmul.f32 %v1391, 1.442695
  %v1509 = vpow.pop %v1508
  %v1510 = vmul.f32 %v1392, 1.442695
  %v1511 = vpow.pop %v1510
  %v1512 = vmul.f32 %v1393, 1.442695
  %v1513 = vpow.pop %v1512
  %v1514 = vmul.f32 %v1394, 1.442695
  %v1515 = vpow.pop %v1514
  %v1516 = vmul.f32 %v1395, 1.442695
  %v1517 = vpow.pop %v1516
  %v1518 = vmul.f32 %v1396, 1.442695
  %v1519 = vpow.pop %v1518
  %v1520 = vmul.f32 %v1397, 1.442695
  %v1521 = vpow.pop %v1520
  %v1522 = vmul.f32 %v1398, 1.442695
  %v1523 = vpow.pop %v1522
  %v1524 = vmul.f32 %v1399, 1.442695
  %v1525 = vpow.pop %v1524
  %v1526 = vmul.f32 %v1400, 1.442695
  %v1527 = vpow.pop %v1526
  %v1528 = vmul.f32 %v1401, 1.442695
  %v1529 = vpow.pop %v1528
  %v1530 = vsub.f32 %v1403, 1.0
  %v1531 = vsub.f32 %v1405, 1.0
  %v1532 = vsub.f32 %v1407, 1.0
  %v1533 = vsub.f32 %v1409, 1.0
  %v1534 = vsub.f32 %v1411, 1.0
  %v1535 = vsub.f32 %v1413, 1.0
  %v1536 = vsub.f32 %v1415, 1.0
  %v1537 = vsub.f32 %v1417, 1.0
  %v1538 = vsub.f32 %v1419, 1.0
  %v1539 = vsub.f32 %v1421, 1.0
  %v1540 = vsub.f32 %v1423, 1.0
  %v1541 = vsub.f32 %v1425, 1.0
  %v1542 = vsub.f32 %v1427, 1.0
  %v1543 = vsub.f32 %v1429, 1.0
  %v1544 = vsub.f32 %v1431, 1.0
  %v1545 = vsub.f32 %v1433, 1.0
  %v1546 = vsub.f32 %v1435, 1.0
  %v1547 = vsub.f32 %v1437, 1.0
  %v1548 = vsub.f32 %v1439, 1.0
  %v1549 = vsub.f32 %v1441, 1.0
  %v1550 = vsub.f32 %v1443, 1.0
  %v1551 = vsub.f32 %v1445, 1.0
  %v1552 = vsub.f32 %v1447, 1.0
  %v1553 = vsub.f32 %v1449, 1.0
  %v1554 = vsub.f32 %v1451, 1.0
  %v1555 = vsub.f32 %v1453, 1.0
  %v1556 = vsub.f32 %v1455, 1.0
  %v1557 = vsub.f32 %v1457, 1.0
  %v1558 = vsub.f32 %v1459, 1.0
  %v1559 = vsub.f32 %v1461, 1.0
  %v1560 = vsub.f32 %v1463, 1.0
  %v1561 = vsub.f32 %v1465, 1.0
  %v1562 = vsub.f32 %v1467, 1.0
  %v1563 = vsub.f32 %v1469, 1.0
  %v1564 = vsub.f32 %v1471, 1.0
  %v1565 = vsub.f32 %v1473, 1.0
  %v1566 = vsub.f32 %v1475, 1.0
  %v1567 = vsub.f32 %v1477, 1.0
  %v1568 = vsub.f32 %v1479, 1.0
  %v1569 = vsub.f32 %v1481, 1.0
  %v1570 = vsub.f32 %v1483, 1.0
  %v1571 = vsub.f32 %v1485, 1.0
  %v1572 = vsub.f32 %v1487, 1.0
  %v1573 = vsub.f32 %v1489, 1.0
  %v1574 = vsub.f32 %v1491, 1.0
  %v1575 = vsub.f32 %v1493, 1.0
  %v1576 = vsub.f32 %v1495, 1.0
  %v1577 = vsub.f32 %v1497, 1.0
  %v1578 = vsub.f32 %v1499, 1.0
  %v1579 = vsub.f32 %v1501, 1.0
  %v1580 = vsub.f32 %v1503, 1.0
  %v1581 = vsub.f32 %v1505, 1.0
  %v1582 = vsub.f32 %v1507, 1.0
  %v1583 = vsub.f32 %v1509, 1.0
  %v1584 = vsub.f32 %v1511, 1.0
  %v1585 = vsub.f32 %v1513, 1.0
  %v1586 = vsub.f32 %v1515, 1.0
  %v1587 = vsub.f32 %v1517, 1.0
  %v1588 = vsub.f32 %v1519, 1.0
  %v1589 = vsub.f32 %v1521, 1.0
  %v1590 = vsub.f32 %v1523, 1.0
  %v1591 = vsub.f32 %v1525, 1.0
  %v1592 = vsub.f32 %v1527, 1.0
  %v1593 = vsub.f32 %v1529, 1.0
  %v1594 = vsel %vm1274, %v1210, %v1530
  %v1595 = vsel %vm1275, %v1211, %v1531
  %v1596 = vsel %vm1276, %v1212, %v1532
  %v1597 = vsel %vm1277, %v1213, %v1533
  %v1598 = vsel %vm1278, %v1214, %v1534
  %v1599 = vsel %vm1279, %v1215, %v1535
  %v1600 = vsel %vm1280, %v1216, %v1536
  %v1601 = vsel %vm1281, %v1217, %v1537
  %v1602 = vsel %vm1282, %v1218, %v1538
  %v1603 = vsel %vm1283, %v1219, %v1539
  %v1604 = vsel %vm1284, %v1220, %v1540
  %v1605 = vsel %vm1285, %v1221, %v1541
  %v1606 = vsel %vm1286, %v1222, %v1542
  %v1607 = vsel %vm1287, %v1223, %v1543
  %v1608 = vsel %vm1288, %v1224, %v1544
  %v1609 = vsel %vm1289, %v1225, %v1545
  %v1610 = vsel %vm1290, %v1226, %v1546
  %v1611 = vsel %vm1291, %v1227, %v1547
  %v1612 = vsel %vm1292, %v1228, %v1548
  %v1613 = vsel %vm1293, %v1229, %v1549
  %v1614 = vsel %vm1294, %v1230, %v1550
  %v1615 = vsel %vm1295, %v1231, %v1551
  %v1616 = vsel %vm1296, %v1232, %v1552
  %v1617 = vsel %vm1297, %v1233, %v1553
  %v1618 = vsel %vm1298, %v1234, %v1554
  %v1619 = vsel %vm1299, %v1235, %v1555
  %v1620 = vsel %vm1300, %v1236, %v1556
  %v1621 = vsel %vm1301, %v1237, %v1557
  %v1622 = vsel %vm1302, %v1238, %v1558
  %v1623 = vsel %vm1303, %v1239, %v1559
  %v1624 = vsel %vm1304, %v1240, %v1560
  %v1625 = vsel %vm1305, %v1241, %v1561
  %v1626 = vsel %vm1306, %v1242, %v1562
  %v1627 = vsel %vm1307, %v1243, %v1563
  %v1628 = vsel %vm1308, %v1244, %v1564
  %v1629 = vsel %vm1309, %v1245, %v1565
  %v1630 = vsel %vm1310, %v1246, %v1566
  %v1631 = vsel %vm1311, %v1247, %v1567
  %v1632 = vsel %vm1312, %v1248, %v1568
  %v1633 = vsel %vm1313, %v1249, %v1569
  %v1634 = vsel %vm1314, %v1250, %v1570
  %v1635 = vsel %vm1315, %v1251, %v1571
  %v1636 = vsel %vm1316, %v1252, %v1572
  %v1637 = vsel %vm1317, %v1253, %v1573
  %v1638 = vsel %vm1318, %v1254, %v1574
  %v1639 = vsel %vm1319, %v1255, %v1575
  %v1640 = vsel %vm1320, %v1256, %v1576
  %v1641 = vsel %vm1321, %v1257, %v1577
  %v1642 = vsel %vm1322, %v1258, %v1578
  %v1643 = vsel %vm1323, %v1259, %v1579
  %v1644 = vsel %vm1324, %v1260, %v1580
  %v1645 = vsel %vm1325, %v1261, %v1581
  %v1646 = vsel %vm1326, %v1262, %v1582
  %v1647 = vsel %vm1327, %v1263, %v1583
  %v1648 = vsel %vm1328, %v1264, %v1584
  %v1649 = vsel %vm1329, %v1265, %v1585
  %v1650 = vsel %vm1330, %v1266, %v1586
  %v1651 = vsel %vm1331, %v1267, %v1587
  %v1652 = vsel %vm1332, %v1268, %v1588
  %v1653 = vsel %vm1333, %v1269, %v1589
  %v1654 = vsel %vm1334, %v1270, %v1590
  %v1655 = vsel %vm1335, %v1271, %v1591
  %v1656 = vsel %vm1336, %v1272, %v1592
  %v1657 = vsel %vm1337, %v1273, %v1593
  %vm1690 = vcmask 1040384
  %v1691 = vrot.slane %v1594, 7
  %v1692 = vrot.slane %v1595, 7
  %v1693 = vsel %vm1690, %v1691, %v1692
  %v1694 = vrot.slane %v1598, 7
  %v1695 = vrot.slane %v1599, 7
  %v1696 = vsel %vm1690, %v1694, %v1695
  %v1697 = vrot.slane %v1602, 7
  %v1698 = vrot.slane %v1603, 7
  %v1699 = vsel %vm1690, %v1697, %v1698
  %v1700 = vrot.slane %v1606, 7
  %v1701 = vrot.slane %v1607, 7
  %v1702 = vsel %vm1690, %v1700, %v1701
  %v1703 = vrot.slane %v1610, 7
  %v1704 = vrot.slane %v1611, 7
  %v1705 = vsel %vm1690, %v1703, %v1704
  %v1706 = vrot.slane %v1614, 7
  %v1707 = vrot.slane %v1615, 7
  %v1708 = vsel %vm1690, %v1706, %v1707
  %v1709 = vrot.slane %v1618, 7
  %v1710 = vrot.slane %v1619, 7
  %v1711 = vsel %vm1690, %v1709, %v1710
  %v1712 = vrot.slane %v1622, 7
  %v1713 = vrot.slane %v1623, 7
  %v1714 = vsel %vm1690, %v1712, %v1713
  %v1715 = vrot.slane %v1626, 7
  %v1716 = vrot.slane %v1627, 7
  %v1717 = vsel %vm1690, %v1715, %v1716
  %v1718 = vrot.slane %v1630, 7
  %v1719 = vrot.slane %v1631, 7
  %v1720 = vsel %vm1690, %v1718, %v1719
  %v1721 = vrot.slane %v1634, 7
  %v1722 = vrot.slane %v1635, 7
  %v1723 = vsel %vm1690, %v1721, %v1722
  %v1724 = vrot.slane %v1638, 7
  %v1725 = vrot.slane %v1639, 7
  %v1726 = vsel %vm1690, %v1724, %v1725
  %v1727 = vrot.slane %v1642, 7
  %v1728 = vrot.slane %v1643, 7
  %v1729 = vsel %vm1690, %v1727, %v1728
  %v1730 = vrot.slane %v1646, 7
  %v1731 = vrot.slane %v1647, 7
  %v1732 = vsel %vm1690, %v1730, %v1731
  %v1733 = vrot.slane %v1650, 7
  %v1734 = vrot.slane %v1651, 7
  %v1735 = vsel %vm1690, %v1733, %v1734
  %v1736 = vrot.slane %v1654, 7
  %v1737 = vrot.slane %v1655, 7
  %v1738 = vsel %vm1690, %v1736, %v1737
  %v1787 = vsel %vm1690, 0.0, %v1691
  %v1788 = vsel %vm1690, 0.0, %v1694
  %v1789 = vsel %vm1690, 0.0, %v1697
  %v1790 = vsel %vm1690, 0.0, %v1700
  %v1791 = vsel %vm1690, 0.0, %v1703
  %v1792 = vsel %vm1690, 0.0, %v1706
  %v1793 = vsel %vm1690, 0.0, %v1709
  %v1794 = vsel %vm1690, 0.0, %v1712
  %v1795 = vsel %vm1690, 0.0, %v1715
  %v1796 = vsel %vm1690, 0.0, %v1718
  %v1797 = vsel %vm1690, 0.0, %v1721
  %v1798 = vsel %vm1690, 0.0, %v1724
  %v1799 = vsel %vm1690, 0.0, %v1727
  %v1800 = vsel %vm1690, 0.0, %v1730
  %v1801 = vsel %vm1690, 0.0, %v1733
  %v1802 = vsel %vm1690, 0.0, %v1736
  %v1803 = vsel %vm1690, %v1692, 0.0
  %v1804 = vsel %vm1690, %v1695, 0.0
  %v1805 = vsel %vm1690, %v1698, 0.0
  %v1806 = vsel %vm1690, %v1701, 0.0
  %v1807 = vsel %vm1690, %v1704, 0.0
  %v1808 = vsel %vm1690, %v1707, 0.0
  %v1809 = vsel %vm1690, %v1710, 0.0
  %v1810 = vsel %vm1690, %v1713, 0.0
  %v1811 = vsel %vm1690, %v1716, 0.0
  %v1812 = vsel %vm1690, %v1719, 0.0
  %v1813 = vsel %vm1690, %v1722, 0.0
  %v1814 = vsel %vm1690, %v1725, 0.0
  %v1815 = vsel %vm1690, %v1728, 0.0
  %v1816 = vsel %vm1690, %v1731, 0.0
  %v1817 = vsel %vm1690, %v1734, 0.0
  %v1818 = vsel %vm1690, %v1737, 0.0
  %v1851 = vrot.slane %v1596, 7
  %v1852 = vrot.slane %v1597, 7
  %v1853 = vsel %vm1690, %v1851, %v1852
  %v1854 = vrot.slane %v1600, 7
  %v1855 = vrot.slane %v1601, 7
  %v1856 = vsel %vm1690, %v1854, %v1855
  %v1857 = vrot.slane %v1604, 7
  %v1858 = vrot.slane %v1605, 7
  %v1859 = vsel %vm1690, %v1857, %v1858
  %v1860 = vrot.slane %v1608, 7
  %v1861 = vrot.slane %v1609, 7
  %v1862 = vsel %vm1690, %v1860, %v1861
  %v1863 = vrot.slane %v1612, 7
  %v1864 = vrot.slane %v1613, 7
  %v1865 = vsel %vm1690, %v1863, %v1864
  %v1866 = vrot.slane %v1616, 7
  %v1867 = vrot.slane %v1617, 7
  %v1868 = vsel %vm1690, %v1866, %v1867
  %v1869 = vrot.slane %v1620, 7
  %v1870 = vrot.slane %v1621, 7
  %v1871 = vsel %vm1690, %v1869, %v1870
  %v1872 = vrot.slane %v1624, 7
  %v1873 = vrot.slane %v1625, 7
  %v1874 = vsel %vm1690, %v1872, %v1873
  %v1875 = vrot.slane %v1628, 7
  %v1876 = vrot.slane %v1629, 7
  %v1877 = vsel %vm1690, %v1875, %v1876
  %v1878 = vrot.slane %v1632, 7
  %v1879 = vrot.slane %v1633, 7
  %v1880 = vsel %vm1690, %v1878, %v1879
  %v1881 = vrot.slane %v1636, 7
  %v1882 = vrot.slane %v1637, 7
  %v1883 = vsel %vm1690, %v1881, %v1882
  %v1884 = vrot.slane %v1640, 7
  %v1885 = vrot.slane %v1641, 7
  %v1886 = vsel %vm1690, %v1884, %v1885
  %v1887 = vrot.slane %v1644, 7
  %v1888 = vrot.slane %v1645, 7
  %v1889 = vsel %vm1690, %v1887, %v1888
  %v1890 = vrot.slane %v1648, 7
  %v1891 = vrot.slane %v1649, 7
  %v1892 = vsel %vm1690, %v1890, %v1891
  %v1893 = vrot.slane %v1652, 7
  %v1894 = vrot.slane %v1653, 7
  %v1895 = vsel %vm1690, %v1893, %v1894
  %v1896 = vrot.slane %v1656, 7
  %v1897 = vrot.slane %v1657, 7
  %v1898 = vsel %vm1690, %v1896, %v1897
  %v1947 = vsel %vm1690, 0.0, %v1851
  %v1948 = vsel %vm1690, 0.0, %v1854
  %v1949 = vsel %vm1690, 0.0, %v1857
  %v1950 = vsel %vm1690, 0.0, %v1860
  %v1951 = vsel %vm1690, 0.0, %v1863
  %v1952 = vsel %vm1690, 0.0, %v1866
  %v1953 = vsel %vm1690, 0.0, %v1869
  %v1954 = vsel %vm1690, 0.0, %v1872
  %v1955 = vsel %vm1690, 0.0, %v1875
  %v1956 = vsel %vm1690, 0.0, %v1878
  %v1957 = vsel %vm1690, 0.0, %v1881
  %v1958 = vsel %vm1690, 0.0, %v1884
  %v1959 = vsel %vm1690, 0.0, %v1887
  %v1960 = vsel %vm1690, 0.0, %v1890
  %v1961 = vsel %vm1690, 0.0, %v1893
  %v1962 = vsel %vm1690, 0.0, %v1896
  %v1963 = vsel %vm1690, %v1852, 0.0
  %v1964 = vsel %vm1690, %v1855, 0.0
  %v1965 = vsel %vm1690, %v1858, 0.0
  %v1966 = vsel %vm1690, %v1861, 0.0
  %v1967 = vsel %vm1690, %v1864, 0.0
  %v1968 = vsel %vm1690, %v1867, 0.0
  %v1969 = vsel %vm1690, %v1870, 0.0
  %v1970 = vsel %vm1690, %v1873, 0.0
  %v1971 = vsel %vm1690, %v1876, 0.0
  %v1972 = vsel %vm1690, %v1879, 0.0
  %v1973 = vsel %vm1690, %v1882, 0.0
  %v1974 = vsel %vm1690, %v1885, 0.0
  %v1975 = vsel %vm1690, %v1888, 0.0
  %v1976 = vsel %vm1690, %v1891, 0.0
  %v1977 = vsel %vm1690, %v1894, 0.0
  %v1978 = vsel %vm1690, %v1897, 0.0
  %1979 = vst.msk [vmem:[#allocation2] sm:$0xff] %vm671, %v1787
  %1980 = vst.msk [vmem:[#allocation2 + $0x8] sm:$0xff] %vm671, %v1693
  %vm1981 = vcmask 254976
  %1982 = vst.msk [vmem:[#allocation2 + $0x10] sm:$0x3] %vm1981, %v1803
  %1983 = vst.msk [vmem:[#allocation2 + $0x18] sm:$0xff] %vm671, %v1788
  %1984 = vst.msk [vmem:[#allocation2 + $0x20] sm:$0xff] %vm671, %v1696
  %1985 = vst.msk [vmem:[#allocation2 + $0x28] sm:$0x3] %vm1981, %v1804
  %1986 = vst.msk [vmem:[#allocation2 + $0x30] sm:$0xff] %vm671, %v1789
  %1987 = vst.msk [vmem:[#allocation2 + $0x38] sm:$0xff] %vm671, %v1699
  %1988 = vst.msk [vmem:[#allocation2 + $0x40] sm:$0x3] %vm1981, %v1805
  %1989 = vst.msk [vmem:[#allocation2 + $0x48] sm:$0xff] %vm671, %v1790
  %1990 = vst.msk [vmem:[#allocation2 + $0x50] sm:$0xff] %vm671, %v1702
  %1991 = vst.msk [vmem:[#allocation2 + $0x58] sm:$0x3] %vm1981, %v1806
  %1992 = vst.msk [vmem:[#allocation2 + $0x60] sm:$0xff] %vm671, %v1791
  %1993 = vst.msk [vmem:[#allocation2 + $0x68] sm:$0xff] %vm671, %v1705
  %1994 = vst.msk [vmem:[#allocation2 + $0x70] sm:$0x3] %vm1981, %v1807
  %1995 = vst.msk [vmem:[#allocation2 + $0x78] sm:$0xff] %vm671, %v1792
  %1996 = vst.msk [vmem:[#allocation2 + $0x80] sm:$0xff] %vm671, %v1708
  %1997 = vst.msk [vmem:[#allocation2 + $0x88] sm:$0x3] %vm1981, %v1808
  %1998 = vst.msk [vmem:[#allocation2 + $0x90] sm:$0xff] %vm671, %v1793
  %1999 = vst.msk [vmem:[#allocation2 + $0x98] sm:$0xff] %vm671, %v1711
  %2000 = vst.msk [vmem:[#allocation2 + $0xa0] sm:$0x3] %vm1981, %v1809
  %2001 = vst.msk [vmem:[#allocation2 + $0xa8] sm:$0xff] %vm671, %v1794
  %2002 = vst.msk [vmem:[#allocation2 + $0xb0] sm:$0xff] %vm671, %v1714
  %2003 = vst.msk [vmem:[#allocation2 + $0xb8] sm:$0x3] %vm1981, %v1810
  %2004 = vst.msk [vmem:[#allocation2 + $0xc0] sm:$0xff] %vm671, 0.0
  %2005 = vst.msk [vmem:[#allocation2 + $0xc8] sm:$0xff] %vm671, 0.0
  %2006 = vst.msk [vmem:[#allocation2 + $0xd0] sm:$0x3] %vm1981, 0.0
  %2007 = vst.msk [vmem:[#allocation2 + $0xd8] sm:$0xff] %vm671, %v1947
  %2008 = vst.msk [vmem:[#allocation2 + $0xe0] sm:$0xff] %vm671, %v1853
  %2009 = vst.msk [vmem:[#allocation2 + $0xe8] sm:$0x3] %vm1981, %v1963
  %2010 = vst.msk [vmem:[#allocation2 + $0xf0] sm:$0xff] %vm671, %v1948
  %2011 = vst.msk [vmem:[#allocation2 + $0xf8] sm:$0xff] %vm671, %v1856
  %2012 = vst.msk [vmem:[#allocation2 + $0x100] sm:$0x3] %vm1981, %v1964
  %2013 = vst.msk [vmem:[#allocation2 + $0x108] sm:$0xff] %vm671, %v1949
  %2014 = vst.msk [vmem:[#allocation2 + $0x110] sm:$0xff] %vm671, %v1859
  %2015 = vst.msk [vmem:[#allocation2 + $0x118] sm:$0x3] %vm1981, %v1965
  %2016 = vst.msk [vmem:[#allocation2 + $0x120] sm:$0xff] %vm671, %v1950
  %2017 = vst.msk [vmem:[#allocation2 + $0x128] sm:$0xff] %vm671, %v1862
  %2018 = vst.msk [vmem:[#allocation2 + $0x130] sm:$0x3] %vm1981, %v1966
  %2019 = vst.msk [vmem:[#allocation2 + $0x138] sm:$0xff] %vm671, %v1951
  %2020 = vst.msk [vmem:[#allocation2 + $0x140] sm:$0xff] %vm671, %v1865
  %2021 = vst.msk [vmem:[#allocation2 + $0x148] sm:$0x3] %vm1981, %v1967
  %2022 = vst.msk [vmem:[#allocation2 + $0x150] sm:$0xff] %vm671, %v1952
  %2023 = vst.msk [vmem:[#allocation2 + $0x158] sm:$0xff] %vm671, %v1868
  %2024 = vst.msk [vmem:[#allocation2 + $0x160] sm:$0x3] %vm1981, %v1968
  %2025 = vst.msk [vmem:[#allocation2 + $0x168] sm:$0xff] %vm671, %v1953
  %2026 = vst.msk [vmem:[#allocation2 + $0x170] sm:$0xff] %vm671, %v1871
  %2027 = vst.msk [vmem:[#allocation2 + $0x178] sm:$0x3] %vm1981, %v1969
  %2028 = vst.msk [vmem:[#allocation2 + $0x180] sm:$0xff] %vm671, %v1954
  %2029 = vst.msk [vmem:[#allocation2 + $0x188] sm:$0xff] %vm671, %v1874
  %2030 = vst.msk [vmem:[#allocation2 + $0x190] sm:$0x3] %vm1981, %v1970
  %2031 = vst.msk [vmem:[#allocation2 + $0x198] sm:$0xff] %vm671, %v1795
  %2032 = vst.msk [vmem:[#allocation2 + $0x1a0] sm:$0xff] %vm671, %v1717
  %2033 = vst.msk [vmem:[#allocation2 + $0x1a8] sm:$0x3] %vm1981, %v1811
  %2034 = vst.msk [vmem:[#allocation2 + $0x1b0] sm:$0xff] %vm671, %v1796
  %2035 = vst.msk [vmem:[#allocation2 + $0x1b8] sm:$0xff] %vm671, %v1720
  %2036 = vst.msk [vmem:[#allocation2 + $0x1c0] sm:$0x3] %vm1981, %v1812
  %2037 = vst.msk [vmem:[#allocation2 + $0x1c8] sm:$0xff] %vm671, %v1797
  %2038 = vst.msk [vmem:[#allocation2 + $0x1d0] sm:$0xff] %vm671, %v1723
  %2039 = vst.msk [vmem:[#allocation2 + $0x1d8] sm:$0x3] %vm1981, %v1813
  %2040 = vst.msk [vmem:[#allocation2 + $0x1e0] sm:$0xff] %vm671, %v1798
  %2041 = vst.msk [vmem:[#allocation2 + $0x1e8] sm:$0xff] %vm671, %v1726
  %2042 = vst.msk [vmem:[#allocation2 + $0x1f0] sm:$0x3] %vm1981, %v1814
  %2043 = vst.msk [vmem:[#allocation2 + $0x1f8] sm:$0xff] %vm671, %v1799
  %2044 = vst.msk [vmem:[#allocation2 + $0x200] sm:$0xff] %vm671, %v1729
  %2045 = vst.msk [vmem:[#allocation2 + $0x208] sm:$0x3] %vm1981, %v1815
  %2046 = vst.msk [vmem:[#allocation2 + $0x210] sm:$0xff] %vm671, %v1800
  %2047 = vst.msk [vmem:[#allocation2 + $0x218] sm:$0xff] %vm671, %v1732
  %2048 = vst.msk [vmem:[#allocation2 + $0x220] sm:$0x3] %vm1981, %v1816
  %2049 = vst.msk [vmem:[#allocation2 + $0x228] sm:$0xff] %vm671, %v1801
  %2050 = vst.msk [vmem:[#allocation2 + $0x230] sm:$0xff] %vm671, %v1735
  %2051 = vst.msk [vmem:[#allocation2 + $0x238] sm:$0x3] %vm1981, %v1817
  %2052 = vst.msk [vmem:[#allocation2 + $0x240] sm:$0xff] %vm671, %v1802
  %2053 = vst.msk [vmem:[#allocation2 + $0x248] sm:$0xff] %vm671, %v1738
  %2054 = vst.msk [vmem:[#allocation2 + $0x250] sm:$0x3] %vm1981, %v1818
  %2055 = vst.msk [vmem:[#allocation2 + $0x258] sm:$0xff] %vm671, 0.0
  %2056 = vst.msk [vmem:[#allocation2 + $0x260] sm:$0xff] %vm671, 0.0
  %2057 = vst.msk [vmem:[#allocation2 + $0x268] sm:$0x3] %vm1981, 0.0
  %2058 = vst.msk [vmem:[#allocation2 + $0x270] sm:$0xff] %vm671, %v1955
  %2059 = vst.msk [vmem:[#allocation2 + $0x278] sm:$0xff] %vm671, %v1877
  %2060 = vst.msk [vmem:[#allocation2 + $0x280] sm:$0x3] %vm1981, %v1971
  %2061 = vst.msk [vmem:[#allocation2 + $0x288] sm:$0xff] %vm671, %v1956
  %2062 = vst.msk [vmem:[#allocation2 + $0x290] sm:$0xff] %vm671, %v1880
  %2063 = vst.msk [vmem:[#allocation2 + $0x298] sm:$0x3] %vm1981, %v1972
  %2064 = vst.msk [vmem:[#allocation2 + $0x2a0] sm:$0xff] %vm671, %v1957
  %2065 = vst.msk [vmem:[#allocation2 + $0x2a8] sm:$0xff] %vm671, %v1883
  %2066 = vst.msk [vmem:[#allocation2 + $0x2b0] sm:$0x3] %vm1981, %v1973
  %2067 = vst.msk [vmem:[#allocation2 + $0x2b8] sm:$0xff] %vm671, %v1958
  %2068 = vst.msk [vmem:[#allocation2 + $0x2c0] sm:$0xff] %vm671, %v1886
  %2069 = vst.msk [vmem:[#allocation2 + $0x2c8] sm:$0x3] %vm1981, %v1974
  %2070 = vst.msk [vmem:[#allocation2 + $0x2d0] sm:$0xff] %vm671, %v1959
  %2071 = vst.msk [vmem:[#allocation2 + $0x2d8] sm:$0xff] %vm671, %v1889
  %2072 = vst.msk [vmem:[#allocation2 + $0x2e0] sm:$0x3] %vm1981, %v1975
  %2073 = vst.msk [vmem:[#allocation2 + $0x2e8] sm:$0xff] %vm671, %v1960
  %2074 = vst.msk [vmem:[#allocation2 + $0x2f0] sm:$0xff] %vm671, %v1892
  %2075 = vst.msk [vmem:[#allocation2 + $0x2f8] sm:$0x3] %vm1981, %v1976
  %2076 = vst.msk [vmem:[#allocation2 + $0x300] sm:$0xff] %vm671, %v1961
  %2077 = vst.msk [vmem:[#allocation2 + $0x308] sm:$0xff] %vm671, %v1895
  %2078 = vst.msk [vmem:[#allocation2 + $0x310] sm:$0x3] %vm1981, %v1977
  %2079 = vst.msk [vmem:[#allocation2 + $0x318] sm:$0xff] %vm671, %v1962
  %2080 = vst.msk [vmem:[#allocation2 + $0x320] sm:$0xff] %vm671, %v1898
  %2081 = vst.msk [vmem:[#allocation2 + $0x328] sm:$0x3] %vm1981, %v1978
  %s2082 = scalar_lea.vmem [#allocation2], 192
  %v2083 = vld [vmem:[%s2082] ss:$2 sm:$0xff]
  %s2084 = scalar_lea.vmem %s2082, 24 [#allocation2]
  %v2085 = vld [vmem:[%s2084] ss:$2 sm:$0xff]
  %s2086 = scalar_lea.vmem %s2082, 48 [#allocation2]
  %v2087 = vld [vmem:[%s2086] ss:$2 sm:$0xff]
  %s2088 = scalar_lea.vmem %s2082, 72 [#allocation2]
  %v2089 = vld [vmem:[%s2088] ss:$2 sm:$0xff]
  %s2090 = scalar_lea.vmem %s2082, 96 [#allocation2]
  %v2091 = vld [vmem:[%s2090] ss:$2 sm:$0xff]
  %s2092 = scalar_lea.vmem %s2082, 120 [#allocation2]
  %v2093 = vld [vmem:[%s2092] ss:$2 sm:$0xff]
  %s2094 = scalar_lea.vmem %s2082, 144 [#allocation2]
  %v2095 = vld [vmem:[%s2094] ss:$2 sm:$0xff]
  %s2096 = scalar_lea.vmem %s2082, 168 [#allocation2]
  %v2097 = vld [vmem:[%s2096] ss:$2 sm:$0xff]
  %s2098 = scalar_lea.vmem %s2082, 408 [#allocation2]
  %v2099 = vld [vmem:[%s2098] ss:$2 sm:$0xff]
  %s2100 = scalar_lea.vmem %s2082, 432 [#allocation2]
  %v2101 = vld [vmem:[%s2100] ss:$2 sm:$0xff]
  %s2102 = scalar_lea.vmem %s2082, 456 [#allocation2]
  %v2103 = vld [vmem:[%s2102] ss:$2 sm:$0xff]
  %s2104 = scalar_lea.vmem %s2082, 480 [#allocation2]
  %v2105 = vld [vmem:[%s2104] ss:$2 sm:$0xff]
  %s2106 = scalar_lea.vmem %s2082, 504 [#allocation2]
  %v2107 = vld [vmem:[%s2106] ss:$2 sm:$0xff]
  %s2108 = scalar_lea.vmem %s2082, 528 [#allocation2]
  %v2109 = vld [vmem:[%s2108] ss:$2 sm:$0xff]
  %s2110 = scalar_lea.vmem %s2082, 552 [#allocation2]
  %v2111 = vld [vmem:[%s2110] ss:$2 sm:$0xff]
  %s2112 = scalar_lea.vmem %s2082, 576 [#allocation2]
  %v2113 = vld [vmem:[%s2112] ss:$2 sm:$0xff]
  %s2114 = scalar_lea.vmem %s2082, 1 [#allocation2]
  %v2115 = vld [vmem:[%s2114] ss:$2 sm:$0xff]
  %s2116 = scalar_lea.vmem %s2082, 25 [#allocation2]
  %v2117 = vld [vmem:[%s2116] ss:$2 sm:$0xff]
  %s2118 = scalar_lea.vmem %s2082, 49 [#allocation2]
  %v2119 = vld [vmem:[%s2118] ss:$2 sm:$0xff]
  %s2120 = scalar_lea.vmem %s2082, 73 [#allocation2]
  %v2121 = vld [vmem:[%s2120] ss:$2 sm:$0xff]
  %s2122 = scalar_lea.vmem %s2082, 97 [#allocation2]
  %v2123 = vld [vmem:[%s2122] ss:$2 sm:$0xff]
  %s2124 = scalar_lea.vmem %s2082, 121 [#allocation2]
  %v2125 = vld [vmem:[%s2124] ss:$2 sm:$0xff]
  %s2126 = scalar_lea.vmem %s2082, 145 [#allocation2]
  %v2127 = vld [vmem:[%s2126] ss:$2 sm:$0xff]
  %s2128 = scalar_lea.vmem %s2082, 169 [#allocation2]
  %v2129 = vld [vmem:[%s2128] ss:$2 sm:$0xff]
  %s2130 = scalar_lea.vmem %s2082, 409 [#allocation2]
  %v2131 = vld [vmem:[%s2130] ss:$2 sm:$0xff]
  %s2132 = scalar_lea.vmem %s2082, 433 [#allocation2]
  %v2133 = vld [vmem:[%s2132] ss:$2 sm:$0xff]
  %s2134 = scalar_lea.vmem %s2082, 457 [#allocation2]
  %v2135 = vld [vmem:[%s2134] ss:$2 sm:$0xff]
  %s2136 = scalar_lea.vmem %s2082, 481 [#allocation2]
  %v2137 = vld [vmem:[%s2136] ss:$2 sm:$0xff]
  %s2138 = scalar_lea.vmem %s2082, 505 [#allocation2]
  %v2139 = vld [vmem:[%s2138] ss:$2 sm:$0xff]
  %s2140 = scalar_lea.vmem %s2082, 529 [#allocation2]
  %v2141 = vld [vmem:[%s2140] ss:$2 sm:$0xff]
  %s2142 = scalar_lea.vmem %s2082, 553 [#allocation2]
  %v2143 = vld [vmem:[%s2142] ss:$2 sm:$0xff]
  %s2144 = scalar_lea.vmem %s2082, 577 [#allocation2]
  %v2145 = vld [vmem:[%s2144] ss:$2 sm:$0xff]
  %s2146 = scalar_lea.vmem %s2082, 2 [#allocation2]
  %v2147 = vld [vmem:[%s2146] ss:$2 sm:$0xff]
  %s2148 = scalar_lea.vmem %s2082, 26 [#allocation2]
  %v2149 = vld [vmem:[%s2148] ss:$2 sm:$0xff]
  %s2150 = scalar_lea.vmem %s2082, 50 [#allocation2]
  %v2151 = vld [vmem:[%s2150] ss:$2 sm:$0xff]
  %s2152 = scalar_lea.vmem %s2082, 74 [#allocation2]
  %v2153 = vld [vmem:[%s2152] ss:$2 sm:$0xff]
  %s2154 = scalar_lea.vmem %s2082, 98 [#allocation2]
  %v2155 = vld [vmem:[%s2154] ss:$2 sm:$0xff]
  %s2156 = scalar_lea.vmem %s2082, 122 [#allocation2]
  %v2157 = vld [vmem:[%s2156] ss:$2 sm:$0xff]
  %s2158 = scalar_lea.vmem %s2082, 146 [#allocation2]
  %v2159 = vld [vmem:[%s2158] ss:$2 sm:$0xff]
  %s2160 = scalar_lea.vmem %s2082, 170 [#allocation2]
  %v2161 = vld [vmem:[%s2160] ss:$2 sm:$0xff]
  %s2162 = scalar_lea.vmem %s2082, 410 [#allocation2]
  %v2163 = vld [vmem:[%s2162] ss:$2 sm:$0xff]
  %s2164 = scalar_lea.vmem %s2082, 434 [#allocation2]
  %v2165 = vld [vmem:[%s2164] ss:$2 sm:$0xff]
  %s2166 = scalar_lea.vmem %s2082, 458 [#allocation2]
  %v2167 = vld [vmem:[%s2166] ss:$2 sm:$0xff]
  %s2168 = scalar_lea.vmem %s2082, 482 [#allocation2]
  %v2169 = vld [vmem:[%s2168] ss:$2 sm:$0xff]
  %s2170 = scalar_lea.vmem %s2082, 506 [#allocation2]
  %v2171 = vld [vmem:[%s2170] ss:$2 sm:$0xff]
  %s2172 = scalar_lea.vmem %s2082, 530 [#allocation2]
  %v2173 = vld [vmem:[%s2172] ss:$2 sm:$0xff]
  %s2174 = scalar_lea.vmem %s2082, 554 [#allocation2]
  %v2175 = vld [vmem:[%s2174] ss:$2 sm:$0xff]
  %s2176 = scalar_lea.vmem %s2082, 578 [#allocation2]
  %v2177 = vld [vmem:[%s2176] ss:$2 sm:$0xff]
  %v2178 = vld [vmem:[#allocation2] ss:$2 sm:$0xff]
  %s2179 = scalar_lea.vmem [#allocation2], 24
  %v2180 = vld [vmem:[%s2179] ss:$2 sm:$0xff]
  %s2181 = scalar_lea.vmem [#allocation2], 48
  %v2182 = vld [vmem:[%s2181] ss:$2 sm:$0xff]
  %s2183 = scalar_lea.vmem [#allocation2], 72
  %v2184 = vld [vmem:[%s2183] ss:$2 sm:$0xff]
  %s2185 = scalar_lea.vmem [#allocation2], 96
  %v2186 = vld [vmem:[%s2185] ss:$2 sm:$0xff]
  %s2187 = scalar_lea.vmem [#allocation2], 120
  %v2188 = vld [vmem:[%s2187] ss:$2 sm:$0xff]
  %s2189 = scalar_lea.vmem [#allocation2], 144
  %v2190 = vld [vmem:[%s2189] ss:$2 sm:$0xff]
  %s2191 = scalar_lea.vmem [#allocation2], 168
  %v2192 = vld [vmem:[%s2191] ss:$2 sm:$0xff]
  %s2193 = scalar_lea.vmem [#allocation2], 408
  %v2194 = vld [vmem:[%s2193] ss:$2 sm:$0xff]
  %s2195 = scalar_lea.vmem [#allocation2], 432
  %v2196 = vld [vmem:[%s2195] ss:$2 sm:$0xff]
  %s2197 = scalar_lea.vmem [#allocation2], 456
  %v2198 = vld [vmem:[%s2197] ss:$2 sm:$0xff]
  %s2199 = scalar_lea.vmem [#allocation2], 480
  %v2200 = vld [vmem:[%s2199] ss:$2 sm:$0xff]
  %s2201 = scalar_lea.vmem [#allocation2], 504
  %v2202 = vld [vmem:[%s2201] ss:$2 sm:$0xff]
  %s2203 = scalar_lea.vmem [#allocation2], 528
  %v2204 = vld [vmem:[%s2203] ss:$2 sm:$0xff]
  %s2205 = scalar_lea.vmem [#allocation2], 552
  %v2206 = vld [vmem:[%s2205] ss:$2 sm:$0xff]
  %s2207 = scalar_lea.vmem [#allocation2], 576
  %v2208 = vld [vmem:[%s2207] ss:$2 sm:$0xff]
  %s2209 = scalar_lea.vmem [#allocation2], 1
  %v2210 = vld [vmem:[%s2209] ss:$2 sm:$0xff]
  %s2211 = scalar_lea.vmem [#allocation2], 25
  %v2212 = vld [vmem:[%s2211] ss:$2 sm:$0xff]
  %s2213 = scalar_lea.vmem [#allocation2], 49
  %v2214 = vld [vmem:[%s2213] ss:$2 sm:$0xff]
  %s2215 = scalar_lea.vmem [#allocation2], 73
  %v2216 = vld [vmem:[%s2215] ss:$2 sm:$0xff]
  %s2217 = scalar_lea.vmem [#allocation2], 97
  %v2218 = vld [vmem:[%s2217] ss:$2 sm:$0xff]
  %s2219 = scalar_lea.vmem [#allocation2], 121
  %v2220 = vld [vmem:[%s2219] ss:$2 sm:$0xff]
  %s2221 = scalar_lea.vmem [#allocation2], 145
  %v2222 = vld [vmem:[%s2221] ss:$2 sm:$0xff]
  %s2223 = scalar_lea.vmem [#allocation2], 169
  %v2224 = vld [vmem:[%s2223] ss:$2 sm:$0xff]
  %s2225 = scalar_lea.vmem [#allocation2], 409
  %v2226 = vld [vmem:[%s2225] ss:$2 sm:$0xff]
  %s2227 = scalar_lea.vmem [#allocation2], 433
  %v2228 = vld [vmem:[%s2227] ss:$2 sm:$0xff]
  %s2229 = scalar_lea.vmem [#allocation2], 457
  %v2230 = vld [vmem:[%s2229] ss:$2 sm:$0xff]
  %s2231 = scalar_lea.vmem [#allocation2], 481
  %v2232 = vld [vmem:[%s2231] ss:$2 sm:$0xff]
  %s2233 = scalar_lea.vmem [#allocation2], 505
  %v2234 = vld [vmem:[%s2233] ss:$2 sm:$0xff]
  %s2235 = scalar_lea.vmem [#allocation2], 529
  %v2236 = vld [vmem:[%s2235] ss:$2 sm:$0xff]
  %s2237 = scalar_lea.vmem [#allocation2], 553
  %v2238 = vld [vmem:[%s2237] ss:$2 sm:$0xff]
  %s2239 = scalar_lea.vmem [#allocation2], 577
  %v2240 = vld [vmem:[%s2239] ss:$2 sm:$0xff]
  %s2241 = scalar_lea.vmem [#allocation2], 2
  %v2242 = vld [vmem:[%s2241] ss:$2 sm:$0xff]
  %s2243 = scalar_lea.vmem [#allocation2], 26
  %v2244 = vld [vmem:[%s2243] ss:$2 sm:$0xff]
  %s2245 = scalar_lea.vmem [#allocation2], 50
  %v2246 = vld [vmem:[%s2245] ss:$2 sm:$0xff]
  %s2247 = scalar_lea.vmem [#allocation2], 74
  %v2248 = vld [vmem:[%s2247] ss:$2 sm:$0xff]
  %s2249 = scalar_lea.vmem [#allocation2], 98
  %v2250 = vld [vmem:[%s2249] ss:$2 sm:$0xff]
  %s2251 = scalar_lea.vmem [#allocation2], 122
  %v2252 = vld [vmem:[%s2251] ss:$2 sm:$0xff]
  %s2253 = scalar_lea.vmem [#allocation2], 146
  %v2254 = vld [vmem:[%s2253] ss:$2 sm:$0xff]
  %s2255 = scalar_lea.vmem [#allocation2], 170
  %v2256 = vld [vmem:[%s2255] ss:$2 sm:$0xff]
  %s2257 = scalar_lea.vmem [#allocation2], 410
  %v2258 = vld [vmem:[%s2257] ss:$2 sm:$0xff]
  %s2259 = scalar_lea.vmem [#allocation2], 434
  %v2260 = vld [vmem:[%s2259] ss:$2 sm:$0xff]
  %s2261 = scalar_lea.vmem [#allocation2], 458
  %v2262 = vld [vmem:[%s2261] ss:$2 sm:$0xff]
  %s2263 = scalar_lea.vmem [#allocation2], 482
  %v2264 = vld [vmem:[%s2263] ss:$2 sm:$0xff]
  %s2265 = scalar_lea.vmem [#allocation2], 506
  %v2266 = vld [vmem:[%s2265] ss:$2 sm:$0xff]
  %s2267 = scalar_lea.vmem [#allocation2], 530
  %v2268 = vld [vmem:[%s2267] ss:$2 sm:$0xff]
  %s2269 = scalar_lea.vmem [#allocation2], 554
  %v2270 = vld [vmem:[%s2269] ss:$2 sm:$0xff]
  %s2271 = scalar_lea.vmem [#allocation2], 578
  %v2272 = vld [vmem:[%s2271] ss:$2 sm:$0xff]
  %s2273 = scalar_lea.vmem [#allocation2], 216
  %v2274 = vld [vmem:[%s2273] ss:$2 sm:$0xff]
  %s2275 = scalar_lea.vmem %s2273, 24 [#allocation2]
  %v2276 = vld [vmem:[%s2275] ss:$2 sm:$0xff]
  %s2277 = scalar_lea.vmem %s2273, 48 [#allocation2]
  %v2278 = vld [vmem:[%s2277] ss:$2 sm:$0xff]
  %s2279 = scalar_lea.vmem %s2273, 72 [#allocation2]
  %v2280 = vld [vmem:[%s2279] ss:$2 sm:$0xff]
  %s2281 = scalar_lea.vmem %s2273, 96 [#allocation2]
  %v2282 = vld [vmem:[%s2281] ss:$2 sm:$0xff]
  %s2283 = scalar_lea.vmem %s2273, 120 [#allocation2]
  %v2284 = vld [vmem:[%s2283] ss:$2 sm:$0xff]
  %s2285 = scalar_lea.vmem %s2273, 144 [#allocation2]
  %v2286 = vld [vmem:[%s2285] ss:$2 sm:$0xff]
  %s2287 = scalar_lea.vmem %s2273, 168 [#allocation2]
  %v2288 = vld [vmem:[%s2287] ss:$2 sm:$0xff]
  %s2289 = scalar_lea.vmem %s2273, 408 [#allocation2]
  %v2290 = vld [vmem:[%s2289] ss:$2 sm:$0xff]
  %s2291 = scalar_lea.vmem %s2273, 432 [#allocation2]
  %v2292 = vld [vmem:[%s2291] ss:$2 sm:$0xff]
  %s2293 = scalar_lea.vmem %s2273, 456 [#allocation2]
  %v2294 = vld [vmem:[%s2293] ss:$2 sm:$0xff]
  %s2295 = scalar_lea.vmem %s2273, 480 [#allocation2]
  %v2296 = vld [vmem:[%s2295] ss:$2 sm:$0xff]
  %s2297 = scalar_lea.vmem %s2273, 504 [#allocation2]
  %v2298 = vld [vmem:[%s2297] ss:$2 sm:$0xff]
  %s2299 = scalar_lea.vmem %s2273, 528 [#allocation2]
  %v2300 = vld [vmem:[%s2299] ss:$2 sm:$0xff]
  %s2301 = scalar_lea.vmem %s2273, 552 [#allocation2]
  %v2302 = vld [vmem:[%s2301] ss:$2 sm:$0xff]
  %s2303 = scalar_lea.vmem %s2273, 576 [#allocation2]
  %v2304 = vld [vmem:[%s2303] ss:$2 sm:$0xff]
  %s2305 = scalar_lea.vmem %s2273, 1 [#allocation2]
  %v2306 = vld [vmem:[%s2305] ss:$2 sm:$0xff]
  %s2307 = scalar_lea.vmem %s2273, 25 [#allocation2]
  %v2308 = vld [vmem:[%s2307] ss:$2 sm:$0xff]
  %s2309 = scalar_lea.vmem %s2273, 49 [#allocation2]
  %v2310 = vld [vmem:[%s2309] ss:$2 sm:$0xff]
  %s2311 = scalar_lea.vmem %s2273, 73 [#allocation2]
  %v2312 = vld [vmem:[%s2311] ss:$2 sm:$0xff]
  %s2313 = scalar_lea.vmem %s2273, 97 [#allocation2]
  %v2314 = vld [vmem:[%s2313] ss:$2 sm:$0xff]
  %s2315 = scalar_lea.vmem %s2273, 121 [#allocation2]
  %v2316 = vld [vmem:[%s2315] ss:$2 sm:$0xff]
  %s2317 = scalar_lea.vmem %s2273, 145 [#allocation2]
  %v2318 = vld [vmem:[%s2317] ss:$2 sm:$0xff]
  %s2319 = scalar_lea.vmem %s2273, 169 [#allocation2]
  %v2320 = vld [vmem:[%s2319] ss:$2 sm:$0xff]
  %s2321 = scalar_lea.vmem %s2273, 409 [#allocation2]
  %v2322 = vld [vmem:[%s2321] ss:$2 sm:$0xff]
  %s2323 = scalar_lea.vmem %s2273, 433 [#allocation2]
  %v2324 = vld [vmem:[%s2323] ss:$2 sm:$0xff]
  %s2325 = scalar_lea.vmem %s2273, 457 [#allocation2]
  %v2326 = vld [vmem:[%s2325] ss:$2 sm:$0xff]
  %s2327 = scalar_lea.vmem %s2273, 481 [#allocation2]
  %v2328 = vld [vmem:[%s2327] ss:$2 sm:$0xff]
  %s2329 = scalar_lea.vmem %s2273, 505 [#allocation2]
  %v2330 = vld [vmem:[%s2329] ss:$2 sm:$0xff]
  %s2331 = scalar_lea.vmem %s2273, 529 [#allocation2]
  %v2332 = vld [vmem:[%s2331] ss:$2 sm:$0xff]
  %s2333 = scalar_lea.vmem %s2273, 553 [#allocation2]
  %v2334 = vld [vmem:[%s2333] ss:$2 sm:$0xff]
  %s2335 = scalar_lea.vmem %s2273, 577 [#allocation2]
  %v2336 = vld [vmem:[%s2335] ss:$2 sm:$0xff]
  %s2337 = scalar_lea.vmem %s2273, 2 [#allocation2]
  %v2338 = vld [vmem:[%s2337] ss:$2 sm:$0xff]
  %s2339 = scalar_lea.vmem %s2273, 26 [#allocation2]
  %v2340 = vld [vmem:[%s2339] ss:$2 sm:$0xff]
  %s2341 = scalar_lea.vmem %s2273, 50 [#allocation2]
  %v2342 = vld [vmem:[%s2341] ss:$2 sm:$0xff]
  %s2343 = scalar_lea.vmem %s2273, 74 [#allocation2]
  %v2344 = vld [vmem:[%s2343] ss:$2 sm:$0xff]
  %s2345 = scalar_lea.vmem %s2273, 98 [#allocation2]
  %v2346 = vld [vmem:[%s2345] ss:$2 sm:$0xff]
  %s2347 = scalar_lea.vmem %s2273, 122 [#allocation2]
  %v2348 = vld [vmem:[%s2347] ss:$2 sm:$0xff]
  %s2349 = scalar_lea.vmem %s2273, 146 [#allocation2]
  %v2350 = vld [vmem:[%s2349] ss:$2 sm:$0xff]
  %s2351 = scalar_lea.vmem %s2273, 170 [#allocation2]
  %v2352 = vld [vmem:[%s2351] ss:$2 sm:$0xff]
  %s2353 = scalar_lea.vmem %s2273, 410 [#allocation2]
  %v2354 = vld [vmem:[%s2353] ss:$2 sm:$0xff]
  %s2355 = scalar_lea.vmem %s2273, 434 [#allocation2]
  %v2356 = vld [vmem:[%s2355] ss:$2 sm:$0xff]
  %s2357 = scalar_lea.vmem %s2273, 458 [#allocation2]
  %v2358 = vld [vmem:[%s2357] ss:$2 sm:$0xff]
  %s2359 = scalar_lea.vmem %s2273, 482 [#allocation2]
  %v2360 = vld [vmem:[%s2359] ss:$2 sm:$0xff]
  %s2361 = scalar_lea.vmem %s2273, 506 [#allocation2]
  %v2362 = vld [vmem:[%s2361] ss:$2 sm:$0xff]
  %s2363 = scalar_lea.vmem %s2273, 530 [#allocation2]
  %v2364 = vld [vmem:[%s2363] ss:$2 sm:$0xff]
  %s2365 = scalar_lea.vmem %s2273, 554 [#allocation2]
  %v2366 = vld [vmem:[%s2365] ss:$2 sm:$0xff]
  %s2367 = scalar_lea.vmem %s2273, 578 [#allocation2]
  %v2368 = vld [vmem:[%s2367] ss:$2 sm:$0xff]
  %2385 = vrot.lane.b32.xlu0 %v2115, 32
  %v2386 = vpop.permute.xlu0 %2385
  %2387 = vrot.lane.b32.xlu0 %v2117, 32
  %v2388 = vpop.permute.xlu0 %2387
  %2389 = vrot.lane.b32.xlu0 %v2119, 32
  %v2390 = vpop.permute.xlu0 %2389
  %2391 = vrot.lane.b32.xlu0 %v2121, 32
  %v2392 = vpop.permute.xlu0 %2391
  %2393 = vrot.lane.b32.xlu0 %v2123, 32
  %v2394 = vpop.permute.xlu0 %2393
  %2395 = vrot.lane.b32.xlu0 %v2125, 32
  %v2396 = vpop.permute.xlu0 %2395
  %2397 = vrot.lane.b32.xlu0 %v2127, 32
  %v2398 = vpop.permute.xlu0 %2397
  %2399 = vrot.lane.b32.xlu0 %v2129, 32
  %v2400 = vpop.permute.xlu0 %2399
  %2401 = vrot.lane.b32.xlu0 %v2131, 32
  %v2402 = vpop.permute.xlu0 %2401
  %2403 = vrot.lane.b32.xlu0 %v2133, 32
  %v2404 = vpop.permute.xlu0 %2403
  %2405 = vrot.lane.b32.xlu0 %v2135, 32
  %v2406 = vpop.permute.xlu0 %2405
  %2407 = vrot.lane.b32.xlu0 %v2137, 32
  %v2408 = vpop.permute.xlu0 %2407
  %2409 = vrot.lane.b32.xlu0 %v2139, 32
  %v2410 = vpop.permute.xlu0 %2409
  %2411 = vrot.lane.b32.xlu0 %v2141, 32
  %v2412 = vpop.permute.xlu0 %2411
  %2413 = vrot.lane.b32.xlu0 %v2143, 32
  %v2414 = vpop.permute.xlu0 %2413
  %2415 = vrot.lane.b32.xlu0 %v2145, 32
  %v2416 = vpop.permute.xlu0 %2415
  %2449 = vrot.lane.b32.xlu0 %v2147, 64
  %v2450 = vpop.permute.xlu0 %2449
  %2451 = vrot.lane.b32.xlu0 %v2149, 64
  %v2452 = vpop.permute.xlu0 %2451
  %2453 = vrot.lane.b32.xlu0 %v2151, 64
  %v2454 = vpop.permute.xlu0 %2453
  %2455 = vrot.lane.b32.xlu0 %v2153, 64
  %v2456 = vpop.permute.xlu0 %2455
  %2457 = vrot.lane.b32.xlu0 %v2155, 64
  %v2458 = vpop.permute.xlu0 %2457
  %2459 = vrot.lane.b32.xlu0 %v2157, 64
  %v2460 = vpop.permute.xlu0 %2459
  %2461 = vrot.lane.b32.xlu0 %v2159, 64
  %v2462 = vpop.permute.xlu0 %2461
  %2463 = vrot.lane.b32.xlu0 %v2161, 64
  %v2464 = vpop.permute.xlu0 %2463
  %2465 = vrot.lane.b32.xlu0 %v2163, 64
  %v2466 = vpop.permute.xlu0 %2465
  %2467 = vrot.lane.b32.xlu0 %v2165, 64
  %v2468 = vpop.permute.xlu0 %2467
  %2469 = vrot.lane.b32.xlu0 %v2167, 64
  %v2470 = vpop.permute.xlu0 %2469
  %2471 = vrot.lane.b32.xlu0 %v2169, 64
  %v2472 = vpop.permute.xlu0 %2471
  %2473 = vrot.lane.b32.xlu0 %v2171, 64
  %v2474 = vpop.permute.xlu0 %2473
  %2475 = vrot.lane.b32.xlu0 %v2173, 64
  %v2476 = vpop.permute.xlu0 %2475
  %2477 = vrot.lane.b32.xlu0 %v2175, 64
  %v2478 = vpop.permute.xlu0 %2477
  %2479 = vrot.lane.b32.xlu0 %v2177, 64
  %v2480 = vpop.permute.xlu0 %2479
  %2513 = vrot.lane.b32.xlu0 %v2178, 96
  %v2514 = vpop.permute.xlu0 %2513
  %2515 = vrot.lane.b32.xlu0 %v2180, 96
  %v2516 = vpop.permute.xlu0 %2515
  %2517 = vrot.lane.b32.xlu0 %v2182, 96
  %v2518 = vpop.permute.xlu0 %2517
  %2519 = vrot.lane.b32.xlu0 %v2184, 96
  %v2520 = vpop.permute.xlu0 %2519
  %2521 = vrot.lane.b32.xlu0 %v2186, 96
  %v2522 = vpop.permute.xlu0 %2521
  %2523 = vrot.lane.b32.xlu0 %v2188, 96
  %v2524 = vpop.permute.xlu0 %2523
  %2525 = vrot.lane.b32.xlu0 %v2190, 96
  %v2526 = vpop.permute.xlu0 %2525
  %2527 = vrot.lane.b32.xlu0 %v2192, 96
  %v2528 = vpop.permute.xlu0 %2527
  %2529 = vrot.lane.b32.xlu0 %v2194, 96
  %v2530 = vpop.permute.xlu0 %2529
  %2531 = vrot.lane.b32.xlu0 %v2196, 96
  %v2532 = vpop.permute.xlu0 %2531
  %2533 = vrot.lane.b32.xlu0 %v2198, 96
  %v2534 = vpop.permute.xlu0 %2533
  %2535 = vrot.lane.b32.xlu0 %v2200, 96
  %v2536 = vpop.permute.xlu0 %2535
  %2537 = vrot.lane.b32.xlu0 %v2202, 96
  %v2538 = vpop.permute.xlu0 %2537
  %2539 = vrot.lane.b32.xlu0 %v2204, 96
  %v2540 = vpop.permute.xlu0 %2539
  %2541 = vrot.lane.b32.xlu0 %v2206, 96
  %v2542 = vpop.permute.xlu0 %2541
  %2543 = vrot.lane.b32.xlu0 %v2208, 96
  %v2544 = vpop.permute.xlu0 %2543
  %2577 = vrot.lane.b32.xlu0 %v2242, 32
  %v2578 = vpop.permute.xlu0 %2577
  %2579 = vrot.lane.b32.xlu0 %v2244, 32
  %v2580 = vpop.permute.xlu0 %2579
  %2581 = vrot.lane.b32.xlu0 %v2246, 32
  %v2582 = vpop.permute.xlu0 %2581
  %2583 = vrot.lane.b32.xlu0 %v2248, 32
  %v2584 = vpop.permute.xlu0 %2583
  %2585 = vrot.lane.b32.xlu0 %v2250, 32
  %v2586 = vpop.permute.xlu0 %2585
  %2587 = vrot.lane.b32.xlu0 %v2252, 32
  %v2588 = vpop.permute.xlu0 %2587
  %2589 = vrot.lane.b32.xlu0 %v2254, 32
  %v2590 = vpop.permute.xlu0 %2589
  %2591 = vrot.lane.b32.xlu0 %v2256, 32
  %v2592 = vpop.permute.xlu0 %2591
  %2593 = vrot.lane.b32.xlu0 %v2258, 32
  %v2594 = vpop.permute.xlu0 %2593
  %2595 = vrot.lane.b32.xlu0 %v2260, 32
  %v2596 = vpop.permute.xlu0 %2595
  %2597 = vrot.lane.b32.xlu0 %v2262, 32
  %v2598 = vpop.permute.xlu0 %2597
  %2599 = vrot.lane.b32.xlu0 %v2264, 32
  %v2600 = vpop.permute.xlu0 %2599
  %2601 = vrot.lane.b32.xlu0 %v2266, 32
  %v2602 = vpop.permute.xlu0 %2601
  %2603 = vrot.lane.b32.xlu0 %v2268, 32
  %v2604 = vpop.permute.xlu0 %2603
  %2605 = vrot.lane.b32.xlu0 %v2270, 32
  %v2606 = vpop.permute.xlu0 %2605
  %2607 = vrot.lane.b32.xlu0 %v2272, 32
  %v2608 = vpop.permute.xlu0 %2607
  %2641 = vrot.lane.b32.xlu0 %v2274, 64
  %v2642 = vpop.permute.xlu0 %2641
  %2643 = vrot.lane.b32.xlu0 %v2276, 64
  %v2644 = vpop.permute.xlu0 %2643
  %2645 = vrot.lane.b32.xlu0 %v2278, 64
  %v2646 = vpop.permute.xlu0 %2645
  %2647 = vrot.lane.b32.xlu0 %v2280, 64
  %v2648 = vpop.permute.xlu0 %2647
  %2649 = vrot.lane.b32.xlu0 %v2282, 64
  %v2650 = vpop.permute.xlu0 %2649
  %2651 = vrot.lane.b32.xlu0 %v2284, 64
  %v2652 = vpop.permute.xlu0 %2651
  %2653 = vrot.lane.b32.xlu0 %v2286, 64
  %v2654 = vpop.permute.xlu0 %2653
  %2655 = vrot.lane.b32.xlu0 %v2288, 64
  %v2656 = vpop.permute.xlu0 %2655
  %2657 = vrot.lane.b32.xlu0 %v2290, 64
  %v2658 = vpop.permute.xlu0 %2657
  %2659 = vrot.lane.b32.xlu0 %v2292, 64
  %v2660 = vpop.permute.xlu0 %2659
  %2661 = vrot.lane.b32.xlu0 %v2294, 64
  %v2662 = vpop.permute.xlu0 %2661
  %2663 = vrot.lane.b32.xlu0 %v2296, 64
  %v2664 = vpop.permute.xlu0 %2663
  %2665 = vrot.lane.b32.xlu0 %v2298, 64
  %v2666 = vpop.permute.xlu0 %2665
  %2667 = vrot.lane.b32.xlu0 %v2300, 64
  %v2668 = vpop.permute.xlu0 %2667
  %2669 = vrot.lane.b32.xlu0 %v2302, 64
  %v2670 = vpop.permute.xlu0 %2669
  %2671 = vrot.lane.b32.xlu0 %v2304, 64
  %v2672 = vpop.permute.xlu0 %2671
  %2705 = vrot.lane.b32.xlu0 %v2306, 96
  %v2706 = vpop.permute.xlu0 %2705
  %2707 = vrot.lane.b32.xlu0 %v2308, 96
  %v2708 = vpop.permute.xlu0 %2707
  %2709 = vrot.lane.b32.xlu0 %v2310, 96
  %v2710 = vpop.permute.xlu0 %2709
  %2711 = vrot.lane.b32.xlu0 %v2312, 96
  %v2712 = vpop.permute.xlu0 %2711
  %2713 = vrot.lane.b32.xlu0 %v2314, 96
  %v2714 = vpop.permute.xlu0 %2713
  %2715 = vrot.lane.b32.xlu0 %v2316, 96
  %v2716 = vpop.permute.xlu0 %2715
  %2717 = vrot.lane.b32.xlu0 %v2318, 96
  %v2718 = vpop.permute.xlu0 %2717
  %2719 = vrot.lane.b32.xlu0 %v2320, 96
  %v2720 = vpop.permute.xlu0 %2719
  %2721 = vrot.lane.b32.xlu0 %v2322, 96
  %v2722 = vpop.permute.xlu0 %2721
  %2723 = vrot.lane.b32.xlu0 %v2324, 96
  %v2724 = vpop.permute.xlu0 %2723
  %2725 = vrot.lane.b32.xlu0 %v2326, 96
  %v2726 = vpop.permute.xlu0 %2725
  %2727 = vrot.lane.b32.xlu0 %v2328, 96
  %v2728 = vpop.permute.xlu0 %2727
  %2729 = vrot.lane.b32.xlu0 %v2330, 96
  %v2730 = vpop.permute.xlu0 %2729
  %2731 = vrot.lane.b32.xlu0 %v2332, 96
  %v2732 = vpop.permute.xlu0 %2731
  %2733 = vrot.lane.b32.xlu0 %v2334, 96
  %v2734 = vpop.permute.xlu0 %2733
  %2735 = vrot.lane.b32.xlu0 %v2336, 96
  %v2736 = vpop.permute.xlu0 %2735
  %v2753 = vsel %vm671, %v2083, %v2386
  %v2754 = vsel %vm671, %v2085, %v2388
  %v2755 = vsel %vm671, %v2087, %v2390
  %v2756 = vsel %vm671, %v2089, %v2392
  %v2757 = vsel %vm671, %v2091, %v2394
  %v2758 = vsel %vm671, %v2093, %v2396
  %v2759 = vsel %vm671, %v2095, %v2398
  %v2760 = vsel %vm671, %v2097, %v2400
  %v2761 = vsel %vm671, %v2099, %v2402
  %v2762 = vsel %vm671, %v2101, %v2404
  %v2763 = vsel %vm671, %v2103, %v2406
  %v2764 = vsel %vm671, %v2105, %v2408
  %v2765 = vsel %vm671, %v2107, %v2410
  %v2766 = vsel %vm671, %v2109, %v2412
  %v2767 = vsel %vm671, %v2111, %v2414
  %v2768 = vsel %vm671, %v2113, %v2416
  %vm2769 = vcmask 523264
  %v2770 = vsel %vm2769, %v2753, %v2450
  %v2771 = vsel %vm2769, %v2754, %v2452
  %v2772 = vsel %vm2769, %v2755, %v2454
  %v2773 = vsel %vm2769, %v2756, %v2456
  %v2774 = vsel %vm2769, %v2757, %v2458
  %v2775 = vsel %vm2769, %v2758, %v2460
  %v2776 = vsel %vm2769, %v2759, %v2462
  %v2777 = vsel %vm2769, %v2760, %v2464
  %v2778 = vsel %vm2769, %v2761, %v2466
  %v2779 = vsel %vm2769, %v2762, %v2468
  %v2780 = vsel %vm2769, %v2763, %v2470
  %v2781 = vsel %vm2769, %v2764, %v2472
  %v2782 = vsel %vm2769, %v2765, %v2474
  %v2783 = vsel %vm2769, %v2766, %v2476
  %v2784 = vsel %vm2769, %v2767, %v2478
  %v2785 = vsel %vm2769, %v2768, %v2480
  %vm2786 = vcmask 785408
  %v2787 = vsel %vm2786, %v2770, %v2514
  %v2788 = vsel %vm2786, %v2771, %v2516
  %v2789 = vsel %vm2786, %v2772, %v2518
  %v2790 = vsel %vm2786, %v2773, %v2520
  %v2791 = vsel %vm2786, %v2774, %v2522
  %v2792 = vsel %vm2786, %v2775, %v2524
  %v2793 = vsel %vm2786, %v2776, %v2526
  %v2794 = vsel %vm2786, %v2777, %v2528
  %v2795 = vsel %vm2786, %v2778, %v2530
  %v2796 = vsel %vm2786, %v2779, %v2532
  %v2797 = vsel %vm2786, %v2780, %v2534
  %v2798 = vsel %vm2786, %v2781, %v2536
  %v2799 = vsel %vm2786, %v2782, %v2538
  %v2800 = vsel %vm2786, %v2783, %v2540
  %v2801 = vsel %vm2786, %v2784, %v2542
  %v2802 = vsel %vm2786, %v2785, %v2544
  %v2803 = vsel %vm671, %v2210, %v2578
  %v2804 = vsel %vm671, %v2212, %v2580
  %v2805 = vsel %vm671, %v2214, %v2582
  %v2806 = vsel %vm671, %v2216, %v2584
  %v2807 = vsel %vm671, %v2218, %v2586
  %v2808 = vsel %vm671, %v2220, %v2588
  %v2809 = vsel %vm671, %v2222, %v2590
  %v2810 = vsel %vm671, %v2224, %v2592
  %v2811 = vsel %vm671, %v2226, %v2594
  %v2812 = vsel %vm671, %v2228, %v2596
  %v2813 = vsel %vm671, %v2230, %v2598
  %v2814 = vsel %vm671, %v2232, %v2600
  %v2815 = vsel %vm671, %v2234, %v2602
  %v2816 = vsel %vm671, %v2236, %v2604
  %v2817 = vsel %vm671, %v2238, %v2606
  %v2818 = vsel %vm671, %v2240, %v2608
  %v2819 = vsel %vm2769, %v2803, %v2642
  %v2820 = vsel %vm2769, %v2804, %v2644
  %v2821 = vsel %vm2769, %v2805, %v2646
  %v2822 = vsel %vm2769, %v2806, %v2648
  %v2823 = vsel %vm2769, %v2807, %v2650
  %v2824 = vsel %vm2769, %v2808, %v2652
  %v2825 = vsel %vm2769, %v2809, %v2654
  %v2826 = vsel %vm2769, %v2810, %v2656
  %v2827 = vsel %vm2769, %v2811, %v2658
  %v2828 = vsel %vm2769, %v2812, %v2660
  %v2829 = vsel %vm2769, %v2813, %v2662
  %v2830 = vsel %vm2769, %v2814, %v2664
  %v2831 = vsel %vm2769, %v2815, %v2666
  %v2832 = vsel %vm2769, %v2816, %v2668
  %v2833 = vsel %vm2769, %v2817, %v2670
  %v2834 = vsel %vm2769, %v2818, %v2672
  %v2835 = vsel %vm2786, %v2819, %v2706
  %v2836 = vsel %vm2786, %v2820, %v2708
  %v2837 = vsel %vm2786, %v2821, %v2710
  %v2838 = vsel %vm2786, %v2822, %v2712
  %v2839 = vsel %vm2786, %v2823, %v2714
  %v2840 = vsel %vm2786, %v2824, %v2716
  %v2841 = vsel %vm2786, %v2825, %v2718
  %v2842 = vsel %vm2786, %v2826, %v2720
  %v2843 = vsel %vm2786, %v2827, %v2722
  %v2844 = vsel %vm2786, %v2828, %v2724
  %v2845 = vsel %vm2786, %v2829, %v2726
  %v2846 = vsel %vm2786, %v2830, %v2728
  %v2847 = vsel %vm2786, %v2831, %v2730
  %v2848 = vsel %vm2786, %v2832, %v2732
  %v2849 = vsel %vm2786, %v2833, %v2734
  %v2850 = vsel %vm2786, %v2834, %v2736
  %v2851 = vpack.c.bf16 %v2788, %v2787
  %v2852 = vpack.c.bf16 %v2836, %v2835
  %v2853 = vpack.c.bf16 %v2340, %v2338
  %v2854 = vpack.c.bf16 %v2790, %v2789
  %v2855 = vpack.c.bf16 %v2838, %v2837
  %v2856 = vpack.c.bf16 %v2344, %v2342
  %v2857 = vpack.c.bf16 %v2792, %v2791
  %v2858 = vpack.c.bf16 %v2840, %v2839
  %v2859 = vpack.c.bf16 %v2348, %v2346
  %v2860 = vpack.c.bf16 %v2794, %v2793
  %v2861 = vpack.c.bf16 %v2842, %v2841
  %v2862 = vpack.c.bf16 %v2352, %v2350
  %v2863 = vpack.c.bf16 %v2796, %v2795
  %v2864 = vpack.c.bf16 %v2844, %v2843
  %v2865 = vpack.c.bf16 %v2356, %v2354
  %v2866 = vpack.c.bf16 %v2798, %v2797
  %v2867 = vpack.c.bf16 %v2846, %v2845
  %v2868 = vpack.c.bf16 %v2360, %v2358
  %v2869 = vpack.c.bf16 %v2800, %v2799
  %v2870 = vpack.c.bf16 %v2848, %v2847
  %v2871 = vpack.c.bf16 %v2364, %v2362
  %v2872 = vpack.c.bf16 %v2802, %v2801
  %v2873 = vpack.c.bf16 %v2850, %v2849
  %v2874 = vpack.c.bf16 %v2368, %v2366
  %v2875 = vld [vmem:[%s5] sm:$0xf]
  %v2876 = vld [vmem:[%s5 + $0x4] sm:$0xf]
  %v2877 = vld [vmem:[%s5 + $0x8] sm:$0xf]
  %v2878 = vld [vmem:[%s5 + $0xc] sm:$0xf]
  %v2879 = vld [vmem:[%s5 + $0x10] sm:$0xf]
  %v2880 = vld [vmem:[%s5 + $0x14] sm:$0xf]
  %v2881 = vld [vmem:[%s5 + $0x18] sm:$0xf]
  %v2882 = vld [vmem:[%s5 + $0x1c] sm:$0xf]
  %v2883 = vld [vmem:[%s5 + $0x20] sm:$0xf]
  %v2884 = vld [vmem:[%s5 + $0x24] sm:$0xf]
  %v2885 = vld [vmem:[%s5 + $0x28] sm:$0xf]
  %v2886 = vld [vmem:[%s5 + $0x2c] sm:$0xf]
  %v2887 = vld [vmem:[%s5 + $0x30] sm:$0xf]
  %v2888 = vld [vmem:[%s5 + $0x34] sm:$0xf]
  %v2889 = vld [vmem:[%s5 + $0x38] sm:$0xf]
  %v2890 = vld [vmem:[%s5 + $0x3c] sm:$0xf]
  %v2891 = vld [vmem:[%s5 + $0x40] sm:$0xf]
  %v2892 = vld [vmem:[%s5 + $0x44] sm:$0xf]
  %v2893 = vld [vmem:[%s5 + $0x48] sm:$0xf]
  %v2894 = vld [vmem:[%s5 + $0x4c] sm:$0xf]
  %v2895 = vld [vmem:[%s5 + $0x50] sm:$0xf]
  %v2896 = vld [vmem:[%s5 + $0x54] sm:$0xf]
  %v2897 = vld [vmem:[%s5 + $0x58] sm:$0xf]
  %v2898 = vld [vmem:[%s5 + $0x5c] sm:$0xf]
  %v2899 = vld [vmem:[%s5 + $0x60] sm:$0xf]
  %v2900 = vld [vmem:[%s5 + $0x64] sm:$0xf]
  %v2901 = vld [vmem:[%s5 + $0x68] sm:$0xf]
  %v2902 = vld [vmem:[%s5 + $0x6c] sm:$0xf]
  %v2903 = vld [vmem:[%s5 + $0x70] sm:$0xf]
  %v2904 = vld [vmem:[%s5 + $0x74] sm:$0xf]
  %v2905 = vld [vmem:[%s5 + $0x78] sm:$0xf]
  %v2906 = vld [vmem:[%s5 + $0x7c] sm:$0xf]
  %v2907 = vld [vmem:[%s5 + $0x80] sm:$0xf]
  %v2908 = vld [vmem:[%s5 + $0x84] sm:$0xf]
  %v2909 = vld [vmem:[%s5 + $0x88] sm:$0xf]
  %v2910 = vld [vmem:[%s5 + $0x8c] sm:$0xf]
  %v2911 = vld [vmem:[%s6] sm:$0x1]
  %v2913 = vlaneseq
  %v2914 = vshrl.u32 %v2913, 7
  %v2915 = vsub.s32 0, %v2914
  %v2916 = vrot.slane %v2911, %v2915
  %v2954 = vunpack.c.l.b16 %v2875
  %v2955 = vunpack.c.l.b16 %v2876
  %v2956 = vunpack.c.l.b16 %v2877
  %v2957 = vunpack.c.l.b16 %v2878
  %v2958 = vunpack.c.l.b16 %v2879
  %v2959 = vunpack.c.l.b16 %v2880
  %v2960 = vunpack.c.l.b16 %v2881
  %v2961 = vunpack.c.l.b16 %v2882
  %v2962 = vunpack.c.l.b16 %v2883
  %v2963 = vunpack.c.l.b16 %v2884
  %v2964 = vunpack.c.l.b16 %v2885
  %v2965 = vunpack.c.l.b16 %v2886
  %v2966 = vunpack.c.l.b16 %v2887
  %v2967 = vunpack.c.l.b16 %v2888
  %v2968 = vunpack.c.l.b16 %v2889
  %v2969 = vunpack.c.l.b16 %v2890
  %v2970 = vunpack.c.l.b16 %v2891
  %v2971 = vunpack.c.l.b16 %v2892
  %v2972 = vunpack.c.l.b16 %v2893
  %v2973 = vunpack.c.l.b16 %v2894
  %v2974 = vunpack.c.l.b16 %v2895
  %v2975 = vunpack.c.l.b16 %v2896
  %v2976 = vunpack.c.l.b16 %v2897
  %v2977 = vunpack.c.l.b16 %v2898
  %v2978 = vunpack.c.l.b16 %v2899
  %v2979 = vunpack.c.l.b16 %v2900
  %v2980 = vunpack.c.l.b16 %v2901
  %v2981 = vunpack.c.l.b16 %v2902
  %v2982 = vunpack.c.l.b16 %v2903
  %v2983 = vunpack.c.l.b16 %v2904
  %v2984 = vunpack.c.l.b16 %v2905
  %v2985 = vunpack.c.l.b16 %v2906
  %v2986 = vunpack.c.l.b16 %v2907
  %v2987 = vunpack.c.l.b16 %v2908
  %v2988 = vunpack.c.l.b16 %v2909
  %v2989 = vunpack.c.l.b16 %v2910
  %v2990 = vpack.c.b16 %v2955, %v2954
  %v2991 = vpack.c.b16 %v2957, %v2956
  %v2992 = vpack.c.b16 %v2959, %v2958
  %v2993 = vpack.c.b16 %v2961, %v2960
  %v2994 = vpack.c.b16 %v2963, %v2962
  %v2995 = vpack.c.b16 %v2965, %v2964
  %v2996 = vpack.c.b16 %v2967, %v2966
  %v2997 = vpack.c.b16 %v2969, %v2968
  %v2998 = vpack.c.b16 %v2971, %v2970
  %v2999 = vpack.c.b16 %v2973, %v2972
  %v3000 = vpack.c.b16 %v2975, %v2974
  %v3001 = vpack.c.b16 %v2977, %v2976
  %v3002 = vpack.c.b16 %v2979, %v2978
  %v3003 = vpack.c.b16 %v2981, %v2980
  %v3004 = vpack.c.b16 %v2983, %v2982
  %v3005 = vpack.c.b16 %v2985, %v2984
  %v3006 = vpack.c.b16 %v2987, %v2986
  %v3007 = vpack.c.b16 %v2989, %v2988
  %v3027 = vsel %vm671, %v2853, 0
  %v3030 = vsel %vm671, %v2856, 0
  %v3033 = vsel %vm671, %v2859, 0
  %v3036 = vsel %vm671, %v2862, 0
  %v3039 = vsel %vm671, %v2865, 0
  %v3042 = vsel %vm671, %v2868, 0
  %v3045 = vsel %vm671, %v2871, 0
  %v3048 = vsel %vm671, %v2874, 0
  %3050 = vmatprep.subr.bf16.mxu0 0
  %3051 = vmatpush1.bf16.msra.mxu0 %v2990
  %3052 = vmatprep.subr.bf16.mxu0 0
  %3053 = vmatpush1.bf16.msra.mxu0 %v2991
  %3054 = vmatprep.subr.bf16.mxu0 0
  %3055 = vmatpush1.bf16.msra.mxu0 %v2992
  %3056 = vmatprep.subr.bf16.mxu0 0
  %3057 = vmatpush1.bf16.msra.mxu0 %v2993
  %3058 = vmatprep.subr.bf16.mxu0 0
  %3059 = vmatpush1.bf16.msra.mxu0 %v2994
  %3060 = vmatprep.subr.bf16.mxu0 0
  %3061 = vmatpush1.bf16.msra.mxu0 %v2995
  %3062 = vmatprep.subr.bf16.mxu0 0
  %3063 = vmatpush1.bf16.msra.mxu0 %v2996
  %3064 = vmatprep.subr.bf16.mxu0 0
  %3065 = vmatpush1.bf16.msra.mxu0 %v2997
  %3066 = vmatprep.subr.bf16.mxu0 0
  %3067 = vmatpush1.bf16.msra.mxu0 %v2998
  %3068 = vmatprep.subr.bf16.mxu0 0
  %3069 = vmatpush1.bf16.msra.mxu0 %v2999
  %3070 = vmatprep.subr.bf16.mxu0 0
  %3071 = vmatpush1.bf16.msra.mxu0 %v3000
  %3072 = vmatprep.subr.bf16.mxu0 0
  %3073 = vmatpush1.bf16.msra.mxu0 %v3001
  %3074 = vmatprep.subr.bf16.mxu0 0
  %3075 = vmatpush1.bf16.msra.mxu0 %v3002
  %3076 = vmatprep.subr.bf16.mxu0 0
  %3077 = vmatpush1.bf16.msra.mxu0 %v3003
  %3078 = vmatprep.subr.bf16.mxu0 0
  %3079 = vmatpush1.bf16.msra.mxu0 %v3004
  %3080 = vmatprep.subr.bf16.mxu0 0
  %3081 = vmatpush1.bf16.msra.mxu0 %v3005
  %3082 = vmatprep.mubr.bf16.mxu0 %v2852
  %3083 = vmatmul.mubr.bf16.gmra.mrb[0].mxu0 %v2851
  %v3084 = vpop.f32.mrb[0].mxu0
  %v3085 = vadd.f32 %v2916, %v3084
  %v3086 = vpop.f32.mrb[0].mxu0
  %v3087 = vpop.f32.mrb[0].mxu0
  %v3088 = vadd.f32 %v2916, %v3087
  %v3089 = vpop.f32.mrb[0].mxu0
  %3090 = vmatprep.mubr.bf16.mxu0 %v2855
  %3091 = vmatmul.mubr.bf16.gmra.mrb[0].mxu0 %v2854
  %v3092 = vpop.f32.mrb[0].mxu0
  %v3093 = vadd.f32 %v2916, %v3092
  %v3094 = vpop.f32.mrb[0].mxu0
  %v3095 = vpop.f32.mrb[0].mxu0
  %v3096 = vadd.f32 %v2916, %v3095
  %v3097 = vpop.f32.mrb[0].mxu0
  %3098 = vmatprep.mubr.bf16.mxu0 %v2858
  %3099 = vmatmul.mubr.bf16.gmra.mrb[0].mxu0 %v2857
  %v3100 = vpop.f32.mrb[0].mxu0
  %v3101 = vadd.f32 %v2916, %v3100
  %v3102 = vpop.f32.mrb[0].mxu0
  %v3103 = vpop.f32.mrb[0].mxu0
  %v3104 = vadd.f32 %v2916, %v3103
  %v3105 = vpop.f32.mrb[0].mxu0
  %3106 = vmatprep.mubr.bf16.mxu0 %v2861
  %3107 = vmatmul.mubr.bf16.gmra.mrb[0].mxu0 %v2860
  %v3108 = vpop.f32.mrb[0].mxu0
  %v3109 = vadd.f32 %v2916, %v3108
  %v3110 = vpop.f32.mrb[0].mxu0
  %v3111 = vpop.f32.mrb[0].mxu0
  %v3112 = vadd.f32 %v2916, %v3111
  %v3113 = vpop.f32.mrb[0].mxu0
  %3114 = vmatprep.mubr.bf16.mxu0 %v2864
  %3115 = vmatmul.mubr.bf16.gmra.mrb[0].mxu0 %v2863
  %v3116 = vpop.f32.mrb[0].mxu0
  %v3117 = vadd.f32 %v2916, %v3116
  %v3118 = vpop.f32.mrb[0].mxu0
  %v3119 = vpop.f32.mrb[0].mxu0
  %v3120 = vadd.f32 %v2916, %v3119
  %v3121 = vpop.f32.mrb[0].mxu0
  %3122 = vmatprep.mubr.bf16.mxu0 %v2867
  %3123 = vmatmul.mubr.bf16.gmra.mrb[0].mxu0 %v2866
  %v3124 = vpop.f32.mrb[0].mxu0
  %v3125 = vadd.f32 %v2916, %v3124
  %v3126 = vpop.f32.mrb[0].mxu0
  %v3127 = vpop.f32.mrb[0].mxu0
  %v3128 = vadd.f32 %v2916, %v3127
  %v3129 = vpop.f32.mrb[0].mxu0
  %3130 = vmatprep.mubr.bf16.mxu0 %v2870
  %3131 = vmatmul.mubr.bf16.gmra.mrb[0].mxu0 %v2869
  %v3132 = vpop.f32.mrb[0].mxu0
  %v3133 = vadd.f32 %v2916, %v3132
  %v3134 = vpop.f32.mrb[0].mxu0
  %v3135 = vpop.f32.mrb[0].mxu0
  %v3136 = vadd.f32 %v2916, %v3135
  %v3137 = vpop.f32.mrb[0].mxu0
  %3138 = vmatprep.mubr.bf16.mxu0 %v2873
  %3139 = vmatmul.mubr.bf16.gmra.mrb[0].mxu0 %v2872
  %v3140 = vpop.f32.mrb[0].mxu0
  %v3141 = vadd.f32 %v2916, %v3140
  %v3142 = vpop.f32.mrb[0].mxu0
  %v3143 = vpop.f32.mrb[0].mxu0
  %v3144 = vadd.f32 %v2916, %v3143
  %v3145 = vpop.f32.mrb[0].mxu0
  %3146 = vdwg.mxu0
  %3147 = vmatprep.subr.bf16.mxu0 0
  %3148 = vmatpush1.bf16.msra.mxu0 %v3006
  %3149 = vmatprep.subr.bf16.mxu0 0
  %3150 = vmatpush1.bf16.msra.mxu0 %v3007
  %3151 = vmatprep.subr.bf16.mxu0 0
  %3152 = vmatpush1.bf16.msra.mxu0 0
  %3153 = vmatprep.subr.bf16.mxu0 0
  %3154 = vmatpush1.bf16.msra.mxu0 0
  %3155 = vmatprep.subr.bf16.mxu0 0
  %3156 = vmatpush1.bf16.msra.mxu0 0
  %3157 = vmatprep.subr.bf16.mxu0 0
  %3158 = vmatpush1.bf16.msra.mxu0 0
  %3159 = vmatprep.subr.bf16.mxu0 0
  %3160 = vmatpush1.bf16.msra.mxu0 0
  %3161 = vmatprep.subr.bf16.mxu0 0
  %3162 = vmatpush1.bf16.msra.mxu0 0
  %3163 = vmatprep.subr.bf16.mxu0 0
  %3164 = vmatpush1.bf16.msra.mxu0 0
  %3165 = vmatprep.subr.bf16.mxu0 0
  %3166 = vmatpush1.bf16.msra.mxu0 0
  %3167 = vmatprep.subr.bf16.mxu0 0
  %3168 = vmatpush1.bf16.msra.mxu0 0
  %3169 = vmatprep.subr.bf16.mxu0 0
  %3170 = vmatpush1.bf16.msra.mxu0 0
  %3171 = vmatprep.subr.bf16.mxu0 0
  %3172 = vmatpush1.bf16.msra.mxu0 0
  %3173 = vmatprep.subr.bf16.mxu0 0
  %3174 = vmatpush1.bf16.msra.mxu0 0
  %3175 = vmatprep.subr.bf16.mxu0 0
  %3176 = vmatpush1.bf16.msra.mxu0 0
  %3177 = vmatprep.subr.bf16.mxu0 0
  %3178 = vmatpush1.bf16.msra.mxu0 0
  %3179 = vmatprep.mubr.bf16.mxu0 0
  %3180 = vmatmul.mubr.bf16.gmra.mrb[0].mxu0 %v3027
  %v3181 = vpop.f32.mrb[0].mxu0
  %v3182 = vadd.f32 %v3085, %v3181
  %v3183 = vpop.f32.mrb[0].mxu0
  %v3184 = vpop.f32.mrb[0].mxu0
  %v3185 = vadd.f32 %v3088, %v3184
  %v3186 = vpop.f32.mrb[0].mxu0
  %3187 = vmatprep.mubr.bf16.mxu0 0
  %3188 = vmatmul.mubr.bf16.gmra.mrb[0].mxu0 %v3030
  %v3189 = vpop.f32.mrb[0].mxu0
  %v3190 = vadd.f32 %v3093, %v3189
  %v3191 = vpop.f32.mrb[0].mxu0
  %v3192 = vpop.f32.mrb[0].mxu0
  %v3193 = vadd.f32 %v3096, %v3192
  %v3194 = vpop.f32.mrb[0].mxu0
  %3195 = vmatprep.mubr.bf16.mxu0 0
  %3196 = vmatmul.mubr.bf16.gmra.mrb[0].mxu0 %v3033
  %v3197 = vpop.f32.mrb[0].mxu0
  %v3198 = vadd.f32 %v3101, %v3197
  %v3199 = vpop.f32.mrb[0].mxu0
  %v3200 = vpop.f32.mrb[0].mxu0
  %v3201 = vadd.f32 %v3104, %v3200
  %v3202 = vpop.f32.mrb[0].mxu0
  %3203 = vmatprep.mubr.bf16.mxu0 0
  %3204 = vmatmul.mubr.bf16.gmra.mrb[0].mxu0 %v3036
  %v3205 = vpop.f32.mrb[0].mxu0
  %v3206 = vadd.f32 %v3109, %v3205
  %v3207 = vpop.f32.mrb[0].mxu0
  %v3208 = vpop.f32.mrb[0].mxu0
  %v3209 = vadd.f32 %v3112, %v3208
  %v3210 = vpop.f32.mrb[0].mxu0
  %3211 = vmatprep.mubr.bf16.mxu0 0
  %3212 = vmatmul.mubr.bf16.gmra.mrb[0].mxu0 %v3039
  %v3213 = vpop.f32.mrb[0].mxu0
  %v3214 = vadd.f32 %v3117, %v3213
  %v3215 = vpop.f32.mrb[0].mxu0
  %v3216 = vpop.f32.mrb[0].mxu0
  %v3217 = vadd.f32 %v3120, %v3216
  %v3218 = vpop.f32.mrb[0].mxu0
  %3219 = vmatprep.mubr.bf16.mxu0 0
  %3220 = vmatmul.mubr.bf16.gmra.mrb[0].mxu0 %v3042
  %v3221 = vpop.f32.mrb[0].mxu0
  %v3222 = vadd.f32 %v3125, %v3221
  %v3223 = vpop.f32.mrb[0].mxu0
  %v3224 = vpop.f32.mrb[0].mxu0
  %v3225 = vadd.f32 %v3128, %v3224
  %v3226 = vpop.f32.mrb[0].mxu0
  %3227 = vmatprep.mubr.bf16.mxu0 0
  %3228 = vmatmul.mubr.bf16.gmra.mrb[0].mxu0 %v3045
  %v3229 = vpop.f32.mrb[0].mxu0
  %v3230 = vadd.f32 %v3133, %v3229
  %v3231 = vpop.f32.mrb[0].mxu0
  %v3232 = vpop.f32.mrb[0].mxu0
  %v3233 = vadd.f32 %v3136, %v3232
  %v3234 = vpop.f32.mrb[0].mxu0
  %3235 = vmatprep.mubr.bf16.mxu0 0
  %3236 = vmatmul.mubr.bf16.gmra.mrb[0].mxu0 %v3048
  %v3237 = vpop.f32.mrb[0].mxu0
  %v3238 = vadd.f32 %v3141, %v3237
  %v3239 = vpop.f32.mrb[0].mxu0
  %v3240 = vpop.f32.mrb[0].mxu0
  %v3241 = vadd.f32 %v3144, %v3240
  %v3242 = vpop.f32.mrb[0].mxu0
  %3243 = vdwg.mxu0
  %v3244 = vld [vmem:[%s7] sm:$0x1]
  %v3245 = vld [vmem:[%s8] sm:$0x1]
  %v3246 = vsel %vm2769, %v3182, 0.0
  %v3247 = vsel %vm2769, %v3185, 0.0
  %v3248 = vadd.f32 %v3246, %v3247
  %v3249 = vsel %vm2769, %v3190, 0.0
  %v3250 = vadd.f32 %v3248, %v3249
  %v3251 = vsel %vm2769, %v3193, 0.0
  %v3252 = vadd.f32 %v3250, %v3251
  %v3253 = vsel %vm2769, %v3198, 0.0
  %v3254 = vadd.f32 %v3252, %v3253
  %v3255 = vsel %vm2769, %v3201, 0.0
  %v3256 = vadd.f32 %v3254, %v3255
  %v3257 = vsel %vm2769, %v3206, 0.0
  %v3258 = vadd.f32 %v3256, %v3257
  %v3259 = vsel %vm2769, %v3209, 0.0
  %v3260 = vadd.f32 %v3258, %v3259
  %v3261 = vsel %vm2769, %v3214, 0.0
  %v3262 = vadd.f32 %v3260, %v3261
  %v3263 = vsel %vm2769, %v3217, 0.0
  %v3264 = vadd.f32 %v3262, %v3263
  %v3265 = vsel %vm2769, %v3222, 0.0
  %v3266 = vadd.f32 %v3264, %v3265
  %v3267 = vsel %vm2769, %v3225, 0.0
  %v3268 = vadd.f32 %v3266, %v3267
  %v3269 = vsel %vm2769, %v3230, 0.0
  %v3270 = vadd.f32 %v3268, %v3269
  %v3271 = vsel %vm2769, %v3233, 0.0
  %v3272 = vadd.f32 %v3270, %v3271
  %v3273 = vsel %vm2769, %v3238, 0.0
  %v3274 = vadd.f32 %v3272, %v3273
  %v3275 = vsel %vm2769, %v3241, 0.0
  %v3276 = vadd.f32 %v3274, %v3275
  %v3277 = vrot.slane %v3276, 4
  %v3278 = vadd.f32 %v3276, %v3277
  %v3279 = vrot.slane %v3278, 2
  %v3280 = vadd.f32 %v3278, %v3279
  %v3281 = vrot.slane %v3280, 1
  %v3282 = vadd.f32 %v3280, %v3281
  %v3283 = vmul.f32 %v3282, 0.0078125
  %v3284 = vsub.f32 %v3182, %v3283
  %v3285 = vsub.f32 %v3185, %v3283
  %v3286 = vsub.f32 %v3190, %v3283
  %v3287 = vsub.f32 %v3193, %v3283
  %v3288 = vsub.f32 %v3198, %v3283
  %v3289 = vsub.f32 %v3201, %v3283
  %v3290 = vsub.f32 %v3206, %v3283
  %v3291 = vsub.f32 %v3209, %v3283
  %v3292 = vsub.f32 %v3214, %v3283
  %v3293 = vsub.f32 %v3217, %v3283
  %v3294 = vsub.f32 %v3222, %v3283
  %v3295 = vsub.f32 %v3225, %v3283
  %v3296 = vsub.f32 %v3230, %v3283
  %v3297 = vsub.f32 %v3233, %v3283
  %v3298 = vsub.f32 %v3238, %v3283
  %v3299 = vsub.f32 %v3241, %v3283
  %v3300 = vmul.f32 %v3284, %v3284
  %v3301 = vmul.f32 %v3285, %v3285
  %v3302 = vmul.f32 %v3286, %v3286
  %v3303 = vmul.f32 %v3287, %v3287
  %v3304 = vmul.f32 %v3288, %v3288
  %v3305 = vmul.f32 %v3289, %v3289
  %v3306 = vmul.f32 %v3290, %v3290
  %v3307 = vmul.f32 %v3291, %v3291
  %v3308 = vmul.f32 %v3292, %v3292
  %v3309 = vmul.f32 %v3293, %v3293
  %v3310 = vmul.f32 %v3294, %v3294
  %v3311 = vmul.f32 %v3295, %v3295
  %v3312 = vmul.f32 %v3296, %v3296
  %v3313 = vmul.f32 %v3297, %v3297
  %v3314 = vmul.f32 %v3298, %v3298
  %v3315 = vmul.f32 %v3299, %v3299
  %v3316 = vsel %vm2769, %v3300, 0.0
  %v3317 = vsel %vm2769, %v3301, 0.0
  %v3318 = vadd.f32 %v3316, %v3317
  %v3319 = vsel %vm2769, %v3302, 0.0
  %v3320 = vadd.f32 %v3318, %v3319
  %v3321 = vsel %vm2769, %v3303, 0.0
  %v3322 = vadd.f32 %v3320, %v3321
  %v3323 = vsel %vm2769, %v3304, 0.0
  %v3324 = vadd.f32 %v3322, %v3323
  %v3325 = vsel %vm2769, %v3305, 0.0
  %v3326 = vadd.f32 %v3324, %v3325
  %v3327 = vsel %vm2769, %v3306, 0.0
  %v3328 = vadd.f32 %v3326, %v3327
  %v3329 = vsel %vm2769, %v3307, 0.0
  %v3330 = vadd.f32 %v3328, %v3329
  %v3331 = vsel %vm2769, %v3308, 0.0
  %v3332 = vadd.f32 %v3330, %v3331
  %v3333 = vsel %vm2769, %v3309, 0.0
  %v3334 = vadd.f32 %v3332, %v3333
  %v3335 = vsel %vm2769, %v3310, 0.0
  %v3336 = vadd.f32 %v3334, %v3335
  %v3337 = vsel %vm2769, %v3311, 0.0
  %v3338 = vadd.f32 %v3336, %v3337
  %v3339 = vsel %vm2769, %v3312, 0.0
  %v3340 = vadd.f32 %v3338, %v3339
  %v3341 = vsel %vm2769, %v3313, 0.0
  %v3342 = vadd.f32 %v3340, %v3341
  %v3343 = vsel %vm2769, %v3314, 0.0
  %v3344 = vadd.f32 %v3342, %v3343
  %v3345 = vsel %vm2769, %v3315, 0.0
  %v3346 = vadd.f32 %v3344, %v3345
  %v3347 = vrot.slane %v3346, 4
  %v3348 = vadd.f32 %v3346, %v3347
  %v3349 = vrot.slane %v3348, 2
  %v3350 = vadd.f32 %v3348, %v3349
  %v3351 = vrot.slane %v3350, 1
  %v3352 = vadd.f32 %v3350, %v3351
  %v3353 = vmul.f32 %v3352, 0.0078125
  %v3354 = vadd.f32 %v3353, 1e-05
  %v3355 = vrsqrt.pop %v3354
  %v3356 = vmul.f32 %v3284, %v3355
  %v3357 = vmul.f32 %v3285, %v3355
  %v3358 = vmul.f32 %v3286, %v3355
  %v3359 = vmul.f32 %v3287, %v3355
  %v3360 = vmul.f32 %v3288, %v3355
  %v3361 = vmul.f32 %v3289, %v3355
  %v3362 = vmul.f32 %v3290, %v3355
  %v3363 = vmul.f32 %v3291, %v3355
  %v3364 = vmul.f32 %v3292, %v3355
  %v3365 = vmul.f32 %v3293, %v3355
  %v3366 = vmul.f32 %v3294, %v3355
  %v3367 = vmul.f32 %v3295, %v3355
  %v3368 = vmul.f32 %v3296, %v3355
  %v3369 = vmul.f32 %v3297, %v3355
  %v3370 = vmul.f32 %v3298, %v3355
  %v3371 = vmul.f32 %v3299, %v3355
  %v3373 = vlaneseq
  %v3374 = vshrl.u32 %v3373, 7
  %v3375 = vsub.s32 0, %v3374
  %v3376 = vrot.slane %v3244, %v3375
  %v3378 = vmul.f32 %v3356, %v3376
  %v3379 = vmul.f32 %v3357, %v3376
  %v3380 = vmul.f32 %v3358, %v3376
  %v3381 = vmul.f32 %v3359, %v3376
  %v3382 = vmul.f32 %v3360, %v3376
  %v3383 = vmul.f32 %v3361, %v3376
  %v3384 = vmul.f32 %v3362, %v3376
  %v3385 = vmul.f32 %v3363, %v3376
  %v3386 = vmul.f32 %v3364, %v3376
  %v3387 = vmul.f32 %v3365, %v3376
  %v3388 = vmul.f32 %v3366, %v3376
  %v3389 = vmul.f32 %v3367, %v3376
  %v3390 = vmul.f32 %v3368, %v3376
  %v3391 = vmul.f32 %v3369, %v3376
  %v3392 = vmul.f32 %v3370, %v3376
  %v3393 = vmul.f32 %v3371, %v3376
  %v3395 = vlaneseq
  %v3396 = vshrl.u32 %v3395, 7
  %v3397 = vsub.s32 0, %v3396
  %v3398 = vrot.slane %v3245, %v3397
  %v3400 = vadd.f32 %v3378, %v3398
  %v3401 = vadd.f32 %v3379, %v3398
  %v3402 = vadd.f32 %v3380, %v3398
  %v3403 = vadd.f32 %v3381, %v3398
  %v3404 = vadd.f32 %v3382, %v3398
  %v3405 = vadd.f32 %v3383, %v3398
  %v3406 = vadd.f32 %v3384, %v3398
  %v3407 = vadd.f32 %v3385, %v3398
  %v3408 = vadd.f32 %v3386, %v3398
  %v3409 = vadd.f32 %v3387, %v3398
  %v3410 = vadd.f32 %v3388, %v3398
  %v3411 = vadd.f32 %v3389, %v3398
  %v3412 = vadd.f32 %v3390, %v3398
  %v3413 = vadd.f32 %v3391, %v3398
  %v3414 = vadd.f32 %v3392, %v3398
  %v3415 = vadd.f32 %v3393, %v3398
  %vm3416 = vcmp.gt.f32.partialorder %v3400, 0.0
  %vm3417 = vcmp.gt.f32.partialorder %v3401, 0.0
  %vm3418 = vcmp.gt.f32.partialorder %v3402, 0.0
  %vm3419 = vcmp.gt.f32.partialorder %v3403, 0.0
  %vm3420 = vcmp.gt.f32.partialorder %v3404, 0.0
  %vm3421 = vcmp.gt.f32.partialorder %v3405, 0.0
  %vm3422 = vcmp.gt.f32.partialorder %v3406, 0.0
  %vm3423 = vcmp.gt.f32.partialorder %v3407, 0.0
  %vm3424 = vcmp.gt.f32.partialorder %v3408, 0.0
  %vm3425 = vcmp.gt.f32.partialorder %v3409, 0.0
  %vm3426 = vcmp.gt.f32.partialorder %v3410, 0.0
  %vm3427 = vcmp.gt.f32.partialorder %v3411, 0.0
  %vm3428 = vcmp.gt.f32.partialorder %v3412, 0.0
  %vm3429 = vcmp.gt.f32.partialorder %v3413, 0.0
  %vm3430 = vcmp.gt.f32.partialorder %v3414, 0.0
  %vm3431 = vcmp.gt.f32.partialorder %v3415, 0.0
  %v3432 = vmin.f32 %v3400, 0.0
  %v3433 = vmin.f32 %v3401, 0.0
  %v3434 = vmin.f32 %v3402, 0.0
  %v3435 = vmin.f32 %v3403, 0.0
  %v3436 = vmin.f32 %v3404, 0.0
  %v3437 = vmin.f32 %v3405, 0.0
  %v3438 = vmin.f32 %v3406, 0.0
  %v3439 = vmin.f32 %v3407, 0.0
  %v3440 = vmin.f32 %v3408, 0.0
  %v3441 = vmin.f32 %v3409, 0.0
  %v3442 = vmin.f32 %v3410, 0.0
  %v3443 = vmin.f32 %v3411, 0.0
  %v3444 = vmin.f32 %v3412, 0.0
  %v3445 = vmin.f32 %v3413, 0.0
  %v3446 = vmin.f32 %v3414, 0.0
  %v3447 = vmin.f32 %v3415, 0.0
  %v3448 = vmul.f32 %v3432, 1.442695
  %v3449 = vpow.pop %v3448
  %v3450 = vmul.f32 %v3433, 1.442695
  %v3451 = vpow.pop %v3450
  %v3452 = vmul.f32 %v3434, 1.442695
  %v3453 = vpow.pop %v3452
  %v3454 = vmul.f32 %v3435, 1.442695
  %v3455 = vpow.pop %v3454
  %v3456 = vmul.f32 %v3436, 1.442695
  %v3457 = vpow.pop %v3456
  %v3458 = vmul.f32 %v3437, 1.442695
  %v3459 = vpow.pop %v3458
  %v3460 = vmul.f32 %v3438, 1.442695
  %v3461 = vpow.pop %v3460
  %v3462 = vmul.f32 %v3439, 1.442695
  %v3463 = vpow.pop %v3462
  %v3464 = vmul.f32 %v3440, 1.442695
  %v3465 = vpow.pop %v3464
  %v3466 = vmul.f32 %v3441, 1.442695
  %v3467 = vpow.pop %v3466
  %v3468 = vmul.f32 %v3442, 1.442695
  %v3469 = vpow.pop %v3468
  %v3470 = vmul.f32 %v3443, 1.442695
  %v3471 = vpow.pop %v3470
  %v3472 = vmul.f32 %v3444, 1.442695
  %v3473 = vpow.pop %v3472
  %v3474 = vmul.f32 %v3445, 1.442695
  %v3475 = vpow.pop %v3474
  %v3476 = vmul.f32 %v3446, 1.442695
  %v3477 = vpow.pop %v3476
  %v3478 = vmul.f32 %v3447, 1.442695
  %v3479 = vpow.pop %v3478
  %v3480 = vsub.f32 %v3449, 1.0
  %v3481 = vsub.f32 %v3451, 1.0
  %v3482 = vsub.f32 %v3453, 1.0
  %v3483 = vsub.f32 %v3455, 1.0
  %v3484 = vsub.f32 %v3457, 1.0
  %v3485 = vsub.f32 %v3459, 1.0
  %v3486 = vsub.f32 %v3461, 1.0
  %v3487 = vsub.f32 %v3463, 1.0
  %v3488 = vsub.f32 %v3465, 1.0
  %v3489 = vsub.f32 %v3467, 1.0
  %v3490 = vsub.f32 %v3469, 1.0
  %v3491 = vsub.f32 %v3471, 1.0
  %v3492 = vsub.f32 %v3473, 1.0
  %v3493 = vsub.f32 %v3475, 1.0
  %v3494 = vsub.f32 %v3477, 1.0
  %v3495 = vsub.f32 %v3479, 1.0
  %v3496 = vsel %vm3416, %v3400, %v3480
  %v3497 = vsel %vm3417, %v3401, %v3481
  %v3498 = vsel %vm3418, %v3402, %v3482
  %v3499 = vsel %vm3419, %v3403, %v3483
  %v3500 = vsel %vm3420, %v3404, %v3484
  %v3501 = vsel %vm3421, %v3405, %v3485
  %v3502 = vsel %vm3422, %v3406, %v3486
  %v3503 = vsel %vm3423, %v3407, %v3487
  %v3504 = vsel %vm3424, %v3408, %v3488
  %v3505 = vsel %vm3425, %v3409, %v3489
  %v3506 = vsel %vm3426, %v3410, %v3490
  %v3507 = vsel %vm3427, %v3411, %v3491
  %v3508 = vsel %vm3428, %v3412, %v3492
  %v3509 = vsel %vm3429, %v3413, %v3493
  %v3510 = vsel %vm3430, %v3414, %v3494
  %v3511 = vsel %vm3431, %v3415, %v3495
  %v3520 = vrot.slane %v3496, 7
  %v3521 = vrot.slane %v3498, 7
  %v3522 = vrot.slane %v3500, 7
  %v3523 = vrot.slane %v3502, 7
  %v3524 = vrot.slane %v3504, 7
  %v3525 = vrot.slane %v3506, 7
  %v3526 = vrot.slane %v3508, 7
  %v3527 = vrot.slane %v3510, 7
  %v3536 = vsel %vm1690, 0.0, %v3520
  %v3537 = vsel %vm1690, 0.0, %v3521
  %v3538 = vsel %vm1690, 0.0, %v3522
  %v3539 = vsel %vm1690, 0.0, %v3523
  %v3540 = vsel %vm1690, 0.0, %v3524
  %v3541 = vsel %vm1690, 0.0, %v3525
  %v3542 = vsel %vm1690, 0.0, %v3526
  %v3543 = vsel %vm1690, 0.0, %v3527
  %v3544 = vsel %vm1690, %v3520, 0.0
  %v3545 = vsel %vm1690, %v3521, 0.0
  %v3546 = vsel %vm1690, %v3522, 0.0
  %v3547 = vsel %vm1690, %v3523, 0.0
  %v3548 = vsel %vm1690, %v3524, 0.0
  %v3549 = vsel %vm1690, %v3525, 0.0
  %v3550 = vsel %vm1690, %v3526, 0.0
  %v3551 = vsel %vm1690, %v3527, 0.0
  %v3560 = vrot.slane %v3497, 7
  %v3561 = vrot.slane %v3499, 7
  %v3562 = vrot.slane %v3501, 7
  %v3563 = vrot.slane %v3503, 7
  %v3564 = vrot.slane %v3505, 7
  %v3565 = vrot.slane %v3507, 7
  %v3566 = vrot.slane %v3509, 7
  %v3567 = vrot.slane %v3511, 7
  %v3576 = vsel %vm1690, 0.0, %v3560
  %v3577 = vsel %vm1690, 0.0, %v3561
  %v3578 = vsel %vm1690, 0.0, %v3562
  %v3579 = vsel %vm1690, 0.0, %v3563
  %v3580 = vsel %vm1690, 0.0, %v3564
  %v3581 = vsel %vm1690, 0.0, %v3565
  %v3582 = vsel %vm1690, 0.0, %v3566
  %v3583 = vsel %vm1690, 0.0, %v3567
  %v3584 = vsel %vm1690, %v3560, 0.0
  %v3585 = vsel %vm1690, %v3561, 0.0
  %v3586 = vsel %vm1690, %v3562, 0.0
  %v3587 = vsel %vm1690, %v3563, 0.0
  %v3588 = vsel %vm1690, %v3564, 0.0
  %v3589 = vsel %vm1690, %v3565, 0.0
  %v3590 = vsel %vm1690, %v3566, 0.0
  %v3591 = vsel %vm1690, %v3567, 0.0
  %3592 = vst.msk [vmem:[#allocation3] sm:$0xff] %vm2769, %v3536
  %vm3593 = vcmask 517120
  %3594 = vst.msk [vmem:[#allocation3 + $0x8] sm:$0x3] %vm3593, %v3544
  %3595 = vst.msk [vmem:[#allocation3 + $0x10] sm:$0xff] %vm2769, %v3537
  %3596 = vst.msk [vmem:[#allocation3 + $0x18] sm:$0x3] %vm3593, %v3545
  %3597 = vst.msk [vmem:[#allocation3 + $0x20] sm:$0xff] %vm2769, %v3538
  %3598 = vst.msk [vmem:[#allocation3 + $0x28] sm:$0x3] %vm3593, %v3546
  %3599 = vst.msk [vmem:[#allocation3 + $0x30] sm:$0xff] %vm2769, %v3539
  %3600 = vst.msk [vmem:[#allocation3 + $0x38] sm:$0x3] %vm3593, %v3547
  %3601 = vst.msk [vmem:[#allocation3 + $0x40] sm:$0xff] %vm2769, 0.0
  %3602 = vst.msk [vmem:[#allocation3 + $0x48] sm:$0x3] %vm3593, 0.0
  %3603 = vst.msk [vmem:[#allocation3 + $0x50] sm:$0xff] %vm2769, %v3576
  %3604 = vst.msk [vmem:[#allocation3 + $0x58] sm:$0x3] %vm3593, %v3584
  %3605 = vst.msk [vmem:[#allocation3 + $0x60] sm:$0xff] %vm2769, %v3577
  %3606 = vst.msk [vmem:[#allocation3 + $0x68] sm:$0x3] %vm3593, %v3585
  %3607 = vst.msk [vmem:[#allocation3 + $0x70] sm:$0xff] %vm2769, %v3578
  %3608 = vst.msk [vmem:[#allocation3 + $0x78] sm:$0x3] %vm3593, %v3586
  %3609 = vst.msk [vmem:[#allocation3 + $0x80] sm:$0xff] %vm2769, %v3579
  %3610 = vst.msk [vmem:[#allocation3 + $0x88] sm:$0x3] %vm3593, %v3587
  %3611 = vst.msk [vmem:[#allocation3 + $0x90] sm:$0xff] %vm2769, %v3540
  %3612 = vst.msk [vmem:[#allocation3 + $0x98] sm:$0x3] %vm3593, %v3548
  %3613 = vst.msk [vmem:[#allocation3 + $0xa0] sm:$0xff] %vm2769, %v3541
  %3614 = vst.msk [vmem:[#allocation3 + $0xa8] sm:$0x3] %vm3593, %v3549
  %3615 = vst.msk [vmem:[#allocation3 + $0xb0] sm:$0xff] %vm2769, %v3542
  %3616 = vst.msk [vmem:[#allocation3 + $0xb8] sm:$0x3] %vm3593, %v3550
  %3617 = vst.msk [vmem:[#allocation3 + $0xc0] sm:$0xff] %vm2769, %v3543
  %3618 = vst.msk [vmem:[#allocation3 + $0xc8] sm:$0x3] %vm3593, %v3551
  %3619 = vst.msk [vmem:[#allocation3 + $0xd0] sm:$0xff] %vm2769, 0.0
  %3620 = vst.msk [vmem:[#allocation3 + $0xd8] sm:$0x3] %vm3593, 0.0
  %3621 = vst.msk [vmem:[#allocation3 + $0xe0] sm:$0xff] %vm2769, %v3580
  %3622 = vst.msk [vmem:[#allocation3 + $0xe8] sm:$0x3] %vm3593, %v3588
  %3623 = vst.msk [vmem:[#allocation3 + $0xf0] sm:$0xff] %vm2769, %v3581
  %3624 = vst.msk [vmem:[#allocation3 + $0xf8] sm:$0x3] %vm3593, %v3589
  %3625 = vst.msk [vmem:[#allocation3 + $0x100] sm:$0xff] %vm2769, %v3582
  %3626 = vst.msk [vmem:[#allocation3 + $0x108] sm:$0x3] %vm3593, %v3590
  %3627 = vst.msk [vmem:[#allocation3 + $0x110] sm:$0xff] %vm2769, %v3583
  %3628 = vst.msk [vmem:[#allocation3 + $0x118] sm:$0x3] %vm3593, %v3591
  %s3629 = scalar_lea.vmem [#allocation3], 64
  %v3630 = vld [vmem:[%s3629] ss:$2 sm:$0xf]
  %s3631 = scalar_lea.vmem %s3629, 16 [#allocation3]
  %v3632 = vld [vmem:[%s3631] ss:$2 sm:$0xf]
  %s3633 = scalar_lea.vmem %s3629, 32 [#allocation3]
  %v3634 = vld [vmem:[%s3633] ss:$2 sm:$0xf]
  %s3635 = scalar_lea.vmem %s3629, 48 [#allocation3]
  %v3636 = vld [vmem:[%s3635] ss:$2 sm:$0xf]
  %s3637 = scalar_lea.vmem %s3629, 144 [#allocation3]
  %v3638 = vld [vmem:[%s3637] ss:$2 sm:$0xf]
  %s3639 = scalar_lea.vmem %s3629, 160 [#allocation3]
  %v3640 = vld [vmem:[%s3639] ss:$2 sm:$0xf]
  %s3641 = scalar_lea.vmem %s3629, 176 [#allocation3]
  %v3642 = vld [vmem:[%s3641] ss:$2 sm:$0xf]
  %s3643 = scalar_lea.vmem %s3629, 192 [#allocation3]
  %v3644 = vld [vmem:[%s3643] ss:$2 sm:$0xf]
  %s3645 = scalar_lea.vmem %s3629, 1 [#allocation3]
  %v3646 = vld [vmem:[%s3645] ss:$2 sm:$0xf]
  %s3647 = scalar_lea.vmem %s3629, 17 [#allocation3]
  %v3648 = vld [vmem:[%s3647] ss:$2 sm:$0xf]
  %s3649 = scalar_lea.vmem %s3629, 33 [#allocation3]
  %v3650 = vld [vmem:[%s3649] ss:$2 sm:$0xf]
  %s3651 = scalar_lea.vmem %s3629, 49 [#allocation3]
  %v3652 = vld [vmem:[%s3651] ss:$2 sm:$0xf]
  %s3653 = scalar_lea.vmem %s3629, 145 [#allocation3]
  %v3654 = vld [vmem:[%s3653] ss:$2 sm:$0xf]
  %s3655 = scalar_lea.vmem %s3629, 161 [#allocation3]
  %v3656 = vld [vmem:[%s3655] ss:$2 sm:$0xf]
  %s3657 = scalar_lea.vmem %s3629, 177 [#allocation3]
  %v3658 = vld [vmem:[%s3657] ss:$2 sm:$0xf]
  %s3659 = scalar_lea.vmem %s3629, 193 [#allocation3]
  %v3660 = vld [vmem:[%s3659] ss:$2 sm:$0xf]
  %s3661 = scalar_lea.vmem %s3629, 2 [#allocation3]
  %v3662 = vld [vmem:[%s3661] ss:$2 sm:$0xf]
  %s3663 = scalar_lea.vmem %s3629, 18 [#allocation3]
  %v3664 = vld [vmem:[%s3663] ss:$2 sm:$0xf]
  %s3665 = scalar_lea.vmem %s3629, 34 [#allocation3]
  %v3666 = vld [vmem:[%s3665] ss:$2 sm:$0xf]
  %s3667 = scalar_lea.vmem %s3629, 50 [#allocation3]
  %v3668 = vld [vmem:[%s3667] ss:$2 sm:$0xf]
  %s3669 = scalar_lea.vmem %s3629, 146 [#allocation3]
  %v3670 = vld [vmem:[%s3669] ss:$2 sm:$0xf]
  %s3671 = scalar_lea.vmem %s3629, 162 [#allocation3]
  %v3672 = vld [vmem:[%s3671] ss:$2 sm:$0xf]
  %s3673 = scalar_lea.vmem %s3629, 178 [#allocation3]
  %v3674 = vld [vmem:[%s3673] ss:$2 sm:$0xf]
  %s3675 = scalar_lea.vmem %s3629, 194 [#allocation3]
  %v3676 = vld [vmem:[%s3675] ss:$2 sm:$0xf]
  %v3677 = vld [vmem:[#allocation3] ss:$2 sm:$0xf]
  %s3678 = scalar_lea.vmem [#allocation3], 16
  %v3679 = vld [vmem:[%s3678] ss:$2 sm:$0xf]
  %s3680 = scalar_lea.vmem [#allocation3], 32
  %v3681 = vld [vmem:[%s3680] ss:$2 sm:$0xf]
  %s3682 = scalar_lea.vmem [#allocation3], 48
  %v3683 = vld [vmem:[%s3682] ss:$2 sm:$0xf]
  %s3684 = scalar_lea.vmem [#allocation3], 144
  %v3685 = vld [vmem:[%s3684] ss:$2 sm:$0xf]
  %s3686 = scalar_lea.vmem [#allocation3], 160
  %v3687 = vld [vmem:[%s3686] ss:$2 sm:$0xf]
  %s3688 = scalar_lea.vmem [#allocation3], 176
  %v3689 = vld [vmem:[%s3688] ss:$2 sm:$0xf]
  %s3690 = scalar_lea.vmem [#allocation3], 192
  %v3691 = vld [vmem:[%s3690] ss:$2 sm:$0xf]
  %s3692 = scalar_lea.vmem [#allocation3], 1
  %v3693 = vld [vmem:[%s3692] ss:$2 sm:$0xf]
  %s3694 = scalar_lea.vmem [#allocation3], 17
  %v3695 = vld [vmem:[%s3694] ss:$2 sm:$0xf]
  %s3696 = scalar_lea.vmem [#allocation3], 33
  %v3697 = vld [vmem:[%s3696] ss:$2 sm:$0xf]
  %s3698 = scalar_lea.vmem [#allocation3], 49
  %v3699 = vld [vmem:[%s3698] ss:$2 sm:$0xf]
  %s3700 = scalar_lea.vmem [#allocation3], 145
  %v3701 = vld [vmem:[%s3700] ss:$2 sm:$0xf]
  %s3702 = scalar_lea.vmem [#allocation3], 161
  %v3703 = vld [vmem:[%s3702] ss:$2 sm:$0xf]
  %s3704 = scalar_lea.vmem [#allocation3], 177
  %v3705 = vld [vmem:[%s3704] ss:$2 sm:$0xf]
  %s3706 = scalar_lea.vmem [#allocation3], 193
  %v3707 = vld [vmem:[%s3706] ss:$2 sm:$0xf]
  %s3708 = scalar_lea.vmem [#allocation3], 2
  %v3709 = vld [vmem:[%s3708] ss:$2 sm:$0xf]
  %s3710 = scalar_lea.vmem [#allocation3], 18
  %v3711 = vld [vmem:[%s3710] ss:$2 sm:$0xf]
  %s3712 = scalar_lea.vmem [#allocation3], 34
  %v3713 = vld [vmem:[%s3712] ss:$2 sm:$0xf]
  %s3714 = scalar_lea.vmem [#allocation3], 50
  %v3715 = vld [vmem:[%s3714] ss:$2 sm:$0xf]
  %s3716 = scalar_lea.vmem [#allocation3], 146
  %v3717 = vld [vmem:[%s3716] ss:$2 sm:$0xf]
  %s3718 = scalar_lea.vmem [#allocation3], 162
  %v3719 = vld [vmem:[%s3718] ss:$2 sm:$0xf]
  %s3720 = scalar_lea.vmem [#allocation3], 178
  %v3721 = vld [vmem:[%s3720] ss:$2 sm:$0xf]
  %s3722 = scalar_lea.vmem [#allocation3], 194
  %v3723 = vld [vmem:[%s3722] ss:$2 sm:$0xf]
  %s3724 = scalar_lea.vmem [#allocation3], 80
  %v3725 = vld [vmem:[%s3724] ss:$2 sm:$0xf]
  %s3726 = scalar_lea.vmem %s3724, 16 [#allocation3]
  %v3727 = vld [vmem:[%s3726] ss:$2 sm:$0xf]
  %s3728 = scalar_lea.vmem %s3724, 32 [#allocation3]
  %v3729 = vld [vmem:[%s3728] ss:$2 sm:$0xf]
  %s3730 = scalar_lea.vmem %s3724, 48 [#allocation3]
  %v3731 = vld [vmem:[%s3730] ss:$2 sm:$0xf]
  %s3732 = scalar_lea.vmem %s3724, 144 [#allocation3]
  %v3733 = vld [vmem:[%s3732] ss:$2 sm:$0xf]
  %s3734 = scalar_lea.vmem %s3724, 160 [#allocation3]
  %v3735 = vld [vmem:[%s3734] ss:$2 sm:$0xf]
  %s3736 = scalar_lea.vmem %s3724, 176 [#allocation3]
  %v3737 = vld [vmem:[%s3736] ss:$2 sm:$0xf]
  %s3738 = scalar_lea.vmem %s3724, 192 [#allocation3]
  %v3739 = vld [vmem:[%s3738] ss:$2 sm:$0xf]
  %s3740 = scalar_lea.vmem %s3724, 1 [#allocation3]
  %v3741 = vld [vmem:[%s3740] ss:$2 sm:$0xf]
  %s3742 = scalar_lea.vmem %s3724, 17 [#allocation3]
  %v3743 = vld [vmem:[%s3742] ss:$2 sm:$0xf]
  %s3744 = scalar_lea.vmem %s3724, 33 [#allocation3]
  %v3745 = vld [vmem:[%s3744] ss:$2 sm:$0xf]
  %s3746 = scalar_lea.vmem %s3724, 49 [#allocation3]
  %v3747 = vld [vmem:[%s3746] ss:$2 sm:$0xf]
  %s3748 = scalar_lea.vmem %s3724, 145 [#allocation3]
  %v3749 = vld [vmem:[%s3748] ss:$2 sm:$0xf]
  %s3750 = scalar_lea.vmem %s3724, 161 [#allocation3]
  %v3751 = vld [vmem:[%s3750] ss:$2 sm:$0xf]
  %s3752 = scalar_lea.vmem %s3724, 177 [#allocation3]
  %v3753 = vld [vmem:[%s3752] ss:$2 sm:$0xf]
  %s3754 = scalar_lea.vmem %s3724, 193 [#allocation3]
  %v3755 = vld [vmem:[%s3754] ss:$2 sm:$0xf]
  %s3756 = scalar_lea.vmem %s3724, 2 [#allocation3]
  %v3757 = vld [vmem:[%s3756] ss:$2 sm:$0xf]
  %s3758 = scalar_lea.vmem %s3724, 18 [#allocation3]
  %v3759 = vld [vmem:[%s3758] ss:$2 sm:$0xf]
  %s3760 = scalar_lea.vmem %s3724, 34 [#allocation3]
  %v3761 = vld [vmem:[%s3760] ss:$2 sm:$0xf]
  %s3762 = scalar_lea.vmem %s3724, 50 [#allocation3]
  %v3763 = vld [vmem:[%s3762] ss:$2 sm:$0xf]
  %s3764 = scalar_lea.vmem %s3724, 146 [#allocation3]
  %v3765 = vld [vmem:[%s3764] ss:$2 sm:$0xf]
  %s3766 = scalar_lea.vmem %s3724, 162 [#allocation3]
  %v3767 = vld [vmem:[%s3766] ss:$2 sm:$0xf]
  %s3768 = scalar_lea.vmem %s3724, 178 [#allocation3]
  %v3769 = vld [vmem:[%s3768] ss:$2 sm:$0xf]
  %s3770 = scalar_lea.vmem %s3724, 194 [#allocation3]
  %v3771 = vld [vmem:[%s3770] ss:$2 sm:$0xf]
  %3780 = vrot.lane.b32.xlu0 %v3646, 64
  %v3781 = vpop.permute.xlu0 %3780
  %3782 = vrot.lane.b32.xlu0 %v3648, 64
  %v3783 = vpop.permute.xlu0 %3782
  %3784 = vrot.lane.b32.xlu0 %v3650, 64
  %v3785 = vpop.permute.xlu0 %3784
  %3786 = vrot.lane.b32.xlu0 %v3652, 64
  %v3787 = vpop.permute.xlu0 %3786
  %3788 = vrot.lane.b32.xlu0 %v3654, 64
  %v3789 = vpop.permute.xlu0 %3788
  %3790 = vrot.lane.b32.xlu0 %v3656, 64
  %v3791 = vpop.permute.xlu0 %3790
  %3792 = vrot.lane.b32.xlu0 %v3658, 64
  %v3793 = vpop.permute.xlu0 %3792
  %3794 = vrot.lane.b32.xlu0 %v3660, 64
  %v3795 = vpop.permute.xlu0 %3794
  %3812 = vrot.lane.b32.xlu0 %v3677, 64
  %v3813 = vpop.permute.xlu0 %3812
  %3814 = vrot.lane.b32.xlu0 %v3679, 64
  %v3815 = vpop.permute.xlu0 %3814
  %3816 = vrot.lane.b32.xlu0 %v3681, 64
  %v3817 = vpop.permute.xlu0 %3816
  %3818 = vrot.lane.b32.xlu0 %v3683, 64
  %v3819 = vpop.permute.xlu0 %3818
  %3820 = vrot.lane.b32.xlu0 %v3685, 64
  %v3821 = vpop.permute.xlu0 %3820
  %3822 = vrot.lane.b32.xlu0 %v3687, 64
  %v3823 = vpop.permute.xlu0 %3822
  %3824 = vrot.lane.b32.xlu0 %v3689, 64
  %v3825 = vpop.permute.xlu0 %3824
  %3826 = vrot.lane.b32.xlu0 %v3691, 64
  %v3827 = vpop.permute.xlu0 %3826
  %3844 = vrot.lane.b32.xlu0 %v3709, 64
  %v3845 = vpop.permute.xlu0 %3844
  %3846 = vrot.lane.b32.xlu0 %v3711, 64
  %v3847 = vpop.permute.xlu0 %3846
  %3848 = vrot.lane.b32.xlu0 %v3713, 64
  %v3849 = vpop.permute.xlu0 %3848
  %3850 = vrot.lane.b32.xlu0 %v3715, 64
  %v3851 = vpop.permute.xlu0 %3850
  %3852 = vrot.lane.b32.xlu0 %v3717, 64
  %v3853 = vpop.permute.xlu0 %3852
  %3854 = vrot.lane.b32.xlu0 %v3719, 64
  %v3855 = vpop.permute.xlu0 %3854
  %3856 = vrot.lane.b32.xlu0 %v3721, 64
  %v3857 = vpop.permute.xlu0 %3856
  %3858 = vrot.lane.b32.xlu0 %v3723, 64
  %v3859 = vpop.permute.xlu0 %3858
  %3876 = vrot.lane.b32.xlu0 %v3741, 64
  %v3877 = vpop.permute.xlu0 %3876
  %3878 = vrot.lane.b32.xlu0 %v3743, 64
  %v3879 = vpop.permute.xlu0 %3878
  %3880 = vrot.lane.b32.xlu0 %v3745, 64
  %v3881 = vpop.permute.xlu0 %3880
  %3882 = vrot.lane.b32.xlu0 %v3747, 64
  %v3883 = vpop.permute.xlu0 %3882
  %3884 = vrot.lane.b32.xlu0 %v3749, 64
  %v3885 = vpop.permute.xlu0 %3884
  %3886 = vrot.lane.b32.xlu0 %v3751, 64
  %v3887 = vpop.permute.xlu0 %3886
  %3888 = vrot.lane.b32.xlu0 %v3753, 64
  %v3889 = vpop.permute.xlu0 %3888
  %3890 = vrot.lane.b32.xlu0 %v3755, 64
  %v3891 = vpop.permute.xlu0 %3890
  %v3900 = vsel %vm2769, %v3630, %v3781
  %v3901 = vsel %vm2769, %v3632, %v3783
  %v3902 = vsel %vm2769, %v3634, %v3785
  %v3903 = vsel %vm2769, %v3636, %v3787
  %v3904 = vsel %vm2769, %v3638, %v3789
  %v3905 = vsel %vm2769, %v3640, %v3791
  %v3906 = vsel %vm2769, %v3642, %v3793
  %v3907 = vsel %vm2769, %v3644, %v3795
  %v3908 = vsel %vm2769, %v3662, %v3813
  %v3909 = vsel %vm2769, %v3664, %v3815
  %v3910 = vsel %vm2769, %v3666, %v3817
  %v3911 = vsel %vm2769, %v3668, %v3819
  %v3912 = vsel %vm2769, %v3670, %v3821
  %v3913 = vsel %vm2769, %v3672, %v3823
  %v3914 = vsel %vm2769, %v3674, %v3825
  %v3915 = vsel %vm2769, %v3676, %v3827
  %v3916 = vsel %vm2769, %v3693, %v3845
  %v3917 = vsel %vm2769, %v3695, %v3847
  %v3918 = vsel %vm2769, %v3697, %v3849
  %v3919 = vsel %vm2769, %v3699, %v3851
  %v3920 = vsel %vm2769, %v3701, %v3853
  %v3921 = vsel %vm2769, %v3703, %v3855
  %v3922 = vsel %vm2769, %v3705, %v3857
  %v3923 = vsel %vm2769, %v3707, %v3859
  %v3924 = vsel %vm2769, %v3725, %v3877
  %v3925 = vsel %vm2769, %v3727, %v3879
  %v3926 = vsel %vm2769, %v3729, %v3881
  %v3927 = vsel %vm2769, %v3731, %v3883
  %v3928 = vsel %vm2769, %v3733, %v3885
  %v3929 = vsel %vm2769, %v3735, %v3887
  %v3930 = vsel %vm2769, %v3737, %v3889
  %v3931 = vsel %vm2769, %v3739, %v3891
  %v3937 = vrot.slane %v3901, 4
  %v3938 = vrot.slane %v3909, 4
  %v3939 = vrot.slane %v3917, 4
  %v3940 = vrot.slane %v3925, 4
  %v3941 = vrot.slane %v3759, 4
  %v3952 = vrot.slane %v3903, 4
  %v3953 = vrot.slane %v3911, 4
  %v3954 = vrot.slane %v3919, 4
  %v3955 = vrot.slane %v3927, 4
  %v3956 = vrot.slane %v3763, 4
  %v3967 = vrot.slane %v3905, 4
  %v3968 = vrot.slane %v3913, 4
  %v3969 = vrot.slane %v3921, 4
  %v3970 = vrot.slane %v3929, 4
  %v3971 = vrot.slane %v3767, 4
  %v3982 = vrot.slane %v3907, 4
  %v3983 = vrot.slane %v3915, 4
  %v3984 = vrot.slane %v3923, 4
  %v3985 = vrot.slane %v3931, 4
  %v3986 = vrot.slane %v3771, 4
  %vm3992 = vcmask 1043456
  %v3993 = vsel %vm3992, %v3900, %v3937
  %v3994 = vsel %vm3992, %v3908, %v3938
  %v3995 = vsel %vm3992, %v3916, %v3939
  %v3996 = vsel %vm3992, %v3924, %v3940
  %v3997 = vsel %vm3992, %v3757, %v3941
  %v3998 = vsel %vm3992, %v3902, %v3952
  %v3999 = vsel %vm3992, %v3910, %v3953
  %v4000 = vsel %vm3992, %v3918, %v3954
  %v4001 = vsel %vm3992, %v3926, %v3955
  %v4002 = vsel %vm3992, %v3761, %v3956
  %v4003 = vsel %vm3992, %v3904, %v3967
  %v4004 = vsel %vm3992, %v3912, %v3968
  %v4005 = vsel %vm3992, %v3920, %v3969
  %v4006 = vsel %vm3992, %v3928, %v3970
  %v4007 = vsel %vm3992, %v3765, %v3971
  %v4008 = vsel %vm3992, %v3906, %v3982
  %v4009 = vsel %vm3992, %v3914, %v3983
  %v4010 = vsel %vm3992, %v3922, %v3984
  %v4011 = vsel %vm3992, %v3930, %v3985
  %v4012 = vsel %vm3992, %v3769, %v3986
  %v4013 = vpack.c.bf16 %v3998, %v3993
  %v4014 = vpack.c.bf16 %v3999, %v3994
  %v4015 = vpack.c.bf16 %v4000, %v3995
  %v4016 = vpack.c.bf16 %v4001, %v3996
  %v4017 = vpack.c.bf16 %v4002, %v3997
  %v4018 = vpack.c.bf16 %v4008, %v4003
  %v4019 = vpack.c.bf16 %v4009, %v4004
  %v4020 = vpack.c.bf16 %v4010, %v4005
  %v4021 = vpack.c.bf16 %v4011, %v4006
  %v4022 = vpack.c.bf16 %v4012, %v4007
  %v4023 = vld [vmem:[%s9] sm:$0xf]
  %v4024 = vld [vmem:[%s9 + $0x4] sm:$0xf]
  %v4025 = vld [vmem:[%s9 + $0x8] sm:$0xf]
  %v4026 = vld [vmem:[%s9 + $0xc] sm:$0xf]
  %v4027 = vld [vmem:[%s9 + $0x10] sm:$0xf]
  %v4028 = vld [vmem:[%s9 + $0x14] sm:$0xf]
  %v4029 = vld [vmem:[%s9 + $0x18] sm:$0xf]
  %v4030 = vld [vmem:[%s9 + $0x1c] sm:$0xf]
  %v4031 = vld [vmem:[%s9 + $0x20] sm:$0xf]
  %v4032 = vld [vmem:[%s9 + $0x24] sm:$0xf]
  %v4033 = vld [vmem:[%s9 + $0x28] sm:$0xf]
  %v4034 = vld [vmem:[%s9 + $0x2c] sm:$0xf]
  %v4035 = vld [vmem:[%s9 + $0x30] sm:$0xf]
  %v4036 = vld [vmem:[%s9 + $0x34] sm:$0xf]
  %v4037 = vld [vmem:[%s9 + $0x38] sm:$0xf]
  %v4038 = vld [vmem:[%s9 + $0x3c] sm:$0xf]
  %v4039 = vld [vmem:[%s9 + $0x40] sm:$0xf]
  %v4040 = vld [vmem:[%s9 + $0x44] sm:$0xf]
  %v4041 = vld [vmem:[%s9 + $0x48] sm:$0xf]
  %v4042 = vld [vmem:[%s9 + $0x4c] sm:$0xf]
  %v4043 = vld [vmem:[%s9 + $0x50] sm:$0xf]
  %v4044 = vld [vmem:[%s9 + $0x54] sm:$0xf]
  %v4045 = vld [vmem:[%s9 + $0x58] sm:$0xf]
  %v4046 = vld [vmem:[%s9 + $0x5c] sm:$0xf]
  %v4047 = vld [vmem:[%s9 + $0x60] sm:$0xf]
  %v4048 = vld [vmem:[%s9 + $0x64] sm:$0xf]
  %v4049 = vld [vmem:[%s9 + $0x68] sm:$0xf]
  %v4050 = vld [vmem:[%s9 + $0x6c] sm:$0xf]
  %v4051 = vld [vmem:[%s9 + $0x70] sm:$0xf]
  %v4052 = vld [vmem:[%s9 + $0x74] sm:$0xf]
  %v4053 = vld [vmem:[%s9 + $0x78] sm:$0xf]
  %v4054 = vld [vmem:[%s9 + $0x7c] sm:$0xf]
  %v4055 = vld [vmem:[%s9 + $0x80] sm:$0xf]
  %v4056 = vld [vmem:[%s9 + $0x84] sm:$0xf]
  %v4057 = vld [vmem:[%s9 + $0x88] sm:$0xf]
  %v4058 = vld [vmem:[%s9 + $0x8c] sm:$0xf]
  %v4059 = vld [vmem:[%s9 + $0x90] sm:$0xf]
  %v4060 = vld [vmem:[%s9 + $0x94] sm:$0xf]
  %v4061 = vld [vmem:[%s9 + $0x98] sm:$0xf]
  %v4062 = vld [vmem:[%s9 + $0x9c] sm:$0xf]
  %v4063 = vld [vmem:[%s9 + $0xa0] sm:$0xf]
  %v4064 = vld [vmem:[%s9 + $0xa4] sm:$0xf]
  %v4065 = vld [vmem:[%s9 + $0xa8] sm:$0xf]
  %v4066 = vld [vmem:[%s9 + $0xac] sm:$0xf]
  %v4067 = vld [vmem:[%s9 + $0xb0] sm:$0xf]
  %v4068 = vld [vmem:[%s9 + $0xb4] sm:$0xf]
  %v4069 = vld [vmem:[%s9 + $0xb8] sm:$0xf]
  %v4070 = vld [vmem:[%s9 + $0xbc] sm:$0xf]
  %v4071 = vld [vmem:[%s9 + $0xc0] sm:$0xf]
  %v4072 = vld [vmem:[%s9 + $0xc4] sm:$0xf]
  %v4073 = vld [vmem:[%s9 + $0xc8] sm:$0xf]
  %v4074 = vld [vmem:[%s9 + $0xcc] sm:$0xf]
  %v4075 = vld [vmem:[%s9 + $0xd0] sm:$0xf]
  %v4076 = vld [vmem:[%s9 + $0xd4] sm:$0xf]
  %v4077 = vld [vmem:[%s9 + $0xd8] sm:$0xf]
  %v4078 = vld [vmem:[%s9 + $0xdc] sm:$0xf]
  %v4079 = vld [vmem:[%s9 + $0xe0] sm:$0xf]
  %v4080 = vld [vmem:[%s9 + $0xe4] sm:$0xf]
  %v4081 = vld [vmem:[%s9 + $0xe8] sm:$0xf]
  %v4082 = vld [vmem:[%s9 + $0xec] sm:$0xf]
  %v4083 = vld [vmem:[%s9 + $0xf0] sm:$0xf]
  %v4084 = vld [vmem:[%s9 + $0xf4] sm:$0xf]
  %v4085 = vld [vmem:[%s9 + $0xf8] sm:$0xf]
  %v4086 = vld [vmem:[%s9 + $0xfc] sm:$0xf]
  %v4087 = vld [vmem:[%s9 + $0x100] sm:$0xf]
  %v4088 = vld [vmem:[%s9 + $0x104] sm:$0xf]
  %v4089 = vld [vmem:[%s9 + $0x108] sm:$0xf]
  %v4090 = vld [vmem:[%s9 + $0x10c] sm:$0xf]
  %v4091 = vld [vmem:[%s9 + $0x110] sm:$0xf]
  %v4092 = vld [vmem:[%s9 + $0x114] sm:$0xf]
  %v4093 = vld [vmem:[%s9 + $0x118] sm:$0xf]
  %v4094 = vld [vmem:[%s9 + $0x11c] sm:$0xf]
  %v4095 = vld [vmem:[%s10] sm:$0x1]
  %v4097 = vlaneseq
  %v4098 = vshrl.u32 %v4097, 7
  %v4099 = vsub.s32 0, %v4098
  %v4100 = vrot.slane %v4095, %v4099
  %v4174 = vunpack.c.l.b16 %v4023
  %v4175 = vunpack.c.l.b16 %v4024
  %v4176 = vunpack.c.l.b16 %v4025
  %v4177 = vunpack.c.l.b16 %v4026
  %v4178 = vunpack.c.l.b16 %v4027
  %v4179 = vunpack.c.l.b16 %v4028
  %v4180 = vunpack.c.l.b16 %v4029
  %v4181 = vunpack.c.l.b16 %v4030
  %v4182 = vunpack.c.l.b16 %v4031
  %v4183 = vunpack.c.l.b16 %v4032
  %v4184 = vunpack.c.l.b16 %v4033
  %v4185 = vunpack.c.l.b16 %v4034
  %v4186 = vunpack.c.l.b16 %v4035
  %v4187 = vunpack.c.l.b16 %v4036
  %v4188 = vunpack.c.l.b16 %v4037
  %v4189 = vunpack.c.l.b16 %v4038
  %v4190 = vunpack.c.l.b16 %v4039
  %v4191 = vunpack.c.l.b16 %v4040
  %v4192 = vunpack.c.l.b16 %v4041
  %v4193 = vunpack.c.l.b16 %v4042
  %v4194 = vunpack.c.l.b16 %v4043
  %v4195 = vunpack.c.l.b16 %v4044
  %v4196 = vunpack.c.l.b16 %v4045
  %v4197 = vunpack.c.l.b16 %v4046
  %v4198 = vunpack.c.l.b16 %v4047
  %v4199 = vunpack.c.l.b16 %v4048
  %v4200 = vunpack.c.l.b16 %v4049
  %v4201 = vunpack.c.l.b16 %v4050
  %v4202 = vunpack.c.l.b16 %v4051
  %v4203 = vunpack.c.l.b16 %v4052
  %v4204 = vunpack.c.l.b16 %v4053
  %v4205 = vunpack.c.l.b16 %v4054
  %v4206 = vunpack.c.l.b16 %v4055
  %v4207 = vunpack.c.l.b16 %v4056
  %v4208 = vunpack.c.l.b16 %v4057
  %v4209 = vunpack.c.l.b16 %v4058
  %v4210 = vunpack.c.l.b16 %v4059
  %v4211 = vunpack.c.l.b16 %v4060
  %v4212 = vunpack.c.l.b16 %v4061
  %v4213 = vunpack.c.l.b16 %v4062
  %v4214 = vunpack.c.l.b16 %v4063
  %v4215 = vunpack.c.l.b16 %v4064
  %v4216 = vunpack.c.l.b16 %v4065
  %v4217 = vunpack.c.l.b16 %v4066
  %v4218 = vunpack.c.l.b16 %v4067
  %v4219 = vunpack.c.l.b16 %v4068
  %v4220 = vunpack.c.l.b16 %v4069
  %v4221 = vunpack.c.l.b16 %v4070
  %v4222 = vunpack.c.l.b16 %v4071
  %v4223 = vunpack.c.l.b16 %v4072
  %v4224 = vunpack.c.l.b16 %v4073
  %v4225 = vunpack.c.l.b16 %v4074
  %v4226 = vunpack.c.l.b16 %v4075
  %v4227 = vunpack.c.l.b16 %v4076
  %v4228 = vunpack.c.l.b16 %v4077
  %v4229 = vunpack.c.l.b16 %v4078
  %v4230 = vunpack.c.l.b16 %v4079
  %v4231 = vunpack.c.l.b16 %v4080
  %v4232 = vunpack.c.l.b16 %v4081
  %v4233 = vunpack.c.l.b16 %v4082
  %v4234 = vunpack.c.l.b16 %v4083
  %v4235 = vunpack.c.l.b16 %v4084
  %v4236 = vunpack.c.l.b16 %v4085
  %v4237 = vunpack.c.l.b16 %v4086
  %v4238 = vunpack.c.l.b16 %v4087
  %v4239 = vunpack.c.l.b16 %v4088
  %v4240 = vunpack.c.l.b16 %v4089
  %v4241 = vunpack.c.l.b16 %v4090
  %v4242 = vunpack.c.l.b16 %v4091
  %v4243 = vunpack.c.l.b16 %v4092
  %v4244 = vunpack.c.l.b16 %v4093
  %v4245 = vunpack.c.l.b16 %v4094
  %v4246 = vpack.c.b16 %v4175, %v4174
  %v4247 = vpack.c.b16 %v4177, %v4176
  %v4248 = vpack.c.b16 %v4179, %v4178
  %v4249 = vpack.c.b16 %v4181, %v4180
  %v4250 = vpack.c.b16 %v4183, %v4182
  %v4251 = vpack.c.b16 %v4185, %v4184
  %v4252 = vpack.c.b16 %v4187, %v4186
  %v4253 = vpack.c.b16 %v4189, %v4188
  %v4254 = vpack.c.b16 %v4191, %v4190
  %v4255 = vpack.c.b16 %v4193, %v4192
  %v4256 = vpack.c.b16 %v4195, %v4194
  %v4257 = vpack.c.b16 %v4197, %v4196
  %v4258 = vpack.c.b16 %v4199, %v4198
  %v4259 = vpack.c.b16 %v4201, %v4200
  %v4260 = vpack.c.b16 %v4203, %v4202
  %v4261 = vpack.c.b16 %v4205, %v4204
  %v4262 = vpack.c.b16 %v4207, %v4206
  %v4263 = vpack.c.b16 %v4209, %v4208
  %v4264 = vpack.c.b16 %v4211, %v4210
  %v4265 = vpack.c.b16 %v4213, %v4212
  %v4266 = vpack.c.b16 %v4215, %v4214
  %v4267 = vpack.c.b16 %v4217, %v4216
  %v4268 = vpack.c.b16 %v4219, %v4218
  %v4269 = vpack.c.b16 %v4221, %v4220
  %v4270 = vpack.c.b16 %v4223, %v4222
  %v4271 = vpack.c.b16 %v4225, %v4224
  %v4272 = vpack.c.b16 %v4227, %v4226
  %v4273 = vpack.c.b16 %v4229, %v4228
  %v4274 = vpack.c.b16 %v4231, %v4230
  %v4275 = vpack.c.b16 %v4233, %v4232
  %v4276 = vpack.c.b16 %v4235, %v4234
  %v4277 = vpack.c.b16 %v4237, %v4236
  %v4278 = vpack.c.b16 %v4239, %v4238
  %v4279 = vpack.c.b16 %v4241, %v4240
  %v4280 = vpack.c.b16 %v4243, %v4242
  %v4281 = vpack.c.b16 %v4245, %v4244
  %v4319 = vsel %vm2769, %v4017, 0
  %v4322 = vsel %vm2769, %v4022, 0
  %4324 = vmatprep.subr.bf16.mxu0 0
  %4325 = vmatpush1.bf16.msra.mxu0 %v4246
  %4326 = vmatprep.subr.bf16.mxu0 0
  %4327 = vmatpush1.bf16.msra.mxu0 %v4247
  %4328 = vmatprep.subr.bf16.mxu0 0
  %4329 = vmatpush1.bf16.msra.mxu0 %v4248
  %4330 = vmatprep.subr.bf16.mxu0 0
  %4331 = vmatpush1.bf16.msra.mxu0 %v4249
  %4332 = vmatprep.subr.bf16.mxu0 0
  %4333 = vmatpush1.bf16.msra.mxu0 %v4250
  %4334 = vmatprep.subr.bf16.mxu0 0
  %4335 = vmatpush1.bf16.msra.mxu0 %v4251
  %4336 = vmatprep.subr.bf16.mxu0 0
  %4337 = vmatpush1.bf16.msra.mxu0 %v4252
  %4338 = vmatprep.subr.bf16.mxu0 0
  %4339 = vmatpush1.bf16.msra.mxu0 %v4253
  %4340 = vmatprep.subr.bf16.mxu0 0
  %4341 = vmatpush1.bf16.msra.mxu0 %v4254
  %4342 = vmatprep.subr.bf16.mxu0 0
  %4343 = vmatpush1.bf16.msra.mxu0 %v4255
  %4344 = vmatprep.subr.bf16.mxu0 0
  %4345 = vmatpush1.bf16.msra.mxu0 %v4256
  %4346 = vmatprep.subr.bf16.mxu0 0
  %4347 = vmatpush1.bf16.msra.mxu0 %v4257
  %4348 = vmatprep.subr.bf16.mxu0 0
  %4349 = vmatpush1.bf16.msra.mxu0 %v4258
  %4350 = vmatprep.subr.bf16.mxu0 0
  %4351 = vmatpush1.bf16.msra.mxu0 %v4259
  %4352 = vmatprep.subr.bf16.mxu0 0
  %4353 = vmatpush1.bf16.msra.mxu0 %v4260
  %4354 = vmatprep.subr.bf16.mxu0 0
  %4355 = vmatpush1.bf16.msra.mxu0 %v4261
  %4356 = vmatprep.mubr.bf16.mxu0 %v4014
  %4357 = vmatmul.mubr.bf16.gmra.mrb[0].mxu0 %v4013
  %v4358 = vpop.f32.mrb[0].mxu0
  %v4359 = vadd.f32 %v4100, %v4358
  %v4360 = vpop.f32.mrb[0].mxu0
  %v4361 = vpop.f32.mrb[0].mxu0
  %v4362 = vadd.f32 %v4100, %v4361
  %v4363 = vpop.f32.mrb[0].mxu0
  %4364 = vmatprep.mubr.bf16.mxu0 %v4019
  %4365 = vmatmul.mubr.bf16.gmra.mrb[0].mxu0 %v4018
  %v4366 = vpop.f32.mrb[0].mxu0
  %v4367 = vadd.f32 %v4100, %v4366
  %v4368 = vpop.f32.mrb[0].mxu0
  %v4369 = vpop.f32.mrb[0].mxu0
  %v4370 = vadd.f32 %v4100, %v4369
  %v4371 = vpop.f32.mrb[0].mxu0
  %4372 = vdwg.mxu0
  %4373 = vmatprep.subr.bf16.mxu0 0
  %4374 = vmatpush1.bf16.msra.mxu0 %v4262
  %4375 = vmatprep.subr.bf16.mxu0 0
  %4376 = vmatpush1.bf16.msra.mxu0 %v4263
  %4377 = vmatprep.subr.bf16.mxu0 0
  %4378 = vmatpush1.bf16.msra.mxu0 %v4264
  %4379 = vmatprep.subr.bf16.mxu0 0
  %4380 = vmatpush1.bf16.msra.mxu0 %v4265
  %4381 = vmatprep.subr.bf16.mxu0 0
  %4382 = vmatpush1.bf16.msra.mxu0 %v4266
  %4383 = vmatprep.subr.bf16.mxu0 0
  %4384 = vmatpush1.bf16.msra.mxu0 %v4267
  %4385 = vmatprep.subr.bf16.mxu0 0
  %4386 = vmatpush1.bf16.msra.mxu0 %v4268
  %4387 = vmatprep.subr.bf16.mxu0 0
  %4388 = vmatpush1.bf16.msra.mxu0 %v4269
  %4389 = vmatprep.subr.bf16.mxu0 0
  %4390 = vmatpush1.bf16.msra.mxu0 %v4270
  %4391 = vmatprep.subr.bf16.mxu0 0
  %4392 = vmatpush1.bf16.msra.mxu0 %v4271
  %4393 = vmatprep.subr.bf16.mxu0 0
  %4394 = vmatpush1.bf16.msra.mxu0 %v4272
  %4395 = vmatprep.subr.bf16.mxu0 0
  %4396 = vmatpush1.bf16.msra.mxu0 %v4273
  %4397 = vmatprep.subr.bf16.mxu0 0
  %4398 = vmatpush1.bf16.msra.mxu0 %v4274
  %4399 = vmatprep.subr.bf16.mxu0 0
  %4400 = vmatpush1.bf16.msra.mxu0 %v4275
  %4401 = vmatprep.subr.bf16.mxu0 0
  %4402 = vmatpush1.bf16.msra.mxu0 %v4276
  %4403 = vmatprep.subr.bf16.mxu0 0
  %4404 = vmatpush1.bf16.msra.mxu0 %v4277
  %4405 = vmatprep.mubr.bf16.mxu0 %v4016
  %4406 = vmatmul.mubr.bf16.gmra.mrb[0].mxu0 %v4015
  %v4407 = vpop.f32.mrb[0].mxu0
  %v4408 = vadd.f32 %v4359, %v4407
  %v4409 = vpop.f32.mrb[0].mxu0
  %v4410 = vpop.f32.mrb[0].mxu0
  %v4411 = vadd.f32 %v4362, %v4410
  %v4412 = vpop.f32.mrb[0].mxu0
  %4413 = vmatprep.mubr.bf16.mxu0 %v4021
  %4414 = vmatmul.mubr.bf16.gmra.mrb[0].mxu0 %v4020
  %v4415 = vpop.f32.mrb[0].mxu0
  %v4416 = vadd.f32 %v4367, %v4415
  %v4417 = vpop.f32.mrb[0].mxu0
  %v4418 = vpop.f32.mrb[0].mxu0
  %v4419 = vadd.f32 %v4370, %v4418
  %v4420 = vpop.f32.mrb[0].mxu0
  %4421 = vdwg.mxu0
  %4422 = vmatprep.subr.bf16.mxu0 0
  %4423 = vmatpush1.bf16.msra.mxu0 %v4278
  %4424 = vmatprep.subr.bf16.mxu0 0
  %4425 = vmatpush1.bf16.msra.mxu0 %v4279
  %4426 = vmatprep.subr.bf16.mxu0 0
  %4427 = vmatpush1.bf16.msra.mxu0 %v4280
  %4428 = vmatprep.subr.bf16.mxu0 0
  %4429 = vmatpush1.bf16.msra.mxu0 %v4281
  %4430 = vmatprep.subr.bf16.mxu0 0
  %4431 = vmatpush1.bf16.msra.mxu0 0
  %4432 = vmatprep.subr.bf16.mxu0 0
  %4433 = vmatpush1.bf16.msra.mxu0 0
  %4434 = vmatprep.subr.bf16.mxu0 0
  %4435 = vmatpush1.bf16.msra.mxu0 0
  %4436 = vmatprep.subr.bf16.mxu0 0
  %4437 = vmatpush1.bf16.msra.mxu0 0
  %4438 = vmatprep.subr.bf16.mxu0 0
  %4439 = vmatpush1.bf16.msra.mxu0 0
  %4440 = vmatprep.subr.bf16.mxu0 0
  %4441 = vmatpush1.bf16.msra.mxu0 0
  %4442 = vmatprep.subr.bf16.mxu0 0
  %4443 = vmatpush1.bf16.msra.mxu0 0
  %4444 = vmatprep.subr.bf16.mxu0 0
  %4445 = vmatpush1.bf16.msra.mxu0 0
  %4446 = vmatprep.subr.bf16.mxu0 0
  %4447 = vmatpush1.bf16.msra.mxu0 0
  %4448 = vmatprep.subr.bf16.mxu0 0
  %4449 = vmatpush1.bf16.msra.mxu0 0
  %4450 = vmatprep.subr.bf16.mxu0 0
  %4451 = vmatpush1.bf16.msra.mxu0 0
  %4452 = vmatprep.subr.bf16.mxu0 0
  %4453 = vmatpush1.bf16.msra.mxu0 0
  %4454 = vmatprep.mubr.bf16.mxu0 0
  %4455 = vmatmul.mubr.bf16.gmra.mrb[0].mxu0 %v4319
  %v4456 = vpop.f32.mrb[0].mxu0
  %v4457 = vadd.f32 %v4408, %v4456
  %v4458 = vpop.f32.mrb[0].mxu0
  %v4459 = vpop.f32.mrb[0].mxu0
  %v4460 = vadd.f32 %v4411, %v4459
  %v4461 = vpop.f32.mrb[0].mxu0
  %4462 = vmatprep.mubr.bf16.mxu0 0
  %4463 = vmatmul.mubr.bf16.gmra.mrb[0].mxu0 %v4322
  %v4464 = vpop.f32.mrb[0].mxu0
  %v4465 = vadd.f32 %v4416, %v4464
  %v4466 = vpop.f32.mrb[0].mxu0
  %v4467 = vpop.f32.mrb[0].mxu0
  %v4468 = vadd.f32 %v4419, %v4467
  %v4469 = vpop.f32.mrb[0].mxu0
  %4470 = vdwg.mxu0
  %v4471 = vld [vmem:[%s11] sm:$0x1]
  %v4472 = vld [vmem:[%s12] sm:$0x1]
  %v4473 = vadd.f32 %v4457, %v4460
  %v4474 = vadd.f32 %v4473, %v4465
  %v4475 = vadd.f32 %v4474, %v4468
  %v4476 = vrot.slane %v4475, 4
  %v4477 = vadd.f32 %v4475, %v4476
  %v4478 = vrot.slane %v4477, 2
  %v4479 = vadd.f32 %v4477, %v4478
  %v4480 = vrot.slane %v4479, 1
  %v4481 = vadd.f32 %v4479, %v4480
  %v4482 = vmul.f32 %v4481, 0.03125
  %v4483 = vsub.f32 %v4457, %v4482
  %v4484 = vsub.f32 %v4460, %v4482
  %v4485 = vsub.f32 %v4465, %v4482
  %v4486 = vsub.f32 %v4468, %v4482
  %v4487 = vmul.f32 %v4483, %v4483
  %v4488 = vmul.f32 %v4484, %v4484
  %v4489 = vmul.f32 %v4485, %v4485
  %v4490 = vmul.f32 %v4486, %v4486
  %v4491 = vadd.f32 %v4487, %v4488
  %v4492 = vadd.f32 %v4491, %v4489
  %v4493 = vadd.f32 %v4492, %v4490
  %v4494 = vrot.slane %v4493, 4
  %v4495 = vadd.f32 %v4493, %v4494
  %v4496 = vrot.slane %v4495, 2
  %v4497 = vadd.f32 %v4495, %v4496
  %v4498 = vrot.slane %v4497, 1
  %v4499 = vadd.f32 %v4497, %v4498
  %v4500 = vmul.f32 %v4499, 0.03125
  %v4501 = vadd.f32 %v4500, 1e-05
  %v4502 = vrsqrt.pop %v4501
  %v4503 = vmul.f32 %v4483, %v4502
  %v4504 = vmul.f32 %v4484, %v4502
  %v4505 = vmul.f32 %v4485, %v4502
  %v4506 = vmul.f32 %v4486, %v4502
  %v4508 = vlaneseq
  %v4509 = vshrl.u32 %v4508, 7
  %v4510 = vsub.s32 0, %v4509
  %v4511 = vrot.slane %v4471, %v4510
  %v4513 = vmul.f32 %v4503, %v4511
  %v4514 = vmul.f32 %v4504, %v4511
  %v4515 = vmul.f32 %v4505, %v4511
  %v4516 = vmul.f32 %v4506, %v4511
  %v4518 = vlaneseq
  %v4519 = vshrl.u32 %v4518, 7
  %v4520 = vsub.s32 0, %v4519
  %v4521 = vrot.slane %v4472, %v4520
  %v4523 = vadd.f32 %v4513, %v4521
  %v4524 = vadd.f32 %v4514, %v4521
  %v4525 = vadd.f32 %v4515, %v4521
  %v4526 = vadd.f32 %v4516, %v4521
  %vm4527 = vcmp.gt.f32.partialorder %v4523, 0.0
  %vm4528 = vcmp.gt.f32.partialorder %v4524, 0.0
  %vm4529 = vcmp.gt.f32.partialorder %v4525, 0.0
  %vm4530 = vcmp.gt.f32.partialorder %v4526, 0.0
  %v4531 = vmin.f32 %v4523, 0.0
  %v4532 = vmin.f32 %v4524, 0.0
  %v4533 = vmin.f32 %v4525, 0.0
  %v4534 = vmin.f32 %v4526, 0.0
  %v4535 = vmul.f32 %v4531, 1.442695
  %v4536 = vpow.pop %v4535
  %v4537 = vmul.f32 %v4532, 1.442695
  %v4538 = vpow.pop %v4537
  %v4539 = vmul.f32 %v4533, 1.442695
  %v4540 = vpow.pop %v4539
  %v4541 = vmul.f32 %v4534, 1.442695
  %v4542 = vpow.pop %v4541
  %v4543 = vsub.f32 %v4536, 1.0
  %v4544 = vsub.f32 %v4538, 1.0
  %v4545 = vsub.f32 %v4540, 1.0
  %v4546 = vsub.f32 %v4542, 1.0
  %v4547 = vsel %vm4527, %v4523, %v4543
  %v4548 = vsel %vm4528, %v4524, %v4544
  %v4549 = vsel %vm4529, %v4525, %v4545
  %v4550 = vsel %vm4530, %v4526, %v4546
  %v4551 = vld [vmem:[%s13] sm:$0xff]
  %v4552 = vld [vmem:[%s13 + $0x8] sm:$0xff]
  %v4553 = vmul.f32 %v4547, %v4551
  %v4554 = vmul.f32 %v4548, %v4552
  %v4555 = vmul.f32 %v4549, %v4551
  %v4556 = vmul.f32 %v4550, %v4552
  %4557 = vadd.xlane.f32.xlu0 %v4553
  %v4558 = vpop.xlane.xlu0 %4557
  %4559 = vadd.xlane.f32.xlu0 %v4554
  %v4560 = vpop.xlane.xlu0 %4559
  %4561 = vadd.xlane.f32.xlu0 %v4555
  %v4562 = vpop.xlane.xlu0 %4561
  %4563 = vadd.xlane.f32.xlu0 %v4556
  %v4564 = vpop.xlane.xlu0 %4563
  %v4565 = vadd.f32 %v4558, %v4560
  %v4566 = vrot.slane %v4565, 4
  %v4567 = vadd.f32 %v4565, %v4566
  %v4568 = vrot.slane %v4567, 2
  %v4569 = vadd.f32 %v4567, %v4568
  %v4570 = vrot.slane %v4569, 1
  %v4571 = vadd.f32 %v4569, %v4570
  %v4572 = vadd.f32 %v4562, %v4564
  %v4573 = vrot.slane %v4572, 4
  %v4574 = vadd.f32 %v4572, %v4573
  %v4575 = vrot.slane %v4574, 2
  %v4576 = vadd.f32 %v4574, %v4575
  %v4577 = vrot.slane %v4576, 1
  %v4578 = vadd.f32 %v4576, %v4577
  %v4579 = vld [vmem:[#allocation4] sm:$0x1]
  %v4580 = vadd.f32 %v4571, %v4579
  %v4581 = vadd.f32 %v4578, %v4579
  %v4582 = vxor.u32 %v4580, 2147483648
  %v4583 = vxor.u32 %v4581, 2147483648
  %v4584 = vmul.f32 %v4582, 1.442695
  %v4585 = vpow.pop %v4584
  %v4586 = vmul.f32 %v4583, 1.442695
  %v4587 = vpow.pop %v4586
  %v4588 = vadd.f32 %v4585, 1.0
  %v4589 = vadd.f32 %v4587, 1.0
  %v4590 = vrcp.pop %v4588
  %v4591 = vmul.f32 1.0, %v4590
  %v4592 = vrcp.pop %v4589
  %v4593 = vmul.f32 1.0, %v4592
  %4595 = vset.pattern.permute.xlu0 0
  %4596 = vperm.xlu0 %4595, %v4591
  %v4597 = vpop.permute.xlu0 %4596
  %v4599 = vlaneseq
  %v4600 = vshrl.u32 %v4599, 7
  %v4601 = vsub.s32 0, %v4600
  %v4602 = vrot.slane %v4597, %v4601
  %4604 = vset.pattern.permute.xlu0 0
  %4605 = vperm.xlu0 %4604, %v4593
  %v4606 = vpop.permute.xlu0 %4605
  %v4608 = vlaneseq
  %v4609 = vshrl.u32 %v4608, 7
  %v4610 = vsub.s32 0, %v4609
  %v4611 = vrot.slane %v4606, %v4610
  %4612 = vst [vmem:[%s15] sm:$0x1] %v4602
  %4613 = vst [vmem:[%s15 + $0x1] sm:$0x1] %v4611
  // Predicated region
  $region62: #{lapgan_discriminator_level2.1} parent=0 // pred_check
    _
  $region63: #{lapgan_discriminator_level2.1} parent=0 // pred_check_branch
    %4615 = sbr.rel (0) target = $region65
  $region64: #{lapgan_discriminator_level2.1} parent=0 // pred_region
    _
  $region65: #{lapgan_discriminator_level2.1} parent=0 // pred_fallthru
    _
  // Predicated region
  $region66: #{lapgan_discriminator_level2.1} parent=0 // pred_check
    _
  $region67: #{lapgan_discriminator_level2.1} parent=0 // pred_check_branch
    %4617 = sbr.rel (0) target = $region69
  $region68: #{lapgan_discriminator_level2.1} parent=0 // pred_region
    _
  $region69: #{lapgan_discriminator_level2.1} parent=0 // pred_fallthru
    _

</llo_original>
